<compile_context>
chip_gen: v5e
topology: v5e:2x2
jax: 0.10.0
libtpu: 0.0.40
codegen_flags: <defaults>
</compile_context>

<pallas_src>
import math

import jax
import jax.numpy as jnp
from jax.experimental import pallas as pl
from jax.experimental.pallas import tpu as pltpu

# ----------------------------- config (small synthetic RoBERTa) --------------
BATCH = 2
SEQ = 8
HIDDEN = 128            # lane-dense (multiple of 128); real roberta-large is 1024
N_HEADS = 4
HEAD_DIM = HIDDEN // N_HEADS
INTERMEDIATE = 512      # 4x hidden, lane-dense
N_LAYERS = 2
VOCAB = 100
MAX_POS = 32
N_TYPES = 1             # RoBERTa has a single token type
PAD_IDX = 1             # RoBERTa padding_idx; position ids start at PAD_IDX + 1
LN_EPS = 1e-5           # RoBERTa layer_norm_eps


# ----------------------------- in-kernel helpers ------------------------------
def _layernorm(x, gamma, beta):
    # Single-pass statistics: E[x] and E[x^2] computed as two parallel reductions.
    mean = jnp.mean(x, axis=-1, keepdims=True)
    mean_sq = jnp.mean(x * x, axis=-1, keepdims=True)
    var = mean_sq - mean * mean
    return (x - mean) * jax.lax.rsqrt(var + LN_EPS) * gamma + beta


# ----------------------------- the fused kernel -------------------------------
def _fused_forward_kernel(we_ref, pe_ref, te_ref, eg_ref, eb_ref,
                          wqkv_ref, bqkv_ref, wo_ref, bo_ref,
                          ln1_g_ref, ln1_b_ref, w1_ref, b1_ref,
                          w2_ref, b2_ref, ln2_g_ref, ln2_b_ref,
                          pw_ref, pb_ref,
                          pooled_ref, h_ref):
    l = pl.program_id(0)
    tok = h_ref.shape[0]            # B * S
    batch = tok // SEQ

    # ---- prologue (layer 0 only): embeddings add + LayerNorm -----------------
    @pl.when(l == 0)
    def _():
        x = we_ref[...].reshape(batch, SEQ, HIDDEN) + pe_ref[...] + te_ref[...]
        h_ref[...] = _layernorm(x.reshape(tok, HIDDEN), eg_ref[...], eb_ref[...])

    x = h_ref[...]                  # (B*S, H) f32, carried in VMEM across layers
    xb = x.astype(jnp.bfloat16)

    # ---- fused Q/K/V projection on the whole slab: (B*S, H) @ (H, 3H) --------
    # 1/sqrt(head_dim) is already folded into the Q columns of wqkv / bqkv.
    qkv = jnp.dot(xb, wqkv_ref[...], preferred_element_type=jnp.float32) + bqkv_ref[...]

    # ---- multi-head attention -------------------------------------------------
    # Heads are sliced on the lane dim; each head's context is folded straight
    # into its 32-row slice of Wo and accumulated, so there is no lane-dim
    # concatenate / relayout. Batch elements never mix: attention is batched
    # over B via a cheap sublane-split reshape (B*S, d) -> (B, S, d).
    # TODO(synk): attention padding mask from the tokenizer is not modeled
    # (all synthetic tokens are treated as valid).
    attn = jnp.zeros((tok, HIDDEN), jnp.float32)
    for hd in range(N_HEADS):       # static unrolled (4 iterations)
        c0 = hd * HEAD_DIM
        qh = qkv[:, c0:c0 + HEAD_DIM].reshape(batch, SEQ, HEAD_DIM).astype(jnp.bfloat16)
        kh = qkv[:, HIDDEN + c0:HIDDEN + c0 + HEAD_DIM].reshape(
            batch, SEQ, HEAD_DIM).astype(jnp.bfloat16)
        vh = qkv[:, 2 * HIDDEN + c0:2 * HIDDEN + c0 + HEAD_DIM].reshape(
            batch, SEQ, HEAD_DIM).astype(jnp.bfloat16)

        s = jnp.einsum('bqd,bkd->bqk', qh, kh, preferred_element_type=jnp.float32)
        s = s - jnp.max(s, axis=-1, keepdims=True)
        e = jnp.exp(s)
        p = e * pl.reciprocal(jnp.sum(e, axis=-1, keepdims=True), approx=True)
        ctx = jnp.einsum('bqk,bkd->bqd', p.astype(jnp.bfloat16), vh,
                         preferred_element_type=jnp.float32)        # (B, S, HD)

        attn = attn + jnp.dot(ctx.reshape(tok, HEAD_DIM).astype(jnp.bfloat16),
                              wo_ref[c0:c0 + HEAD_DIM, :],
                              preferred_element_type=jnp.float32)
    attn = attn + bo_ref[...]

    # ---- residual + LayerNorm -------------------------------------------------
    h1 = _layernorm(attn + x, ln1_g_ref[...], ln1_b_ref[...])

    # ---- feed-forward (GELU) + residual + LayerNorm ----------------------------
    inter = jnp.dot(h1.astype(jnp.bfloat16), w1_ref[...],
                    preferred_element_type=jnp.float32) + b1_ref[...]
    # TODO(synk): HF RoBERTa uses exact erf GELU; tanh approximation used here
    # (EUP-friendly on TPU, tiny numerical difference).
    inter = jax.nn.gelu(inter, approximate=True)
    ffn = jnp.dot(inter.astype(jnp.bfloat16), w2_ref[...],
                  preferred_element_type=jnp.float32) + b2_ref[...]
    h_ref[...] = _layernorm(ffn + h1, ln2_g_ref[...], ln2_b_ref[...])

    # ---- epilogue (last layer only): tanh pooler on the <s>/CLS token ---------
    @pl.when(l == pl.num_programs(0) - 1)
    def _():
        cls = h_ref[pl.ds(0, batch, stride=SEQ), :]      # rows 0, SEQ, 2*SEQ, ...
        y = jnp.dot(cls.astype(jnp.bfloat16), pw_ref[...],
                    preferred_element_type=jnp.float32) + pb_ref[...]
        pooled_ref[...] = jnp.tanh(y)


# ----------------------------- pallas_call wrapper ----------------------------
def pallas_roberta_forward(we, pe, te, kp):
    tok = we.shape[0]               # B * S
    batch = tok // SEQ

    def lyr(shape):
        # Per-layer stacked weight: leading layer dim squeezed out of the kernel ref.
        return pl.BlockSpec((None,) + shape, lambda l, _s=shape: (l,) + (0,) * len(_s))

    def const(shape):
        # Layer-invariant block (kept resident, not re-fetched per layer step).
        return pl.BlockSpec(shape, lambda l, _s=shape: (0,) * len(_s))

    return pl.pallas_call(
        _fused_forward_kernel,
        out_shape=jax.ShapeDtypeStruct((batch, HIDDEN), jnp.float32),
        grid=(N_LAYERS,),
        in_specs=[
            const((tok, HIDDEN)),               # word embeddings (gathered in JAX)
            const((SEQ, HIDDEN)),               # position embeddings
            const((1, HIDDEN)),                 # token-type embedding
            const((1, HIDDEN)),                 # emb LN gamma
            const((1, HIDDEN)),                 # emb LN beta
            lyr((HIDDEN, 3 * HIDDEN)),          # wqkv (bf16, 1/sqrt(d) folded into Q)
            lyr((1, 3 * HIDDEN)),               # bqkv
            lyr((HIDDEN, HIDDEN)),              # wo (bf16)
            lyr((1, HIDDEN)),                   # bo
            lyr((1, HIDDEN)), lyr((1, HIDDEN)),                 # ln1 gamma/beta
            lyr((HIDDEN, INTERMEDIATE)),        # w1 (bf16)
            lyr((1, INTERMEDIATE)),             # b1
            lyr((INTERMEDIATE, HIDDEN)),        # w2 (bf16)
            lyr((1, HIDDEN)),                   # b2
            lyr((1, HIDDEN)), lyr((1, HIDDEN)),                 # ln2 gamma/beta
            const((HIDDEN, HIDDEN)),            # pooler weight (bf16)
            const((1, HIDDEN)),                 # pooler bias
        ],
        out_specs=pl.BlockSpec((batch, HIDDEN), lambda l: (0, 0)),
        scratch_shapes=[pltpu.VMEM((tok, HIDDEN), jnp.float32)],   # carried hidden state
        compiler_params=pltpu.CompilerParams(dimension_semantics=("arbitrary",)),
    )(we, pe, te, kp["emb_ln_g"], kp["emb_ln_b"],
      kp["wqkv"], kp["bqkv"], kp["wo"], kp["bo"],
      kp["ln1_g"], kp["ln1_b"], kp["w1"], kp["b1"], kp["w2"], kp["b2"],
      kp["ln2_g"], kp["ln2_b"], kp["pool_w"], kp["pool_b"])


# ----------------------------- parameter init ---------------------------------
def init_params(key):
    def nrm(k, shape, scale=0.02):
        return scale * jax.random.normal(k, shape, dtype=jnp.float32)

    keys = iter(jax.random.split(key, 4 + N_LAYERS * 4))
    params = {
        "word_emb": nrm(next(keys), (VOCAB, HIDDEN)),
        "pos_emb": nrm(next(keys), (MAX_POS, HIDDEN)),
        "type_emb": nrm(next(keys), (N_TYPES, HIDDEN)),
        "emb_ln_g": jnp.ones((1, HIDDEN), jnp.float32),
        "emb_ln_b": jnp.zeros((1, HIDDEN), jnp.float32),
        "pool_w": nrm(next(keys), (HIDDEN, HIDDEN)),
        "pool_b": jnp.zeros((1, HIDDEN), jnp.float32),
        "layers": [],
    }
    for _ in range(N_LAYERS):
        params["layers"].append({
            "wqkv": nrm(next(keys), (HIDDEN, 3 * HIDDEN)),
            "bqkv": jnp.zeros((1, 3 * HIDDEN), jnp.float32),
            "wo": nrm(next(keys), (HIDDEN, HIDDEN)),
            "bo": jnp.zeros((1, HIDDEN), jnp.float32),
            "ln1_g": jnp.ones((1, HIDDEN), jnp.float32),
            "ln1_b": jnp.zeros((1, HIDDEN), jnp.float32),
            "w1": nrm(next(keys), (HIDDEN, INTERMEDIATE)),
            "b1": jnp.zeros((1, INTERMEDIATE), jnp.float32),
            "w2": nrm(next(keys), (INTERMEDIATE, HIDDEN)),
            "b2": jnp.zeros((1, HIDDEN), jnp.float32),
            "ln2_g": jnp.ones((1, HIDDEN), jnp.float32),
            "ln2_b": jnp.zeros((1, HIDDEN), jnp.float32),
        })
    return params


def prepare_kernel_params(params):
    """Offline (once): stack per-layer weights on a leading layer axis, fold the
    1/sqrt(head_dim) attention scale into the Q columns of wqkv/bqkv (in f32),
    and cast matmul weights to bfloat16 (f32 accumulation happens in-kernel)."""
    scale = 1.0 / math.sqrt(HEAD_DIM)
    stack = lambda name: jnp.stack([lyr[name] for lyr in params["layers"]], axis=0)
    wqkv = stack("wqkv").at[:, :, :HIDDEN].multiply(scale)
    bqkv = stack("bqkv").at[:, :, :HIDDEN].multiply(scale)
    return {
        "word_emb": params["word_emb"],
        "pos_emb": params["pos_emb"],
        "type_emb": params["type_emb"],
        "emb_ln_g": params["emb_ln_g"],
        "emb_ln_b": params["emb_ln_b"],
        "pool_w": params["pool_w"].astype(jnp.bfloat16),
        "pool_b": params["pool_b"],
        "wqkv": wqkv.astype(jnp.bfloat16),
        "bqkv": bqkv,
        "wo": stack("wo").astype(jnp.bfloat16),
        "bo": stack("bo"),
        "ln1_g": stack("ln1_g"), "ln1_b": stack("ln1_b"),
        "w1": stack("w1").astype(jnp.bfloat16),
        "b1": stack("b1"),
        "w2": stack("w2").astype(jnp.bfloat16),
        "b2": stack("b2"),
        "ln2_g": stack("ln2_g"), "ln2_b": stack("ln2_b"),
    }


# ----------------------------- forward pass -----------------------------------
@jax.jit
def roberta_forward(kparams, token_ids):
    """token_ids: (B, S) int32. Returns pooler_output (B, HIDDEN) float32."""
    B, S = token_ids.shape
    # Data-dependent embedding gather stays in plain JAX.
    we = kparams["word_emb"][token_ids].reshape(B * S, HIDDEN)
    # RoBERTa position ids for non-pad tokens start at padding_idx + 1.
    # TODO(synk): pad-aware position ids (create_position_ids_from_input_ids) and
    # the attention padding mask are not replicated for the synthetic inputs.
    pe = kparams["pos_emb"][PAD_IDX + 1:PAD_IDX + 1 + S]
    te = kparams["type_emb"][0:1]
    pooled = pallas_roberta_forward(we, pe, te, kparams)
    return pooled.astype(jnp.float32)


# ----------------------------- main --------------------------------------------
if __name__ == "__main__":
    key = jax.random.PRNGKey(0)
    pkey, tkey = jax.random.split(key)
    params = init_params(pkey)
    kparams = prepare_kernel_params(params)

    # TODO(synk): RobertaTokenizer (string -> token ids) and the pretrained
    # roberta-large checkpoint have no Pallas equivalent; deterministic synthetic
    # token ids and random weights are used instead.
    token_ids = jax.random.randint(tkey, (BATCH, SEQ), 0, VOCAB, dtype=jnp.int32)

    out = roberta_forward(kparams, token_ids)
    out = jax.block_until_ready(out)
    assert out.shape == (BATCH, HIDDEN) and out.dtype == jnp.float32
    assert bool(jnp.all(jnp.isfinite(out)))
    print("KERNEL_OK")
</pallas_src>

<mosaic_0001>
module attributes {stable_mosaic.version = 11 : i64} {
  func.func @_fused_forward_kernel(%arg0: i32, %arg1: memref<16x128xf32, #tpu.memory_space<vmem>>, %arg2: memref<8x128xf32, #tpu.memory_space<vmem>>, %arg3: memref<1x128xf32, #tpu.memory_space<vmem>>, %arg4: memref<1x128xf32, #tpu.memory_space<vmem>>, %arg5: memref<1x128xf32, #tpu.memory_space<vmem>>, %arg6: memref<1x128x384xbf16, #tpu.memory_space<vmem>>, %arg7: memref<1x1x384xf32, #tpu.memory_space<vmem>>, %arg8: memref<1x128x128xbf16, #tpu.memory_space<vmem>>, %arg9: memref<1x1x128xf32, #tpu.memory_space<vmem>>, %arg10: memref<1x1x128xf32, #tpu.memory_space<vmem>>, %arg11: memref<1x1x128xf32, #tpu.memory_space<vmem>>, %arg12: memref<1x128x512xbf16, #tpu.memory_space<vmem>>, %arg13: memref<1x1x512xf32, #tpu.memory_space<vmem>>, %arg14: memref<1x512x128xbf16, #tpu.memory_space<vmem>>, %arg15: memref<1x1x128xf32, #tpu.memory_space<vmem>>, %arg16: memref<1x1x128xf32, #tpu.memory_space<vmem>>, %arg17: memref<1x1x128xf32, #tpu.memory_space<vmem>>, %arg18: memref<128x128xbf16, #tpu.memory_space<vmem>>, %arg19: memref<1x128xf32, #tpu.memory_space<vmem>>, %arg20: memref<2x128xf32, #tpu.memory_space<vmem>>, %arg21: memref<16x128xf32, #tpu.memory_space<vmem>>) attributes {dimension_semantics = [#tpu.dimension_semantics<arbitrary>], iteration_bounds = array<i64: 2>, scalar_prefetch = 0 : i64, scratch_operands = 1 : i64, tpu.core_type = #tpu.core_type<tc>, window_params = [{pipeline_mode = #tpu.pipeline_mode<synchronous>, transform_indices = @transform_0, window_bounds = array<i64: 16, 128>}, {pipeline_mode = #tpu.pipeline_mode<synchronous>, transform_indices = @transform_1, window_bounds = array<i64: 8, 128>}, {pipeline_mode = #tpu.pipeline_mode<synchronous>, transform_indices = @transform_2, window_bounds = array<i64: 1, 128>}, {pipeline_mode = #tpu.pipeline_mode<synchronous>, transform_indices = @transform_3, window_bounds = array<i64: 1, 128>}, {pipeline_mode = #tpu.pipeline_mode<synchronous>, transform_indices = @transform_4, window_bounds = array<i64: 1, 128>}, {transform_indices = @transform_5, window_bounds = array<i64: 1, 128, 384>}, {transform_indices = @transform_6, window_bounds = array<i64: 1, 1, 384>}, {transform_indices = @transform_7, window_bounds = array<i64: 1, 128, 128>}, {transform_indices = @transform_8, window_bounds = array<i64: 1, 1, 128>}, {transform_indices = @transform_9, window_bounds = array<i64: 1, 1, 128>}, {transform_indices = @transform_10, window_bounds = array<i64: 1, 1, 128>}, {transform_indices = @transform_11, window_bounds = array<i64: 1, 128, 512>}, {transform_indices = @transform_12, window_bounds = array<i64: 1, 1, 512>}, {transform_indices = @transform_13, window_bounds = array<i64: 1, 512, 128>}, {transform_indices = @transform_14, window_bounds = array<i64: 1, 1, 128>}, {transform_indices = @transform_15, window_bounds = array<i64: 1, 1, 128>}, {transform_indices = @transform_16, window_bounds = array<i64: 1, 1, 128>}, {pipeline_mode = #tpu.pipeline_mode<synchronous>, transform_indices = @transform_17, window_bounds = array<i64: 128, 128>}, {pipeline_mode = #tpu.pipeline_mode<synchronous>, transform_indices = @transform_18, window_bounds = array<i64: 1, 128>}, {pipeline_mode = #tpu.pipeline_mode<synchronous>, transform_indices = @transform_19, window_bounds = array<i64: 2, 128>}]} {
    %c0_i32 = arith.constant 0 : i32
    %0 = arith.cmpi eq, %arg0, %c0_i32 : i32
    %1 = arith.extui %0 : i1 to i32
    %c0_i32_0 = arith.constant 0 : i32
    %2 = arith.cmpi ne, %1, %c0_i32_0 : i32
    scf.if %2 {
      %c0_84 = arith.constant 0 : index
      %c0_85 = arith.constant 0 : index
      %216 = vector.load %arg1[%c0_84, %c0_85] : memref<16x128xf32, #tpu.memory_space<vmem>>, vector<16x128xf32>
      %217 = vector.shape_cast %216 : vector<16x128xf32> to vector<2x8x128xf32>
      %c0_86 = arith.constant 0 : index
      %c0_87 = arith.constant 0 : index
      %218 = vector.load %arg2[%c0_86, %c0_87] : memref<8x128xf32, #tpu.memory_space<vmem>>, vector<8x128xf32>
      %219 = vector.shape_cast %218 : vector<8x128xf32> to vector<1x8x128xf32>
      %220 = vector.broadcast %219 : vector<1x8x128xf32> to vector<2x8x128xf32>
      %221 = arith.addf %217, %220 : vector<2x8x128xf32>
      %c0_88 = arith.constant 0 : index
      %c0_89 = arith.constant 0 : index
      %222 = vector.load %arg3[%c0_88, %c0_89] : memref<1x128xf32, #tpu.memory_space<vmem>>, vector<1x128xf32>
      %223 = vector.shape_cast %222 : vector<1x128xf32> to vector<1x1x128xf32>
      %224 = vector.broadcast %223 : vector<1x1x128xf32> to vector<2x8x128xf32>
      %225 = arith.addf %221, %224 : vector<2x8x128xf32>
      %226 = vector.shape_cast %225 : vector<2x8x128xf32> to vector<16x128xf32>
      %c0_90 = arith.constant 0 : index
      %c0_91 = arith.constant 0 : index
      %227 = vector.load %arg4[%c0_90, %c0_91] : memref<1x128xf32, #tpu.memory_space<vmem>>, vector<1x128xf32>
      %c0_92 = arith.constant 0 : index
      %c0_93 = arith.constant 0 : index
      %228 = vector.load %arg5[%c0_92, %c0_93] : memref<1x128xf32, #tpu.memory_space<vmem>>, vector<1x128xf32>
      %cst_94 = arith.constant dense<0.000000e+00> : vector<16xf32>
      %229 = vector.multi_reduction <add>, %226, %cst_94 [1] : vector<16x128xf32> to vector<16xf32>
      %230 = vector.shape_cast %229 : vector<16xf32> to vector<16x1xf32>
      %cst_95 = arith.constant 1.280000e+02 : f32
      %231 = vector.broadcast %cst_95 : f32 to vector<16x1xf32>
      %232 = arith.divf %230, %231 : vector<16x1xf32>
      %233 = arith.mulf %226, %226 : vector<16x128xf32>
      %cst_96 = arith.constant dense<0.000000e+00> : vector<16xf32>
      %234 = vector.multi_reduction <add>, %233, %cst_96 [1] : vector<16x128xf32> to vector<16xf32>
      %235 = vector.shape_cast %234 : vector<16xf32> to vector<16x1xf32>
      %cst_97 = arith.constant 1.280000e+02 : f32
      %236 = vector.broadcast %cst_97 : f32 to vector<16x1xf32>
      %237 = arith.divf %235, %236 : vector<16x1xf32>
      %238 = arith.mulf %232, %232 : vector<16x1xf32>
      %239 = arith.subf %237, %238 : vector<16x1xf32>
      %240 = vector.broadcast %232 : vector<16x1xf32> to vector<16x128xf32>
      %241 = arith.subf %226, %240 : vector<16x128xf32>
      %cst_98 = arith.constant 9.99999974E-6 : f32
      %242 = vector.broadcast %cst_98 : f32 to vector<16x1xf32>
      %243 = arith.addf %239, %242 : vector<16x1xf32>
      %244 = math.rsqrt %243 : vector<16x1xf32>
      %245 = vector.broadcast %244 : vector<16x1xf32> to vector<16x128xf32>
      %246 = arith.mulf %241, %245 : vector<16x128xf32>
      %247 = vector.broadcast %227 : vector<1x128xf32> to vector<16x128xf32>
      %248 = arith.mulf %246, %247 : vector<16x128xf32>
      %249 = vector.broadcast %228 : vector<1x128xf32> to vector<16x128xf32>
      %250 = arith.addf %248, %249 : vector<16x128xf32>
      %c0_99 = arith.constant 0 : index
      %c0_100 = arith.constant 0 : index
      %251 = vector.load %arg21[%c0_99, %c0_100] : memref<16x128xf32, #tpu.memory_space<vmem>>, vector<16x128xf32>
      tpu.vector_store %arg21[%c0_99, %c0_100], %250 {strides = array<i32>} : memref<16x128xf32, #tpu.memory_space<vmem>>, vector<16x128xf32>,
    } else {
    }
    %c0 = arith.constant 0 : index
    %c0_1 = arith.constant 0 : index
    %3 = vector.load %arg21[%c0, %c0_1] : memref<16x128xf32, #tpu.memory_space<vmem>>, vector<16x128xf32>
    %4 = arith.truncf %3 : vector<16x128xf32> to vector<16x128xbf16>
    %c0_2 = arith.constant 0 : index
    %c0_3 = arith.constant 0 : index
    %c0_4 = arith.constant 0 : index
    %5 = vector.load %arg6[%c0_2, %c0_3, %c0_4] : memref<1x128x384xbf16, #tpu.memory_space<vmem>>, vector<1x128x384xbf16>
    %6 = vector.shape_cast %5 : vector<1x128x384xbf16> to vector<128x384xbf16>
    %cst = arith.constant dense<0.000000e+00> : vector<16x384xf32>
    %7 = tpu.matmul %4, %6, %cst {dimension_numbers = #tpu.dot_dimension_numbers<[1], [0], [0], [1], [0, 0, 1, 1], [], []>} : vector<16x128xbf16>, vector<128x384xbf16>, vector<16x384xf32> -> vector<16x384xf32>
    %c0_5 = arith.constant 0 : index
    %c0_6 = arith.constant 0 : index
    %c0_7 = arith.constant 0 : index
    %8 = vector.load %arg7[%c0_5, %c0_6, %c0_7] : memref<1x1x384xf32, #tpu.memory_space<vmem>>, vector<1x1x384xf32>
    %9 = vector.shape_cast %8 : vector<1x1x384xf32> to vector<1x384xf32>
    %10 = vector.broadcast %9 : vector<1x384xf32> to vector<16x384xf32>
    %11 = arith.addf %7, %10 : vector<16x384xf32>
    %cst_8 = arith.constant 0.000000e+00 : f32
    %12 = vector.broadcast %cst_8 : f32 to vector<16x128xf32>
    %13 = vector.extract_strided_slice %11 {offsets = [0, 0], sizes = [16, 32], strides = [1, 1]} : vector<16x384xf32> to vector<16x32xf32>
    %14 = vector.shape_cast %13 : vector<16x32xf32> to vector<2x8x32xf32>
    %15 = arith.truncf %14 : vector<2x8x32xf32> to vector<2x8x32xbf16>
    %16 = vector.extract_strided_slice %11 {offsets = [0, 128], sizes = [16, 32], strides = [1, 1]} : vector<16x384xf32> to vector<16x32xf32>
    %17 = vector.shape_cast %16 : vector<16x32xf32> to vector<2x8x32xf32>
    %18 = arith.truncf %17 : vector<2x8x32xf32> to vector<2x8x32xbf16>
    %19 = vector.extract_strided_slice %11 {offsets = [0, 256], sizes = [16, 32], strides = [1, 1]} : vector<16x384xf32> to vector<16x32xf32>
    %20 = vector.shape_cast %19 : vector<16x32xf32> to vector<2x8x32xf32>
    %21 = arith.truncf %20 : vector<2x8x32xf32> to vector<2x8x32xbf16>
    "tpu.trace_start"() <{level = 10 : i32, message = "bqd,bkd->bqk"}> : () -> ()
    %cst_9 = arith.constant dense<0.000000e+00> : vector<2x8x8xf32>
    %22 = tpu.matmul %15, %18, %cst_9 {dimension_numbers = #tpu.dot_dimension_numbers<[2], [2], [1], [1], [0, 0, 0, 1, 1, 1], [0], [0]>} : vector<2x8x32xbf16>, vector<2x8x32xbf16>, vector<2x8x8xf32> -> vector<2x8x8xf32>
    "tpu.trace_stop"() : () -> ()
    %cst_10 = arith.constant dense<0xFF800000> : vector<2x8xf32>
    %23 = vector.multi_reduction <maximumf>, %22, %cst_10 [2] : vector<2x8x8xf32> to vector<2x8xf32>
    %24 = vector.shape_cast %23 : vector<2x8xf32> to vector<2x8x1xf32>
    %25 = vector.broadcast %24 : vector<2x8x1xf32> to vector<2x8x8xf32>
    %26 = arith.subf %22, %25 : vector<2x8x8xf32>
    %27 = math.exp %26 : vector<2x8x8xf32>
    %cst_11 = arith.constant dense<0.000000e+00> : vector<2x8xf32>
    %28 = vector.multi_reduction <add>, %27, %cst_11 [2] : vector<2x8x8xf32> to vector<2x8xf32>
    %29 = vector.shape_cast %28 : vector<2x8xf32> to vector<2x8x1xf32>
    %30 = tpu.reciprocal %29 {approx = true} : vector<2x8x1xf32> -> vector<2x8x1xf32>
    %31 = vector.broadcast %30 : vector<2x8x1xf32> to vector<2x8x8xf32>
    %32 = arith.mulf %27, %31 : vector<2x8x8xf32>
    %33 = arith.truncf %32 : vector<2x8x8xf32> to vector<2x8x8xbf16>
    "tpu.trace_start"() <{level = 10 : i32, message = "bqk,bkd->bqd"}> : () -> ()
    %cst_12 = arith.constant dense<0.000000e+00> : vector<2x8x32xf32>
    %34 = tpu.matmul %33, %21, %cst_12 {dimension_numbers = #tpu.dot_dimension_numbers<[2], [1], [1], [2], [0, 0, 0, 1, 1, 2], [0], [0]>} : vector<2x8x8xbf16>, vector<2x8x32xbf16>, vector<2x8x32xf32> -> vector<2x8x32xf32>
    "tpu.trace_stop"() : () -> ()
    %35 = vector.shape_cast %34 : vector<2x8x32xf32> to vector<16x32xf32>
    %36 = arith.truncf %35 : vector<16x32xf32> to vector<16x32xbf16>
    %c0_13 = arith.constant 0 : index
    %c0_14 = arith.constant 0 : index
    %c0_15 = arith.constant 0 : index
    %37 = vector.load %arg8[%c0_13, %c0_14, %c0_15] : memref<1x128x128xbf16, #tpu.memory_space<vmem>>, vector<1x32x128xbf16>
    %38 = vector.shape_cast %37 : vector<1x32x128xbf16> to vector<32x128xbf16>
    %cst_16 = arith.constant dense<0.000000e+00> : vector<16x128xf32>
    %39 = tpu.matmul %36, %38, %cst_16 {dimension_numbers = #tpu.dot_dimension_numbers<[1], [0], [0], [1], [0, 0, 1, 1], [], []>} : vector<16x32xbf16>, vector<32x128xbf16>, vector<16x128xf32> -> vector<16x128xf32>
    %40 = arith.addf %12, %39 : vector<16x128xf32>
    %41 = vector.extract_strided_slice %11 {offsets = [0, 32], sizes = [16, 32], strides = [1, 1]} : vector<16x384xf32> to vector<16x32xf32>
    %42 = vector.shape_cast %41 : vector<16x32xf32> to vector<2x8x32xf32>
    %43 = arith.truncf %42 : vector<2x8x32xf32> to vector<2x8x32xbf16>
    %44 = vector.extract_strided_slice %11 {offsets = [0, 160], sizes = [16, 32], strides = [1, 1]} : vector<16x384xf32> to vector<16x32xf32>
    %45 = vector.shape_cast %44 : vector<16x32xf32> to vector<2x8x32xf32>
    %46 = arith.truncf %45 : vector<2x8x32xf32> to vector<2x8x32xbf16>
    %47 = vector.extract_strided_slice %11 {offsets = [0, 288], sizes = [16, 32], strides = [1, 1]} : vector<16x384xf32> to vector<16x32xf32>
    %48 = vector.shape_cast %47 : vector<16x32xf32> to vector<2x8x32xf32>
    %49 = arith.truncf %48 : vector<2x8x32xf32> to vector<2x8x32xbf16>
    "tpu.trace_start"() <{level = 10 : i32, message = "bqd,bkd->bqk"}> : () -> ()
    %cst_17 = arith.constant dense<0.000000e+00> : vector<2x8x8xf32>
    %50 = tpu.matmul %43, %46, %cst_17 {dimension_numbers = #tpu.dot_dimension_numbers<[2], [2], [1], [1], [0, 0, 0, 1, 1, 1], [0], [0]>} : vector<2x8x32xbf16>, vector<2x8x32xbf16>, vector<2x8x8xf32> -> vector<2x8x8xf32>
    "tpu.trace_stop"() : () -> ()
    %cst_18 = arith.constant dense<0xFF800000> : vector<2x8xf32>
    %51 = vector.multi_reduction <maximumf>, %50, %cst_18 [2] : vector<2x8x8xf32> to vector<2x8xf32>
    %52 = vector.shape_cast %51 : vector<2x8xf32> to vector<2x8x1xf32>
    %53 = vector.broadcast %52 : vector<2x8x1xf32> to vector<2x8x8xf32>
    %54 = arith.subf %50, %53 : vector<2x8x8xf32>
    %55 = math.exp %54 : vector<2x8x8xf32>
    %cst_19 = arith.constant dense<0.000000e+00> : vector<2x8xf32>
    %56 = vector.multi_reduction <add>, %55, %cst_19 [2] : vector<2x8x8xf32> to vector<2x8xf32>
    %57 = vector.shape_cast %56 : vector<2x8xf32> to vector<2x8x1xf32>
    %58 = tpu.reciprocal %57 {approx = true} : vector<2x8x1xf32> -> vector<2x8x1xf32>
    %59 = vector.broadcast %58 : vector<2x8x1xf32> to vector<2x8x8xf32>
    %60 = arith.mulf %55, %59 : vector<2x8x8xf32>
    %61 = arith.truncf %60 : vector<2x8x8xf32> to vector<2x8x8xbf16>
    "tpu.trace_start"() <{level = 10 : i32, message = "bqk,bkd->bqd"}> : () -> ()
    %cst_20 = arith.constant dense<0.000000e+00> : vector<2x8x32xf32>
    %62 = tpu.matmul %61, %49, %cst_20 {dimension_numbers = #tpu.dot_dimension_numbers<[2], [1], [1], [2], [0, 0, 0, 1, 1, 2], [0], [0]>} : vector<2x8x8xbf16>, vector<2x8x32xbf16>, vector<2x8x32xf32> -> vector<2x8x32xf32>
    "tpu.trace_stop"() : () -> ()
    %63 = vector.shape_cast %62 : vector<2x8x32xf32> to vector<16x32xf32>
    %64 = arith.truncf %63 : vector<16x32xf32> to vector<16x32xbf16>
    %c0_21 = arith.constant 0 : index
    %c32 = arith.constant 32 : index
    %c0_22 = arith.constant 0 : index
    %65 = vector.load %arg8[%c0_21, %c32, %c0_22] : memref<1x128x128xbf16, #tpu.memory_space<vmem>>, vector<1x32x128xbf16>
    %66 = vector.shape_cast %65 : vector<1x32x128xbf16> to vector<32x128xbf16>
    %cst_23 = arith.constant dense<0.000000e+00> : vector<16x128xf32>
    %67 = tpu.matmul %64, %66, %cst_23 {dimension_numbers = #tpu.dot_dimension_numbers<[1], [0], [0], [1], [0, 0, 1, 1], [], []>} : vector<16x32xbf16>, vector<32x128xbf16>, vector<16x128xf32> -> vector<16x128xf32>
    %68 = arith.addf %40, %67 : vector<16x128xf32>
    %69 = vector.extract_strided_slice %11 {offsets = [0, 64], sizes = [16, 32], strides = [1, 1]} : vector<16x384xf32> to vector<16x32xf32>
    %70 = vector.shape_cast %69 : vector<16x32xf32> to vector<2x8x32xf32>
    %71 = arith.truncf %70 : vector<2x8x32xf32> to vector<2x8x32xbf16>
    %72 = vector.extract_strided_slice %11 {offsets = [0, 192], sizes = [16, 32], strides = [1, 1]} : vector<16x384xf32> to vector<16x32xf32>
    %73 = vector.shape_cast %72 : vector<16x32xf32> to vector<2x8x32xf32>
    %74 = arith.truncf %73 : vector<2x8x32xf32> to vector<2x8x32xbf16>
    %75 = vector.extract_strided_slice %11 {offsets = [0, 320], sizes = [16, 32], strides = [1, 1]} : vector<16x384xf32> to vector<16x32xf32>
    %76 = vector.shape_cast %75 : vector<16x32xf32> to vector<2x8x32xf32>
    %77 = arith.truncf %76 : vector<2x8x32xf32> to vector<2x8x32xbf16>
    "tpu.trace_start"() <{level = 10 : i32, message = "bqd,bkd->bqk"}> : () -> ()
    %cst_24 = arith.constant dense<0.000000e+00> : vector<2x8x8xf32>
    %78 = tpu.matmul %71, %74, %cst_24 {dimension_numbers = #tpu.dot_dimension_numbers<[2], [2], [1], [1], [0, 0, 0, 1, 1, 1], [0], [0]>} : vector<2x8x32xbf16>, vector<2x8x32xbf16>, vector<2x8x8xf32> -> vector<2x8x8xf32>
    "tpu.trace_stop"() : () -> ()
    %cst_25 = arith.constant dense<0xFF800000> : vector<2x8xf32>
    %79 = vector.multi_reduction <maximumf>, %78, %cst_25 [2] : vector<2x8x8xf32> to vector<2x8xf32>
    %80 = vector.shape_cast %79 : vector<2x8xf32> to vector<2x8x1xf32>
    %81 = vector.broadcast %80 : vector<2x8x1xf32> to vector<2x8x8xf32>
    %82 = arith.subf %78, %81 : vector<2x8x8xf32>
    %83 = math.exp %82 : vector<2x8x8xf32>
    %cst_26 = arith.constant dense<0.000000e+00> : vector<2x8xf32>
    %84 = vector.multi_reduction <add>, %83, %cst_26 [2] : vector<2x8x8xf32> to vector<2x8xf32>
    %85 = vector.shape_cast %84 : vector<2x8xf32> to vector<2x8x1xf32>
    %86 = tpu.reciprocal %85 {approx = true} : vector<2x8x1xf32> -> vector<2x8x1xf32>
    %87 = vector.broadcast %86 : vector<2x8x1xf32> to vector<2x8x8xf32>
    %88 = arith.mulf %83, %87 : vector<2x8x8xf32>
    %89 = arith.truncf %88 : vector<2x8x8xf32> to vector<2x8x8xbf16>
    "tpu.trace_start"() <{level = 10 : i32, message = "bqk,bkd->bqd"}> : () -> ()
    %cst_27 = arith.constant dense<0.000000e+00> : vector<2x8x32xf32>
    %90 = tpu.matmul %89, %77, %cst_27 {dimension_numbers = #tpu.dot_dimension_numbers<[2], [1], [1], [2], [0, 0, 0, 1, 1, 2], [0], [0]>} : vector<2x8x8xbf16>, vector<2x8x32xbf16>, vector<2x8x32xf32> -> vector<2x8x32xf32>
    "tpu.trace_stop"() : () -> ()
    %91 = vector.shape_cast %90 : vector<2x8x32xf32> to vector<16x32xf32>
    %92 = arith.truncf %91 : vector<16x32xf32> to vector<16x32xbf16>
    %c0_28 = arith.constant 0 : index
    %c64 = arith.constant 64 : index
    %c0_29 = arith.constant 0 : index
    %93 = vector.load %arg8[%c0_28, %c64, %c0_29] : memref<1x128x128xbf16, #tpu.memory_space<vmem>>, vector<1x32x128xbf16>
    %94 = vector.shape_cast %93 : vector<1x32x128xbf16> to vector<32x128xbf16>
    %cst_30 = arith.constant dense<0.000000e+00> : vector<16x128xf32>
    %95 = tpu.matmul %92, %94, %cst_30 {dimension_numbers = #tpu.dot_dimension_numbers<[1], [0], [0], [1], [0, 0, 1, 1], [], []>} : vector<16x32xbf16>, vector<32x128xbf16>, vector<16x128xf32> -> vector<16x128xf32>
    %96 = arith.addf %68, %95 : vector<16x128xf32>
    %97 = vector.extract_strided_slice %11 {offsets = [0, 96], sizes = [16, 32], strides = [1, 1]} : vector<16x384xf32> to vector<16x32xf32>
    %98 = vector.shape_cast %97 : vector<16x32xf32> to vector<2x8x32xf32>
    %99 = arith.truncf %98 : vector<2x8x32xf32> to vector<2x8x32xbf16>
    %100 = vector.extract_strided_slice %11 {offsets = [0, 224], sizes = [16, 32], strides = [1, 1]} : vector<16x384xf32> to vector<16x32xf32>
    %101 = vector.shape_cast %100 : vector<16x32xf32> to vector<2x8x32xf32>
    %102 = arith.truncf %101 : vector<2x8x32xf32> to vector<2x8x32xbf16>
    %103 = vector.extract_strided_slice %11 {offsets = [0, 352], sizes = [16, 32], strides = [1, 1]} : vector<16x384xf32> to vector<16x32xf32>
    %104 = vector.shape_cast %103 : vector<16x32xf32> to vector<2x8x32xf32>
    %105 = arith.truncf %104 : vector<2x8x32xf32> to vector<2x8x32xbf16>
    "tpu.trace_start"() <{level = 10 : i32, message = "bqd,bkd->bqk"}> : () -> ()
    %cst_31 = arith.constant dense<0.000000e+00> : vector<2x8x8xf32>
    %106 = tpu.matmul %99, %102, %cst_31 {dimension_numbers = #tpu.dot_dimension_numbers<[2], [2], [1], [1], [0, 0, 0, 1, 1, 1], [0], [0]>} : vector<2x8x32xbf16>, vector<2x8x32xbf16>, vector<2x8x8xf32> -> vector<2x8x8xf32>
    "tpu.trace_stop"() : () -> ()
    %cst_32 = arith.constant dense<0xFF800000> : vector<2x8xf32>
    %107 = vector.multi_reduction <maximumf>, %106, %cst_32 [2] : vector<2x8x8xf32> to vector<2x8xf32>
    %108 = vector.shape_cast %107 : vector<2x8xf32> to vector<2x8x1xf32>
    %109 = vector.broadcast %108 : vector<2x8x1xf32> to vector<2x8x8xf32>
    %110 = arith.subf %106, %109 : vector<2x8x8xf32>
    %111 = math.exp %110 : vector<2x8x8xf32>
    %cst_33 = arith.constant dense<0.000000e+00> : vector<2x8xf32>
    %112 = vector.multi_reduction <add>, %111, %cst_33 [2] : vector<2x8x8xf32> to vector<2x8xf32>
    %113 = vector.shape_cast %112 : vector<2x8xf32> to vector<2x8x1xf32>
    %114 = tpu.reciprocal %113 {approx = true} : vector<2x8x1xf32> -> vector<2x8x1xf32>
    %115 = vector.broadcast %114 : vector<2x8x1xf32> to vector<2x8x8xf32>
    %116 = arith.mulf %111, %115 : vector<2x8x8xf32>
    %117 = arith.truncf %116 : vector<2x8x8xf32> to vector<2x8x8xbf16>
    "tpu.trace_start"() <{level = 10 : i32, message = "bqk,bkd->bqd"}> : () -> ()
    %cst_34 = arith.constant dense<0.000000e+00> : vector<2x8x32xf32>
    %118 = tpu.matmul %117, %105, %cst_34 {dimension_numbers = #tpu.dot_dimension_numbers<[2], [1], [1], [2], [0, 0, 0, 1, 1, 2], [0], [0]>} : vector<2x8x8xbf16>, vector<2x8x32xbf16>, vector<2x8x32xf32> -> vector<2x8x32xf32>
    "tpu.trace_stop"() : () -> ()
    %119 = vector.shape_cast %118 : vector<2x8x32xf32> to vector<16x32xf32>
    %120 = arith.truncf %119 : vector<16x32xf32> to vector<16x32xbf16>
    %c0_35 = arith.constant 0 : index
    %c96 = arith.constant 96 : index
    %c0_36 = arith.constant 0 : index
    %121 = vector.load %arg8[%c0_35, %c96, %c0_36] : memref<1x128x128xbf16, #tpu.memory_space<vmem>>, vector<1x32x128xbf16>
    %122 = vector.shape_cast %121 : vector<1x32x128xbf16> to vector<32x128xbf16>
    %cst_37 = arith.constant dense<0.000000e+00> : vector<16x128xf32>
    %123 = tpu.matmul %120, %122, %cst_37 {dimension_numbers = #tpu.dot_dimension_numbers<[1], [0], [0], [1], [0, 0, 1, 1], [], []>} : vector<16x32xbf16>, vector<32x128xbf16>, vector<16x128xf32> -> vector<16x128xf32>
    %124 = arith.addf %96, %123 : vector<16x128xf32>
    %c0_38 = arith.constant 0 : index
    %c0_39 = arith.constant 0 : index
    %c0_40 = arith.constant 0 : index
    %125 = vector.load %arg9[%c0_38, %c0_39, %c0_40] : memref<1x1x128xf32, #tpu.memory_space<vmem>>, vector<1x1x128xf32>
    %126 = vector.shape_cast %125 : vector<1x1x128xf32> to vector<1x128xf32>
    %127 = vector.broadcast %126 : vector<1x128xf32> to vector<16x128xf32>
    %128 = arith.addf %124, %127 : vector<16x128xf32>
    %129 = arith.addf %128, %3 : vector<16x128xf32>
    %c0_41 = arith.constant 0 : index
    %c0_42 = arith.constant 0 : index
    %c0_43 = arith.constant 0 : index
    %130 = vector.load %arg10[%c0_41, %c0_42, %c0_43] : memref<1x1x128xf32, #tpu.memory_space<vmem>>, vector<1x1x128xf32>
    %131 = vector.shape_cast %130 : vector<1x1x128xf32> to vector<1x128xf32>
    %c0_44 = arith.constant 0 : index
    %c0_45 = arith.constant 0 : index
    %c0_46 = arith.constant 0 : index
    %132 = vector.load %arg11[%c0_44, %c0_45, %c0_46] : memref<1x1x128xf32, #tpu.memory_space<vmem>>, vector<1x1x128xf32>
    %133 = vector.shape_cast %132 : vector<1x1x128xf32> to vector<1x128xf32>
    %cst_47 = arith.constant dense<0.000000e+00> : vector<16xf32>
    %134 = vector.multi_reduction <add>, %129, %cst_47 [1] : vector<16x128xf32> to vector<16xf32>
    %135 = vector.shape_cast %134 : vector<16xf32> to vector<16x1xf32>
    %cst_48 = arith.constant 1.280000e+02 : f32
    %136 = vector.broadcast %cst_48 : f32 to vector<16x1xf32>
    %137 = arith.divf %135, %136 : vector<16x1xf32>
    %138 = arith.mulf %129, %129 : vector<16x128xf32>
    %cst_49 = arith.constant dense<0.000000e+00> : vector<16xf32>
    %139 = vector.multi_reduction <add>, %138, %cst_49 [1] : vector<16x128xf32> to vector<16xf32>
    %140 = vector.shape_cast %139 : vector<16xf32> to vector<16x1xf32>
    %cst_50 = arith.constant 1.280000e+02 : f32
    %141 = vector.broadcast %cst_50 : f32 to vector<16x1xf32>
    %142 = arith.divf %140, %141 : vector<16x1xf32>
    %143 = arith.mulf %137, %137 : vector<16x1xf32>
    %144 = arith.subf %142, %143 : vector<16x1xf32>
    %145 = vector.broadcast %137 : vector<16x1xf32> to vector<16x128xf32>
    %146 = arith.subf %129, %145 : vector<16x128xf32>
    %cst_51 = arith.constant 9.99999974E-6 : f32
    %147 = vector.broadcast %cst_51 : f32 to vector<16x1xf32>
    %148 = arith.addf %144, %147 : vector<16x1xf32>
    %149 = math.rsqrt %148 : vector<16x1xf32>
    %150 = vector.broadcast %149 : vector<16x1xf32> to vector<16x128xf32>
    %151 = arith.mulf %146, %150 : vector<16x128xf32>
    %152 = vector.broadcast %131 : vector<1x128xf32> to vector<16x128xf32>
    %153 = arith.mulf %151, %152 : vector<16x128xf32>
    %154 = vector.broadcast %133 : vector<1x128xf32> to vector<16x128xf32>
    %155 = arith.addf %153, %154 : vector<16x128xf32>
    %156 = arith.truncf %155 : vector<16x128xf32> to vector<16x128xbf16>
    %c0_52 = arith.constant 0 : index
    %c0_53 = arith.constant 0 : index
    %c0_54 = arith.constant 0 : index
    %157 = vector.load %arg12[%c0_52, %c0_53, %c0_54] : memref<1x128x512xbf16, #tpu.memory_space<vmem>>, vector<1x128x512xbf16>
    %158 = vector.shape_cast %157 : vector<1x128x512xbf16> to vector<128x512xbf16>
    %cst_55 = arith.constant dense<0.000000e+00> : vector<16x512xf32>
    %159 = tpu.matmul %156, %158, %cst_55 {dimension_numbers = #tpu.dot_dimension_numbers<[1], [0], [0], [1], [0, 0, 1, 1], [], []>} : vector<16x128xbf16>, vector<128x512xbf16>, vector<16x512xf32> -> vector<16x512xf32>
    %c0_56 = arith.constant 0 : index
    %c0_57 = arith.constant 0 : index
    %c0_58 = arith.constant 0 : index
    %160 = vector.load %arg13[%c0_56, %c0_57, %c0_58] : memref<1x1x512xf32, #tpu.memory_space<vmem>>, vector<1x1x512xf32>
    %161 = vector.shape_cast %160 : vector<1x1x512xf32> to vector<1x512xf32>
    %162 = vector.broadcast %161 : vector<1x512xf32> to vector<16x512xf32>
    %163 = arith.addf %159, %162 : vector<16x512xf32>
    %164 = arith.mulf %163, %163 : vector<16x512xf32>
    %165 = arith.mulf %163, %164 : vector<16x512xf32>
    %cst_59 = arith.constant 4.471500e-02 : f32
    %166 = vector.broadcast %cst_59 : f32 to vector<16x512xf32>
    %167 = arith.mulf %166, %165 : vector<16x512xf32>
    %168 = arith.addf %163, %167 : vector<16x512xf32>
    %cst_60 = arith.constant 0.797884583 : f32
    %169 = vector.broadcast %cst_60 : f32 to vector<16x512xf32>
    %170 = arith.mulf %169, %168 : vector<16x512xf32>
    %171 = math.tanh %170 : vector<16x512xf32>
    %cst_61 = arith.constant 1.000000e+00 : f32
    %172 = vector.broadcast %cst_61 : f32 to vector<16x512xf32>
    %173 = arith.addf %172, %171 : vector<16x512xf32>
    %cst_62 = arith.constant 5.000000e-01 : f32
    %174 = vector.broadcast %cst_62 : f32 to vector<16x512xf32>
    %175 = arith.mulf %174, %173 : vector<16x512xf32>
    %176 = arith.mulf %163, %175 : vector<16x512xf32>
    %177 = arith.truncf %176 : vector<16x512xf32> to vector<16x512xbf16>
    %c0_63 = arith.constant 0 : index
    %c0_64 = arith.constant 0 : index
    %c0_65 = arith.constant 0 : index
    %178 = vector.load %arg14[%c0_63, %c0_64, %c0_65] : memref<1x512x128xbf16, #tpu.memory_space<vmem>>, vector<1x512x128xbf16>
    %179 = vector.shape_cast %178 : vector<1x512x128xbf16> to vector<512x128xbf16>
    %cst_66 = arith.constant dense<0.000000e+00> : vector<16x128xf32>
    %180 = tpu.matmul %177, %179, %cst_66 {dimension_numbers = #tpu.dot_dimension_numbers<[1], [0], [0], [1], [0, 0, 1, 1], [], []>} : vector<16x512xbf16>, vector<512x128xbf16>, vector<16x128xf32> -> vector<16x128xf32>
    %c0_67 = arith.constant 0 : index
    %c0_68 = arith.constant 0 : index
    %c0_69 = arith.constant 0 : index
    %181 = vector.load %arg15[%c0_67, %c0_68, %c0_69] : memref<1x1x128xf32, #tpu.memory_space<vmem>>, vector<1x1x128xf32>
    %182 = vector.shape_cast %181 : vector<1x1x128xf32> to vector<1x128xf32>
    %183 = vector.broadcast %182 : vector<1x128xf32> to vector<16x128xf32>
    %184 = arith.addf %180, %183 : vector<16x128xf32>
    %185 = arith.addf %184, %155 : vector<16x128xf32>
    %c0_70 = arith.constant 0 : index
    %c0_71 = arith.constant 0 : index
    %c0_72 = arith.constant 0 : index
    %186 = vector.load %arg16[%c0_70, %c0_71, %c0_72] : memref<1x1x128xf32, #tpu.memory_space<vmem>>, vector<1x1x128xf32>
    %187 = vector.shape_cast %186 : vector<1x1x128xf32> to vector<1x128xf32>
    %c0_73 = arith.constant 0 : index
    %c0_74 = arith.constant 0 : index
    %c0_75 = arith.constant 0 : index
    %188 = vector.load %arg17[%c0_73, %c0_74, %c0_75] : memref<1x1x128xf32, #tpu.memory_space<vmem>>, vector<1x1x128xf32>
    %189 = vector.shape_cast %188 : vector<1x1x128xf32> to vector<1x128xf32>
    %cst_76 = arith.constant dense<0.000000e+00> : vector<16xf32>
    %190 = vector.multi_reduction <add>, %185, %cst_76 [1] : vector<16x128xf32> to vector<16xf32>
    %191 = vector.shape_cast %190 : vector<16xf32> to vector<16x1xf32>
    %cst_77 = arith.constant 1.280000e+02 : f32
    %192 = vector.broadcast %cst_77 : f32 to vector<16x1xf32>
    %193 = arith.divf %191, %192 : vector<16x1xf32>
    %194 = arith.mulf %185, %185 : vector<16x128xf32>
    %cst_78 = arith.constant dense<0.000000e+00> : vector<16xf32>
    %195 = vector.multi_reduction <add>, %194, %cst_78 [1] : vector<16x128xf32> to vector<16xf32>
    %196 = vector.shape_cast %195 : vector<16xf32> to vector<16x1xf32>
    %cst_79 = arith.constant 1.280000e+02 : f32
    %197 = vector.broadcast %cst_79 : f32 to vector<16x1xf32>
    %198 = arith.divf %196, %197 : vector<16x1xf32>
    %199 = arith.mulf %193, %193 : vector<16x1xf32>
    %200 = arith.subf %198, %199 : vector<16x1xf32>
    %201 = vector.broadcast %193 : vector<16x1xf32> to vector<16x128xf32>
    %202 = arith.subf %185, %201 : vector<16x128xf32>
    %cst_80 = arith.constant 9.99999974E-6 : f32
    %203 = vector.broadcast %cst_80 : f32 to vector<16x1xf32>
    %204 = arith.addf %200, %203 : vector<16x1xf32>
    %205 = math.rsqrt %204 : vector<16x1xf32>
    %206 = vector.broadcast %205 : vector<16x1xf32> to vector<16x128xf32>
    %207 = arith.mulf %202, %206 : vector<16x128xf32>
    %208 = vector.broadcast %187 : vector<1x128xf32> to vector<16x128xf32>
    %209 = arith.mulf %207, %208 : vector<16x128xf32>
    %210 = vector.broadcast %189 : vector<1x128xf32> to vector<16x128xf32>
    %211 = arith.addf %209, %210 : vector<16x128xf32>
    %c0_81 = arith.constant 0 : index
    %c0_82 = arith.constant 0 : index
    %212 = vector.load %arg21[%c0_81, %c0_82] : memref<16x128xf32, #tpu.memory_space<vmem>>, vector<16x128xf32>
    tpu.vector_store %arg21[%c0_81, %c0_82], %211 {strides = array<i32>} : memref<16x128xf32, #tpu.memory_space<vmem>>, vector<16x128xf32>,
    %c1_i32 = arith.constant 1 : i32
    %213 = arith.cmpi eq, %arg0, %c1_i32 : i32
    %214 = arith.extui %213 : i1 to i32
    %c0_i32_83 = arith.constant 0 : i32
    %215 = arith.cmpi ne, %214, %c0_i32_83 : i32
    scf.if %215 {
      %c0_84 = arith.constant 0 : index
      %c0_85 = arith.constant 0 : index
      %216 = tpu.strided_load %arg21[%c0_84, %c0_85] {strides = array<i32: 8, 1>} : memref<16x128xf32, #tpu.memory_space<vmem>>, vector<2x128xf32>
      %217 = arith.truncf %216 : vector<2x128xf32> to vector<2x128xbf16>
      %c0_86 = arith.constant 0 : index
      %c0_87 = arith.constant 0 : index
      %218 = vector.load %arg18[%c0_86, %c0_87] : memref<128x128xbf16, #tpu.memory_space<vmem>>, vector<128x128xbf16>
      %cst_88 = arith.constant dense<0.000000e+00> : vector<2x128xf32>
      %219 = tpu.matmul %217, %218, %cst_88 {dimension_numbers = #tpu.dot_dimension_numbers<[1], [0], [0], [1], [0, 0, 1, 1], [], []>} : vector<2x128xbf16>, vector<128x128xbf16>, vector<2x128xf32> -> vector<2x128xf32>
      %c0_89 = arith.constant 0 : index
      %c0_90 = arith.constant 0 : index
      %220 = vector.load %arg19[%c0_89, %c0_90] : memref<1x128xf32, #tpu.memory_space<vmem>>, vector<1x128xf32>
      %221 = vector.broadcast %220 : vector<1x128xf32> to vector<2x128xf32>
      %222 = arith.addf %219, %221 : vector<2x128xf32>
      %223 = math.tanh %222 : vector<2x128xf32>
      %c0_91 = arith.constant 0 : index
      %c0_92 = arith.constant 0 : index
      %224 = vector.load %arg20[%c0_91, %c0_92] : memref<2x128xf32, #tpu.memory_space<vmem>>, vector<2x128xf32>
      tpu.vector_store %arg20[%c0_91, %c0_92], %223 {strides = array<i32>} : memref<2x128xf32, #tpu.memory_space<vmem>>, vector<2x128xf32>,
    } else {
    }
    return
  }
  func.func @transform_0(%arg0: i32) -> (i32, i32) {
    %c0_i32 = arith.constant 0 : i32
    %c0_i32_0 = arith.constant 0 : i32
    %c0_i32_1 = arith.constant 0 : i32
    return %c0_i32, %c0_i32_0 : i32, i32
  }
  func.func @transform_1(%arg0: i32) -> (i32, i32) {
    %c0_i32 = arith.constant 0 : i32
    %c0_i32_0 = arith.constant 0 : i32
    %c0_i32_1 = arith.constant 0 : i32
    return %c0_i32, %c0_i32_0 : i32, i32
  }
  func.func @transform_2(%arg0: i32) -> (i32, i32) {
    %c0_i32 = arith.constant 0 : i32
    %c0_i32_0 = arith.constant 0 : i32
    %c0_i32_1 = arith.constant 0 : i32
    return %c0_i32, %c0_i32_0 : i32, i32
  }
  func.func @transform_3(%arg0: i32) -> (i32, i32) {
    %c0_i32 = arith.constant 0 : i32
    %c0_i32_0 = arith.constant 0 : i32
    %c0_i32_1 = arith.constant 0 : i32
    return %c0_i32, %c0_i32_0 : i32, i32
  }
  func.func @transform_4(%arg0: i32) -> (i32, i32) {
    %c0_i32 = arith.constant 0 : i32
    %c0_i32_0 = arith.constant 0 : i32
    %c0_i32_1 = arith.constant 0 : i32
    return %c0_i32, %c0_i32_0 : i32, i32
  }
  func.func @transform_5(%arg0: i32) -> (i32, i32, i32) {
    %c0_i32 = arith.constant 0 : i32
    %c0_i32_0 = arith.constant 0 : i32
    %c0_i32_1 = arith.constant 0 : i32
    return %arg0, %c0_i32, %c0_i32_0 : i32, i32, i32
  }
  func.func @transform_6(%arg0: i32) -> (i32, i32, i32) {
    %c0_i32 = arith.constant 0 : i32
    %c0_i32_0 = arith.constant 0 : i32
    %c0_i32_1 = arith.constant 0 : i32
    return %arg0, %c0_i32, %c0_i32_0 : i32, i32, i32
  }
  func.func @transform_7(%arg0: i32) -> (i32, i32, i32) {
    %c0_i32 = arith.constant 0 : i32
    %c0_i32_0 = arith.constant 0 : i32
    %c0_i32_1 = arith.constant 0 : i32
    return %arg0, %c0_i32, %c0_i32_0 : i32, i32, i32
  }
  func.func @transform_8(%arg0: i32) -> (i32, i32, i32) {
    %c0_i32 = arith.constant 0 : i32
    %c0_i32_0 = arith.constant 0 : i32
    %c0_i32_1 = arith.constant 0 : i32
    return %arg0, %c0_i32, %c0_i32_0 : i32, i32, i32
  }
  func.func @transform_9(%arg0: i32) -> (i32, i32, i32) {
    %c0_i32 = arith.constant 0 : i32
    %c0_i32_0 = arith.constant 0 : i32
    %c0_i32_1 = arith.constant 0 : i32
    return %arg0, %c0_i32, %c0_i32_0 : i32, i32, i32
  }
  func.func @transform_10(%arg0: i32) -> (i32, i32, i32) {
    %c0_i32 = arith.constant 0 : i32
    %c0_i32_0 = arith.constant 0 : i32
    %c0_i32_1 = arith.constant 0 : i32
    return %arg0, %c0_i32, %c0_i32_0 : i32, i32, i32
  }
  func.func @transform_11(%arg0: i32) -> (i32, i32, i32) {
    %c0_i32 = arith.constant 0 : i32
    %c0_i32_0 = arith.constant 0 : i32
    %c0_i32_1 = arith.constant 0 : i32
    return %arg0, %c0_i32, %c0_i32_0 : i32, i32, i32
  }
  func.func @transform_12(%arg0: i32) -> (i32, i32, i32) {
    %c0_i32 = arith.constant 0 : i32
    %c0_i32_0 = arith.constant 0 : i32
    %c0_i32_1 = arith.constant 0 : i32
    return %arg0, %c0_i32, %c0_i32_0 : i32, i32, i32
  }
  func.func @transform_13(%arg0: i32) -> (i32, i32, i32) {
    %c0_i32 = arith.constant 0 : i32
    %c0_i32_0 = arith.constant 0 : i32
    %c0_i32_1 = arith.constant 0 : i32
    return %arg0, %c0_i32, %c0_i32_0 : i32, i32, i32
  }
  func.func @transform_14(%arg0: i32) -> (i32, i32, i32) {
    %c0_i32 = arith.constant 0 : i32
    %c0_i32_0 = arith.constant 0 : i32
    %c0_i32_1 = arith.constant 0 : i32
    return %arg0, %c0_i32, %c0_i32_0 : i32, i32, i32
  }
  func.func @transform_15(%arg0: i32) -> (i32, i32, i32) {
    %c0_i32 = arith.constant 0 : i32
    %c0_i32_0 = arith.constant 0 : i32
    %c0_i32_1 = arith.constant 0 : i32
    return %arg0, %c0_i32, %c0_i32_0 : i32, i32, i32
  }
  func.func @transform_16(%arg0: i32) -> (i32, i32, i32) {
    %c0_i32 = arith.constant 0 : i32
    %c0_i32_0 = arith.constant 0 : i32
    %c0_i32_1 = arith.constant 0 : i32
    return %arg0, %c0_i32, %c0_i32_0 : i32, i32, i32
  }
  func.func @transform_17(%arg0: i32) -> (i32, i32) {
    %c0_i32 = arith.constant 0 : i32
    %c0_i32_0 = arith.constant 0 : i32
    %c0_i32_1 = arith.constant 0 : i32
    return %c0_i32, %c0_i32_0 : i32, i32
  }
  func.func @transform_18(%arg0: i32) -> (i32, i32) {
    %c0_i32 = arith.constant 0 : i32
    %c0_i32_0 = arith.constant 0 : i32
    %c0_i32_1 = arith.constant 0 : i32
    return %c0_i32, %c0_i32_0 : i32, i32
  }
  func.func @transform_19(%arg0: i32) -> (i32, i32) {
    %c0_i32 = arith.constant 0 : i32
    %c0_i32_0 = arith.constant 0 : i32
    %c0_i32_1 = arith.constant 0 : i32
    return %c0_i32, %c0_i32_0 : i32, i32
  }
}

</mosaic_0001>

<llo_original>
// kernel: roberta_forward.1
$region0: #{roberta_forward.1}
  #allocation0 [shape = 'u32[]', space=smem, size = 0x4, offset = 0x4, fixed_abs, tag = 'smem constant byte address 0x4 - core index']
  #allocation1 [shape = 'u32[72,128]{1,0:T(1,128)}', space=vmem, size = 0x9000, scoped, tag = 'internal scratch']
  #allocation2 [shape = 'f32[16,128]{1,0:T(8,128)}', space=vmem, size = 0x2000, scoped, tag = 'scratch operand']
  %s0 = inlined_call_operand.vmem [shape: f32[16,128], index: 0, kind: input, shape index: {}]
  %s1 = inlined_call_operand.vmem [shape: f32[8,128], index: 1, kind: input, shape index: {}]
  %s2 = inlined_call_operand.vmem [shape: f32[1,128], index: 2, kind: input, shape index: {}]
  %s3 = inlined_call_operand.vmem [shape: f32[1,128], index: 3, kind: input, shape index: {}]
  %s4 = inlined_call_operand.vmem [shape: f32[1,128], index: 4, kind: input, shape index: {}]
  %s5 = inlined_call_operand.hbm [shape: bf16[2,128,384], index: 5, kind: input, shape index: {}]
  %s6 = inlined_call_operand.vmem [shape: f32[2,1,384], index: 6, kind: input, shape index: {}]
  %s7 = inlined_call_operand.vmem [shape: bf16[2,128,128], index: 7, kind: input, shape index: {}]
  %s8 = inlined_call_operand.vmem [shape: f32[2,1,128], index: 8, kind: input, shape index: {}]
  %s9 = inlined_call_operand.vmem [shape: f32[2,1,128], index: 9, kind: input, shape index: {}]
  %s10 = inlined_call_operand.vmem [shape: f32[2,1,128], index: 10, kind: input, shape index: {}]
  %s11 = inlined_call_operand.hbm [shape: bf16[2,128,512], index: 11, kind: input, shape index: {}]
  %s12 = inlined_call_operand.vmem [shape: f32[2,1,512], index: 12, kind: input, shape index: {}]
  %s13 = inlined_call_operand.hbm [shape: bf16[2,512,128], index: 13, kind: input, shape index: {}]
  %s14 = inlined_call_operand.vmem [shape: f32[2,1,128], index: 14, kind: input, shape index: {}]
  %s15 = inlined_call_operand.vmem [shape: f32[2,1,128], index: 15, kind: input, shape index: {}]
  %s16 = inlined_call_operand.vmem [shape: f32[2,1,128], index: 16, kind: input, shape index: {}]
  %s17 = inlined_call_operand.hbm [shape: bf16[128,128], index: 17, kind: input, shape index: {}]
  %s18 = inlined_call_operand.vmem [shape: f32[1,128], index: 18, kind: input, shape index: {}]
  %s19 = inlined_call_operand.hbm [shape: f32[2,128], index: 19, kind: output, shape index: {}]
  %s20 = sld [smem:[#allocation0]]
  $region133: #{roberta_forward.1} parent=0
    _
  %s22 = ssub.s32 1, %s20
  %s23 = scalar_select 0, %s22, %s20
  $region1: #{roberta_forward.1} parent=0
    #allocation3 [shape = 'u8[196608]{0}', space=vmem, size = 0x30000, scoped, tag = 'input window, operand 5']
    #allocation4 [shape = 's32[2]{0}', space=sflag, size = 0x8, scoped, tag = 'scoped memory for roberta_forward.1']
    #allocation5 [shape = 's32[2]{0}', space=sflag, size = 0x8, scoped, tag = 'scoped memory for roberta_forward.1']
    #allocation6 [shape = 'u8[262144]{0}', space=vmem, size = 0x40000, scoped, tag = 'input window, operand 11']
    #allocation7 [shape = 's32[2]{0}', space=sflag, size = 0x8, scoped, tag = 'scoped memory for roberta_forward.1']
    #allocation8 [shape = 'u8[262144]{0}', space=vmem, size = 0x40000, scoped, tag = 'input window, operand 13']
    #allocation9 [shape = 'u8[32768]{0}', space=vmem, size = 0x8000, scoped, tag = 'input window, operand 17, single buffered']
    #allocation10 [shape = 's32[1]{0}', space=sflag, size = 0x4, scoped, tag = 'scoped memory for roberta_forward.1']
    #allocation11 [shape = 'u8[1024]{0}', space=vmem, size = 0x400, scoped, tag = 'output window, operand 0, single buffered']
    %24 = vsyncpa [#allocation4], 0
    %s25 = scalar_lea.sflag [#allocation4], 1
    %26 = vsyncpa %s25, 0
    %27 = vsyncpa [#allocation7], 0
    %s28 = scalar_lea.sflag [#allocation7], 1
    %29 = vsyncpa %s28, 0
    %30 = vsyncpa [#allocation10], 0
    %31 = vsyncpa [#allocation5], 0
    loop: start=0, step=1, limit=4
    $region2: #{roberta_forward.1} parent=1 // loop_pre_header
      _
    $region3: #{roberta_forward.1} parent=1 // loop_header
      %s33 = sphi 0, %s37
      %p34 = scmp.ge.s32.totalorder %s33, 4
      %s41 = sphi 0, %s41
      %s43 = sphi 0, %s41
      %s44 = sphi 0, %s43
      %s58 = sphi 0, %s44
      %s62 = sphi 0, %s62
      %s64 = sphi 0, %s62
      %s65 = sphi 0, %s64
      %s79 = sphi 0, %s65
      %s83 = sphi 0, %s83
      %s85 = sphi 0, %s83
      %s86 = sphi 0, %s85
      %s100 = sphi 0, %s86
      %s104 = sphi 0, %s104
      %s106 = sphi 0, %s104
      %s107 = sphi 0, %s106
      %s121 = sphi 0, %s107
      %s125 = sphi 0, %s125
      %s127 = sphi 0, %s125
      %s128 = sphi 0, %s127
      %s142 = sphi 0, %s128
      %s148 = sphi 0, %s150
      %s151 = sphi 0, %s148
      %s152 = sphi 0, %s151
      %s168 = sphi 0, %s152
      %s174 = sphi 0, %s176
      %s177 = sphi 0, %s174
      %s178 = sphi 0, %s177
      %s194 = sphi 0, %s178
      %s200 = sphi 0, %s202
      %s203 = sphi 0, %s200
      %s204 = sphi 0, %s203
      %s220 = sphi 0, %s204
      %s226 = sphi 0, %s228
      %s229 = sphi 0, %s226
      %s230 = sphi 0, %s229
      %s246 = sphi 0, %s230
      %s252 = sphi 0, %s254
      %s255 = sphi 0, %s252
      %s256 = sphi 0, %s255
      %s272 = sphi 0, %s256
      %s278 = sphi 0, %s280
      %s281 = sphi 0, %s278
      %s282 = sphi 0, %s281
      %s298 = sphi 0, %s282
      %s304 = sphi 0, %s306
      %s307 = sphi 0, %s304
      %s308 = sphi 0, %s307
      %s324 = sphi 0, %s308
      %s330 = sphi 0, %s332
      %s333 = sphi 0, %s330
      %s334 = sphi 0, %s333
      %s350 = sphi 0, %s334
      %s356 = sphi 0, %s358
      %s359 = sphi 0, %s356
      %s360 = sphi 0, %s359
      %s376 = sphi 0, %s360
      %s382 = sphi 0, %s384
      %s385 = sphi 0, %s382
      %s386 = sphi 0, %s385
      %s402 = sphi 0, %s386
      %s408 = sphi 0, %s410
      %s411 = sphi 0, %s408
      %s412 = sphi 0, %s411
      %s428 = sphi 0, %s412
      %s434 = sphi 0, %s436
      %s437 = sphi 0, %s434
      %s438 = sphi 0, %s437
      %s454 = sphi 0, %s438
      %s458 = sphi 0, %s458
      %s460 = sphi 0, %s458
      %s461 = sphi 0, %s460
      %s475 = sphi 0, %s461
      %s479 = sphi 0, %s479
      %s481 = sphi 0, %s479
      %s482 = sphi 0, %s481
      %s496 = sphi 0, %s482
      %s500 = sphi 0, %s500
      %s502 = sphi 0, %s500
      %s503 = sphi 0, %s502
      %s517 = sphi 0, %s503
    $region4: #{roberta_forward.1} parent=1 // loop_header_branch
      %36 = sbr.rel (%p34) target = $region8
    $region5: #{roberta_forward.1} parent=1 // loop_body
      %s38 = ssub.s32 %s33, 1
      %s39 = ssub.s32 %s33, 2
      %s40 = sadd.s32 %s33, 1
      %s42 = sadd.s32 %s41, 1
      %p45 = scmp.eq.s32.totalorder %s33, 1
      %p46 = scmp.ne.s32.totalorder %s41, %s43
      %p47 = scmp.eq.s32.totalorder %s33, 0
      %p48 = por %p46, %p47
      %p49 = scmp.ne.s32.totalorder %s41, %s43
      %p50 = scmp.eq.s32.totalorder %s38, 1
      %p51 = por %p49, %p50
      %p52 = scmp.ne.s32.totalorder %s43, %s44
      %p53 = scmp.eq.s32.totalorder %s38, 0
      %p54 = por %p52, %p53
      %p55 = scmp.ne.s32.totalorder %s43, %s44
      %p56 = scmp.eq.s32.totalorder %s39, 1
      %p57 = por %p55, %p56
      %p59 = scmp.ne.s32.totalorder %s44, %s58
      %p60 = scmp.eq.s32.totalorder %s39, 0
      %p61 = por %p59, %p60
      %s63 = sadd.s32 %s62, 1
      %p66 = scmp.eq.s32.totalorder %s33, 1
      %p67 = scmp.ne.s32.totalorder %s62, %s64
      %p68 = scmp.eq.s32.totalorder %s33, 0
      %p69 = por %p67, %p68
      %p70 = scmp.ne.s32.totalorder %s62, %s64
      %p71 = scmp.eq.s32.totalorder %s38, 1
      %p72 = por %p70, %p71
      %p73 = scmp.ne.s32.totalorder %s64, %s65
      %p74 = scmp.eq.s32.totalorder %s38, 0
      %p75 = por %p73, %p74
      %p76 = scmp.ne.s32.totalorder %s64, %s65
      %p77 = scmp.eq.s32.totalorder %s39, 1
      %p78 = por %p76, %p77
      %p80 = scmp.ne.s32.totalorder %s65, %s79
      %p81 = scmp.eq.s32.totalorder %s39, 0
      %p82 = por %p80, %p81
      %s84 = sadd.s32 %s83, 1
      %p87 = scmp.eq.s32.totalorder %s33, 1
      %p88 = scmp.ne.s32.totalorder %s83, %s85
      %p89 = scmp.eq.s32.totalorder %s33, 0
      %p90 = por %p88, %p89
      %p91 = scmp.ne.s32.totalorder %s83, %s85
      %p92 = scmp.eq.s32.totalorder %s38, 1
      %p93 = por %p91, %p92
      %p94 = scmp.ne.s32.totalorder %s85, %s86
      %p95 = scmp.eq.s32.totalorder %s38, 0
      %p96 = por %p94, %p95
      %p97 = scmp.ne.s32.totalorder %s85, %s86
      %p98 = scmp.eq.s32.totalorder %s39, 1
      %p99 = por %p97, %p98
      %p101 = scmp.ne.s32.totalorder %s86, %s100
      %p102 = scmp.eq.s32.totalorder %s39, 0
      %p103 = por %p101, %p102
      %s105 = sadd.s32 %s104, 1
      %p108 = scmp.eq.s32.totalorder %s33, 1
      %p109 = scmp.ne.s32.totalorder %s104, %s106
      %p110 = scmp.eq.s32.totalorder %s33, 0
      %p111 = por %p109, %p110
      %p112 = scmp.ne.s32.totalorder %s104, %s106
      %p113 = scmp.eq.s32.totalorder %s38, 1
      %p114 = por %p112, %p113
      %p115 = scmp.ne.s32.totalorder %s106, %s107
      %p116 = scmp.eq.s32.totalorder %s38, 0
      %p117 = por %p115, %p116
      %p118 = scmp.ne.s32.totalorder %s106, %s107
      %p119 = scmp.eq.s32.totalorder %s39, 1
      %p120 = por %p118, %p119
      %p122 = scmp.ne.s32.totalorder %s107, %s121
      %p123 = scmp.eq.s32.totalorder %s39, 0
      %p124 = por %p122, %p123
      %s126 = sadd.s32 %s125, 1
      %p129 = scmp.eq.s32.totalorder %s33, 1
      %p130 = scmp.ne.s32.totalorder %s125, %s127
      %p131 = scmp.eq.s32.totalorder %s33, 0
      %p132 = por %p130, %p131
      %p133 = scmp.ne.s32.totalorder %s125, %s127
      %p134 = scmp.eq.s32.totalorder %s38, 1
      %p135 = por %p133, %p134
      %p136 = scmp.ne.s32.totalorder %s127, %s128
      %p137 = scmp.eq.s32.totalorder %s38, 0
      %p138 = por %p136, %p137
      %p139 = scmp.ne.s32.totalorder %s127, %s128
      %p140 = scmp.eq.s32.totalorder %s39, 1
      %p141 = por %p139, %p140
      %p143 = scmp.ne.s32.totalorder %s128, %s142
      %p144 = scmp.eq.s32.totalorder %s39, 0
      %p145 = por %p143, %p144
      %s146 = ssub.s32 %s33, %s40
      %p147 = scmp.eq.s32.totalorder %s146, 0
      %s149 = sadd.s32 %s148, 1
      %s150 = scalar_select %p147, %s148, %s149
      %p153 = pneg %p147
      %p154 = scmp.eq.s32.totalorder %s33, 1
      %p155 = por %p153, %p154
      %p156 = scmp.ne.s32.totalorder %s148, %s151
      %p157 = scmp.eq.s32.totalorder %s33, 0
      %p158 = por %p156, %p157
      %p159 = scmp.ne.s32.totalorder %s148, %s151
      %p160 = scmp.eq.s32.totalorder %s38, 1
      %p161 = por %p159, %p160
      %p162 = scmp.ne.s32.totalorder %s151, %s152
      %p163 = scmp.eq.s32.totalorder %s38, 0
      %p164 = por %p162, %p163
      %p165 = scmp.ne.s32.totalorder %s151, %s152
      %p166 = scmp.eq.s32.totalorder %s39, 1
      %p167 = por %p165, %p166
      %p169 = scmp.ne.s32.totalorder %s152, %s168
      %p170 = scmp.eq.s32.totalorder %s39, 0
      %p171 = por %p169, %p170
      %s172 = ssub.s32 %s33, %s40
      %p173 = scmp.eq.s32.totalorder %s172, 0
      %s175 = sadd.s32 %s174, 1
      %s176 = scalar_select %p173, %s174, %s175
      %p179 = pneg %p173
      %p180 = scmp.eq.s32.totalorder %s33, 1
      %p181 = por %p179, %p180
      %p182 = scmp.ne.s32.totalorder %s174, %s177
      %p183 = scmp.eq.s32.totalorder %s33, 0
      %p184 = por %p182, %p183
      %p185 = scmp.ne.s32.totalorder %s174, %s177
      %p186 = scmp.eq.s32.totalorder %s38, 1
      %p187 = por %p185, %p186
      %p188 = scmp.ne.s32.totalorder %s177, %s178
      %p189 = scmp.eq.s32.totalorder %s38, 0
      %p190 = por %p188, %p189
      %p191 = scmp.ne.s32.totalorder %s177, %s178
      %p192 = scmp.eq.s32.totalorder %s39, 1
      %p193 = por %p191, %p192
      %p195 = scmp.ne.s32.totalorder %s178, %s194
      %p196 = scmp.eq.s32.totalorder %s39, 0
      %p197 = por %p195, %p196
      %s198 = ssub.s32 %s33, %s40
      %p199 = scmp.eq.s32.totalorder %s198, 0
      %s201 = sadd.s32 %s200, 1
      %s202 = scalar_select %p199, %s200, %s201
      %p205 = pneg %p199
      %p206 = scmp.eq.s32.totalorder %s33, 1
      %p207 = por %p205, %p206
      %p208 = scmp.ne.s32.totalorder %s200, %s203
      %p209 = scmp.eq.s32.totalorder %s33, 0
      %p210 = por %p208, %p209
      %p211 = scmp.ne.s32.totalorder %s200, %s203
      %p212 = scmp.eq.s32.totalorder %s38, 1
      %p213 = por %p211, %p212
      %p214 = scmp.ne.s32.totalorder %s203, %s204
      %p215 = scmp.eq.s32.totalorder %s38, 0
      %p216 = por %p214, %p215
      %p217 = scmp.ne.s32.totalorder %s203, %s204
      %p218 = scmp.eq.s32.totalorder %s39, 1
      %p219 = por %p217, %p218
      %p221 = scmp.ne.s32.totalorder %s204, %s220
      %p222 = scmp.eq.s32.totalorder %s39, 0
      %p223 = por %p221, %p222
      %s224 = ssub.s32 %s33, %s40
      %p225 = scmp.eq.s32.totalorder %s224, 0
      %s227 = sadd.s32 %s226, 1
      %s228 = scalar_select %p225, %s226, %s227
      %p231 = pneg %p225
      %p232 = scmp.eq.s32.totalorder %s33, 1
      %p233 = por %p231, %p232
      %p234 = scmp.ne.s32.totalorder %s226, %s229
      %p235 = scmp.eq.s32.totalorder %s33, 0
      %p236 = por %p234, %p235
      %p237 = scmp.ne.s32.totalorder %s226, %s229
      %p238 = scmp.eq.s32.totalorder %s38, 1
      %p239 = por %p237, %p238
      %p240 = scmp.ne.s32.totalorder %s229, %s230
      %p241 = scmp.eq.s32.totalorder %s38, 0
      %p242 = por %p240, %p241
      %p243 = scmp.ne.s32.totalorder %s229, %s230
      %p244 = scmp.eq.s32.totalorder %s39, 1
      %p245 = por %p243, %p244
      %p247 = scmp.ne.s32.totalorder %s230, %s246
      %p248 = scmp.eq.s32.totalorder %s39, 0
      %p249 = por %p247, %p248
      %s250 = ssub.s32 %s33, %s40
      %p251 = scmp.eq.s32.totalorder %s250, 0
      %s253 = sadd.s32 %s252, 1
      %s254 = scalar_select %p251, %s252, %s253
      %p257 = pneg %p251
      %p258 = scmp.eq.s32.totalorder %s33, 1
      %p259 = por %p257, %p258
      %p260 = scmp.ne.s32.totalorder %s252, %s255
      %p261 = scmp.eq.s32.totalorder %s33, 0
      %p262 = por %p260, %p261
      %p263 = scmp.ne.s32.totalorder %s252, %s255
      %p264 = scmp.eq.s32.totalorder %s38, 1
      %p265 = por %p263, %p264
      %p266 = scmp.ne.s32.totalorder %s255, %s256
      %p267 = scmp.eq.s32.totalorder %s38, 0
      %p268 = por %p266, %p267
      %p269 = scmp.ne.s32.totalorder %s255, %s256
      %p270 = scmp.eq.s32.totalorder %s39, 1
      %p271 = por %p269, %p270
      %p273 = scmp.ne.s32.totalorder %s256, %s272
      %p274 = scmp.eq.s32.totalorder %s39, 0
      %p275 = por %p273, %p274
      %s276 = ssub.s32 %s33, %s40
      %p277 = scmp.eq.s32.totalorder %s276, 0
      %s279 = sadd.s32 %s278, 1
      %s280 = scalar_select %p277, %s278, %s279
      %p283 = pneg %p277
      %p284 = scmp.eq.s32.totalorder %s33, 1
      %p285 = por %p283, %p284
      %p286 = scmp.ne.s32.totalorder %s278, %s281
      %p287 = scmp.eq.s32.totalorder %s33, 0
      %p288 = por %p286, %p287
      %p289 = scmp.ne.s32.totalorder %s278, %s281
      %p290 = scmp.eq.s32.totalorder %s38, 1
      %p291 = por %p289, %p290
      %p292 = scmp.ne.s32.totalorder %s281, %s282
      %p293 = scmp.eq.s32.totalorder %s38, 0
      %p294 = por %p292, %p293
      %p295 = scmp.ne.s32.totalorder %s281, %s282
      %p296 = scmp.eq.s32.totalorder %s39, 1
      %p297 = por %p295, %p296
      %p299 = scmp.ne.s32.totalorder %s282, %s298
      %p300 = scmp.eq.s32.totalorder %s39, 0
      %p301 = por %p299, %p300
      %s302 = ssub.s32 %s33, %s40
      %p303 = scmp.eq.s32.totalorder %s302, 0
      %s305 = sadd.s32 %s304, 1
      %s306 = scalar_select %p303, %s304, %s305
      %p309 = pneg %p303
      %p310 = scmp.eq.s32.totalorder %s33, 1
      %p311 = por %p309, %p310
      %p312 = scmp.ne.s32.totalorder %s304, %s307
      %p313 = scmp.eq.s32.totalorder %s33, 0
      %p314 = por %p312, %p313
      %p315 = scmp.ne.s32.totalorder %s304, %s307
      %p316 = scmp.eq.s32.totalorder %s38, 1
      %p317 = por %p315, %p316
      %p318 = scmp.ne.s32.totalorder %s307, %s308
      %p319 = scmp.eq.s32.totalorder %s38, 0
      %p320 = por %p318, %p319
      %p321 = scmp.ne.s32.totalorder %s307, %s308
      %p322 = scmp.eq.s32.totalorder %s39, 1
      %p323 = por %p321, %p322
      %p325 = scmp.ne.s32.totalorder %s308, %s324
      %p326 = scmp.eq.s32.totalorder %s39, 0
      %p327 = por %p325, %p326
      %s328 = ssub.s32 %s33, %s40
      %p329 = scmp.eq.s32.totalorder %s328, 0
      %s331 = sadd.s32 %s330, 1
      %s332 = scalar_select %p329, %s330, %s331
      %p335 = pneg %p329
      %p336 = scmp.eq.s32.totalorder %s33, 1
      %p337 = por %p335, %p336
      %p338 = scmp.ne.s32.totalorder %s330, %s333
      %p339 = scmp.eq.s32.totalorder %s33, 0
      %p340 = por %p338, %p339
      %p341 = scmp.ne.s32.totalorder %s330, %s333
      %p342 = scmp.eq.s32.totalorder %s38, 1
      %p343 = por %p341, %p342
      %p344 = scmp.ne.s32.totalorder %s333, %s334
      %p345 = scmp.eq.s32.totalorder %s38, 0
      %p346 = por %p344, %p345
      %p347 = scmp.ne.s32.totalorder %s333, %s334
      %p348 = scmp.eq.s32.totalorder %s39, 1
      %p349 = por %p347, %p348
      %p351 = scmp.ne.s32.totalorder %s334, %s350
      %p352 = scmp.eq.s32.totalorder %s39, 0
      %p353 = por %p351, %p352
      %s354 = ssub.s32 %s33, %s40
      %p355 = scmp.eq.s32.totalorder %s354, 0
      %s357 = sadd.s32 %s356, 1
      %s358 = scalar_select %p355, %s356, %s357
      %p361 = pneg %p355
      %p362 = scmp.eq.s32.totalorder %s33, 1
      %p363 = por %p361, %p362
      %p364 = scmp.ne.s32.totalorder %s356, %s359
      %p365 = scmp.eq.s32.totalorder %s33, 0
      %p366 = por %p364, %p365
      %p367 = scmp.ne.s32.totalorder %s356, %s359
      %p368 = scmp.eq.s32.totalorder %s38, 1
      %p369 = por %p367, %p368
      %p370 = scmp.ne.s32.totalorder %s359, %s360
      %p371 = scmp.eq.s32.totalorder %s38, 0
      %p372 = por %p370, %p371
      %p373 = scmp.ne.s32.totalorder %s359, %s360
      %p374 = scmp.eq.s32.totalorder %s39, 1
      %p375 = por %p373, %p374
      %p377 = scmp.ne.s32.totalorder %s360, %s376
      %p378 = scmp.eq.s32.totalorder %s39, 0
      %p379 = por %p377, %p378
      %s380 = ssub.s32 %s33, %s40
      %p381 = scmp.eq.s32.totalorder %s380, 0
      %s383 = sadd.s32 %s382, 1
      %s384 = scalar_select %p381, %s382, %s383
      %p387 = pneg %p381
      %p388 = scmp.eq.s32.totalorder %s33, 1
      %p389 = por %p387, %p388
      %p390 = scmp.ne.s32.totalorder %s382, %s385
      %p391 = scmp.eq.s32.totalorder %s33, 0
      %p392 = por %p390, %p391
      %p393 = scmp.ne.s32.totalorder %s382, %s385
      %p394 = scmp.eq.s32.totalorder %s38, 1
      %p395 = por %p393, %p394
      %p396 = scmp.ne.s32.totalorder %s385, %s386
      %p397 = scmp.eq.s32.totalorder %s38, 0
      %p398 = por %p396, %p397
      %p399 = scmp.ne.s32.totalorder %s385, %s386
      %p400 = scmp.eq.s32.totalorder %s39, 1
      %p401 = por %p399, %p400
      %p403 = scmp.ne.s32.totalorder %s386, %s402
      %p404 = scmp.eq.s32.totalorder %s39, 0
      %p405 = por %p403, %p404
      %s406 = ssub.s32 %s33, %s40
      %p407 = scmp.eq.s32.totalorder %s406, 0
      %s409 = sadd.s32 %s408, 1
      %s410 = scalar_select %p407, %s408, %s409
      %p413 = pneg %p407
      %p414 = scmp.eq.s32.totalorder %s33, 1
      %p415 = por %p413, %p414
      %p416 = scmp.ne.s32.totalorder %s408, %s411
      %p417 = scmp.eq.s32.totalorder %s33, 0
      %p418 = por %p416, %p417
      %p419 = scmp.ne.s32.totalorder %s408, %s411
      %p420 = scmp.eq.s32.totalorder %s38, 1
      %p421 = por %p419, %p420
      %p422 = scmp.ne.s32.totalorder %s411, %s412
      %p423 = scmp.eq.s32.totalorder %s38, 0
      %p424 = por %p422, %p423
      %p425 = scmp.ne.s32.totalorder %s411, %s412
      %p426 = scmp.eq.s32.totalorder %s39, 1
      %p427 = por %p425, %p426
      %p429 = scmp.ne.s32.totalorder %s412, %s428
      %p430 = scmp.eq.s32.totalorder %s39, 0
      %p431 = por %p429, %p430
      %s432 = ssub.s32 %s33, %s40
      %p433 = scmp.eq.s32.totalorder %s432, 0
      %s435 = sadd.s32 %s434, 1
      %s436 = scalar_select %p433, %s434, %s435
      %p439 = pneg %p433
      %p440 = scmp.eq.s32.totalorder %s33, 1
      %p441 = por %p439, %p440
      %p442 = scmp.ne.s32.totalorder %s434, %s437
      %p443 = scmp.eq.s32.totalorder %s33, 0
      %p444 = por %p442, %p443
      %p445 = scmp.ne.s32.totalorder %s434, %s437
      %p446 = scmp.eq.s32.totalorder %s38, 1
      %p447 = por %p445, %p446
      %p448 = scmp.ne.s32.totalorder %s437, %s438
      %p449 = scmp.eq.s32.totalorder %s38, 0
      %p450 = por %p448, %p449
      %p451 = scmp.ne.s32.totalorder %s437, %s438
      %p452 = scmp.eq.s32.totalorder %s39, 1
      %p453 = por %p451, %p452
      %p455 = scmp.ne.s32.totalorder %s438, %s454
      %p456 = scmp.eq.s32.totalorder %s39, 0
      %p457 = por %p455, %p456
      %s459 = sadd.s32 %s458, 1
      %p462 = scmp.eq.s32.totalorder %s33, 1
      %p463 = scmp.ne.s32.totalorder %s458, %s460
      %p464 = scmp.eq.s32.totalorder %s33, 0
      %p465 = por %p463, %p464
      %p466 = scmp.ne.s32.totalorder %s458, %s460
      %p467 = scmp.eq.s32.totalorder %s38, 1
      %p468 = por %p466, %p467
      %p469 = scmp.ne.s32.totalorder %s460, %s461
      %p470 = scmp.eq.s32.totalorder %s38, 0
      %p471 = por %p469, %p470
      %p472 = scmp.ne.s32.totalorder %s460, %s461
      %p473 = scmp.eq.s32.totalorder %s39, 1
      %p474 = por %p472, %p473
      %p476 = scmp.ne.s32.totalorder %s461, %s475
      %p477 = scmp.eq.s32.totalorder %s39, 0
      %p478 = por %p476, %p477
      %s480 = sadd.s32 %s479, 1
      %p483 = scmp.eq.s32.totalorder %s33, 1
      %p484 = scmp.ne.s32.totalorder %s479, %s481
      %p485 = scmp.eq.s32.totalorder %s33, 0
      %p486 = por %p484, %p485
      %p487 = scmp.ne.s32.totalorder %s479, %s481
      %p488 = scmp.eq.s32.totalorder %s38, 1
      %p489 = por %p487, %p488
      %p490 = scmp.ne.s32.totalorder %s481, %s482
      %p491 = scmp.eq.s32.totalorder %s38, 0
      %p492 = por %p490, %p491
      %p493 = scmp.ne.s32.totalorder %s481, %s482
      %p494 = scmp.eq.s32.totalorder %s39, 1
      %p495 = por %p493, %p494
      %p497 = scmp.ne.s32.totalorder %s482, %s496
      %p498 = scmp.eq.s32.totalorder %s39, 0
      %p499 = por %p497, %p498
      %s501 = sadd.s32 %s500, 1
      %p504 = scmp.eq.s32.totalorder %s33, 1
      %p505 = scmp.ne.s32.totalorder %s500, %s502
      %p506 = scmp.eq.s32.totalorder %s33, 0
      %p507 = por %p505, %p506
      %p508 = scmp.ne.s32.totalorder %s500, %s502
      %p509 = scmp.eq.s32.totalorder %s38, 1
      %p510 = por %p508, %p509
      %p511 = scmp.ne.s32.totalorder %s502, %s503
      %p512 = scmp.eq.s32.totalorder %s38, 0
      %p513 = por %p511, %p512
      %p514 = scmp.ne.s32.totalorder %s502, %s503
      %p515 = scmp.eq.s32.totalorder %s39, 1
      %p516 = por %p514, %p515
      %p518 = scmp.ne.s32.totalorder %s503, %s517
      %p519 = scmp.eq.s32.totalorder %s39, 0
      %p520 = por %p518, %p519
      %p521 = scmp.le.s32.totalorder 1, %s33
      %p522 = scmp.lt.s32.totalorder %s33, 3
      %p523 = pnand %p521, %p522
      %p524 = pneg %p523
      // Predicated region
      $region9: #{roberta_forward.1} parent=5 // pred_check
        _
      $region10: #{roberta_forward.1} parent=5 // pred_check_branch
        %526 = sbr.rel (%p523) target = $region12
      $region11: #{roberta_forward.1} parent=5 // pred_region
        %s527 = ssub.s32 %s33, 1
        // Predicated region
        $region13: #{roberta_forward.1} parent=11 // pred_check
          %p528 = pneg %p54
        $region14: #{roberta_forward.1} parent=11 // pred_check_branch
          %530 = sbr.rel (%p528) target = $region16
        $region15: #{roberta_forward.1} parent=11 // pred_region
          _
        $region16: #{roberta_forward.1} parent=11 // pred_fallthru
          _
        // Predicated region
        $region17: #{roberta_forward.1} parent=11 // pred_check
          %p531 = pneg %p75
        $region18: #{roberta_forward.1} parent=11 // pred_check_branch
          %533 = sbr.rel (%p531) target = $region20
        $region19: #{roberta_forward.1} parent=11 // pred_region
          _
        $region20: #{roberta_forward.1} parent=11 // pred_fallthru
          _
        // Predicated region
        $region21: #{roberta_forward.1} parent=11 // pred_check
          %p534 = pneg %p96
        $region22: #{roberta_forward.1} parent=11 // pred_check_branch
          %536 = sbr.rel (%p534) target = $region24
        $region23: #{roberta_forward.1} parent=11 // pred_region
          _
        $region24: #{roberta_forward.1} parent=11 // pred_fallthru
          _
        // Predicated region
        $region25: #{roberta_forward.1} parent=11 // pred_check
          %p537 = pneg %p117
        $region26: #{roberta_forward.1} parent=11 // pred_check_branch
          %539 = sbr.rel (%p537) target = $region28
        $region27: #{roberta_forward.1} parent=11 // pred_region
          _
        $region28: #{roberta_forward.1} parent=11 // pred_fallthru
          _
        // Predicated region
        $region29: #{roberta_forward.1} parent=11 // pred_check
          %p540 = pneg %p138
        $region30: #{roberta_forward.1} parent=11 // pred_check_branch
          %542 = sbr.rel (%p540) target = $region32
        $region31: #{roberta_forward.1} parent=11 // pred_region
          _
        $region32: #{roberta_forward.1} parent=11 // pred_fallthru
          _
        // Predicated region
        $region33: #{roberta_forward.1} parent=11 // pred_check
          %p543 = pneg %p471
        $region34: #{roberta_forward.1} parent=11 // pred_check_branch
          %545 = sbr.rel (%p543) target = $region36
        $region35: #{roberta_forward.1} parent=11 // pred_region
          %547 = vsyncadd [#allocation10], 0
          %s548 = sshll.u32 %s17, 4
          %s549 = int_to_ptr.hbm [resolvable:$true] %s548
          %s550 = sshll.u32 [#allocation9], 4
          %s551 = int_to_ptr.vmem [resolvable:$true] %s550
          %556 = dma.hbm_to_vmem [thread:$0]  %s549, 1024, %s551, [#allocation10], 64, 64, 4
        $region36: #{roberta_forward.1} parent=11 // pred_fallthru
          _
        // Predicated region
        $region37: #{roberta_forward.1} parent=11 // pred_check
          %p557 = pneg %p492
        $region38: #{roberta_forward.1} parent=11 // pred_check_branch
          %559 = sbr.rel (%p557) target = $region40
        $region39: #{roberta_forward.1} parent=11 // pred_region
          _
        $region40: #{roberta_forward.1} parent=11 // pred_fallthru
          _
      $region12: #{roberta_forward.1} parent=5 // pred_fallthru
        _
      %p560 = scmp.lt.s32.totalorder %s33, 2
      // Predicated region
      $region41: #{roberta_forward.1} parent=5 // pred_check
        %p561 = pneg %p560
      $region42: #{roberta_forward.1} parent=5 // pred_check_branch
        %563 = sbr.rel (%p561) target = $region44
      $region43: #{roberta_forward.1} parent=5 // pred_region
        // Predicated region
        $region45: #{roberta_forward.1} parent=43 // pred_check
          %p564 = pneg %p158
        $region46: #{roberta_forward.1} parent=43 // pred_check_branch
          %566 = sbr.rel (%p564) target = $region48
        $region47: #{roberta_forward.1} parent=43 // pred_region
          %s567 = sand.u32 %s148, 1
          %s568 = scalar_lea.sflag [#allocation4], %s567
          %s569 = sand.u32 %s148, 1
          %s570 = smul.addr %s569, 192
          %s571 = scalar_lea.vmem [#allocation3], %s570
          %573 = vsyncadd %s568, 0
          %s574 = smul.addr %s33, 48
          %s575 = smul.addr %s574, 4
          %s576 = scalar_lea.hbm %s5, %s575
          %s577 = sshll.u32 %s576, 4
          %s578 = int_to_ptr.hbm [resolvable:$true] %s577
          %s579 = sshll.u32 %s571, 4
          %s580 = int_to_ptr.vmem [resolvable:$true] %s579
          %585 = dma.hbm_to_vmem [thread:$0]  %s578, 3072, %s580, %s568, 192, 192, 12
        $region48: #{roberta_forward.1} parent=43 // pred_fallthru
          _
        // Predicated region
        $region49: #{roberta_forward.1} parent=43 // pred_check
          %p586 = pneg %p184
        $region50: #{roberta_forward.1} parent=43 // pred_check_branch
          %588 = sbr.rel (%p586) target = $region52
        $region51: #{roberta_forward.1} parent=43 // pred_region
          %p589 = scmp.lt.s32.totalorder %s33, 1
          %s590 = scalar_select %p589, %s33, 1
          %s591 = smul.addr %s590, 3
          %s592 = scalar_lea.vmem %s6, %s591
        $region52: #{roberta_forward.1} parent=43 // pred_fallthru
          _
        // Predicated region
        $region53: #{roberta_forward.1} parent=43 // pred_check
          %p593 = pneg %p210
        $region54: #{roberta_forward.1} parent=43 // pred_check_branch
          %595 = sbr.rel (%p593) target = $region56
        $region55: #{roberta_forward.1} parent=43 // pred_region
          %p596 = scmp.lt.s32.totalorder %s33, 1
          %s597 = scalar_select %p596, %s33, 1
          %s598 = smul.addr %s597, 16
          %s599 = smul.addr %s598, 4
          %s600 = scalar_lea.vmem %s7, %s599
        $region56: #{roberta_forward.1} parent=43 // pred_fallthru
          _
        // Predicated region
        $region57: #{roberta_forward.1} parent=43 // pred_check
          %p601 = pneg %p236
        $region58: #{roberta_forward.1} parent=43 // pred_check_branch
          %603 = sbr.rel (%p601) target = $region60
        $region59: #{roberta_forward.1} parent=43 // pred_region
          %p604 = scmp.lt.s32.totalorder %s33, 1
          %s605 = scalar_select %p604, %s33, 1
          %s606 = scalar_lea.vmem %s8, %s605
        $region60: #{roberta_forward.1} parent=43 // pred_fallthru
          _
        // Predicated region
        $region61: #{roberta_forward.1} parent=43 // pred_check
          %p607 = pneg %p262
        $region62: #{roberta_forward.1} parent=43 // pred_check_branch
          %609 = sbr.rel (%p607) target = $region64
        $region63: #{roberta_forward.1} parent=43 // pred_region
          %p610 = scmp.lt.s32.totalorder %s33, 1
          %s611 = scalar_select %p610, %s33, 1
          %s612 = scalar_lea.vmem %s9, %s611
        $region64: #{roberta_forward.1} parent=43 // pred_fallthru
          _
        // Predicated region
        $region65: #{roberta_forward.1} parent=43 // pred_check
          %p613 = pneg %p288
        $region66: #{roberta_forward.1} parent=43 // pred_check_branch
          %615 = sbr.rel (%p613) target = $region68
        $region67: #{roberta_forward.1} parent=43 // pred_region
          %p616 = scmp.lt.s32.totalorder %s33, 1
          %s617 = scalar_select %p616, %s33, 1
          %s618 = scalar_lea.vmem %s10, %s617
        $region68: #{roberta_forward.1} parent=43 // pred_fallthru
          _
        // Predicated region
        $region69: #{roberta_forward.1} parent=43 // pred_check
          %p619 = pneg %p314
        $region70: #{roberta_forward.1} parent=43 // pred_check_branch
          %621 = sbr.rel (%p619) target = $region72
        $region71: #{roberta_forward.1} parent=43 // pred_region
          %s622 = sand.u32 %s33, 1
          %s623 = scalar_lea.sflag [#allocation7], %s622
          %s624 = sand.u32 %s304, 1
          %s625 = smul.addr %s624, 256
          %s626 = scalar_lea.vmem [#allocation6], %s625
          %628 = vsyncadd %s623, 0
          %s629 = smul.addr %s33, 64
          %s630 = smul.addr %s629, 4
          %s631 = scalar_lea.hbm %s11, %s630
          %s632 = sshll.u32 %s631, 4
          %s633 = int_to_ptr.hbm [resolvable:$true] %s632
          %s634 = sshll.u32 %s626, 4
          %s635 = int_to_ptr.vmem [resolvable:$true] %s634
          %640 = dma.hbm_to_vmem [thread:$0]  %s633, 4096, %s635, %s623, 256, 256, 16
        $region72: #{roberta_forward.1} parent=43 // pred_fallthru
          _
        // Predicated region
        $region73: #{roberta_forward.1} parent=43 // pred_check
          %p641 = pneg %p340
        $region74: #{roberta_forward.1} parent=43 // pred_check_branch
          %643 = sbr.rel (%p641) target = $region76
        $region75: #{roberta_forward.1} parent=43 // pred_region
          %p644 = scmp.lt.s32.totalorder %s33, 1
          %s645 = scalar_select %p644, %s33, 1
          %s646 = smul.addr %s645, 4
          %s647 = scalar_lea.vmem %s12, %s646
        $region76: #{roberta_forward.1} parent=43 // pred_fallthru
          _
        // Predicated region
        $region77: #{roberta_forward.1} parent=43 // pred_check
          %p648 = pneg %p366
        $region78: #{roberta_forward.1} parent=43 // pred_check_branch
          %650 = sbr.rel (%p648) target = $region80
        $region79: #{roberta_forward.1} parent=43 // pred_region
          %s651 = sand.u32 %s33, 1
          %s652 = scalar_lea.sflag [#allocation7], %s651
          %s653 = sand.u32 %s356, 1
          %s654 = smul.addr %s653, 256
          %s655 = scalar_lea.vmem [#allocation8], %s654
          %657 = vsyncadd %s652, 0
          %s658 = smul.addr %s33, 64
          %s659 = smul.addr %s658, 4
          %s660 = scalar_lea.hbm %s13, %s659
          %s661 = sshll.u32 %s660, 4
          %s662 = int_to_ptr.hbm [resolvable:$true] %s661
          %s663 = sshll.u32 %s655, 4
          %s664 = int_to_ptr.vmem [resolvable:$true] %s663
          %669 = dma.hbm_to_vmem [thread:$0]  %s662, 4096, %s664, %s652, 64, 64, 4
        $region80: #{roberta_forward.1} parent=43 // pred_fallthru
          _
        // Predicated region
        $region81: #{roberta_forward.1} parent=43 // pred_check
          %p670 = pneg %p392
        $region82: #{roberta_forward.1} parent=43 // pred_check_branch
          %672 = sbr.rel (%p670) target = $region84
        $region83: #{roberta_forward.1} parent=43 // pred_region
          %p673 = scmp.lt.s32.totalorder %s33, 1
          %s674 = scalar_select %p673, %s33, 1
          %s675 = scalar_lea.vmem %s14, %s674
        $region84: #{roberta_forward.1} parent=43 // pred_fallthru
          _
        // Predicated region
        $region85: #{roberta_forward.1} parent=43 // pred_check
          %p676 = pneg %p418
        $region86: #{roberta_forward.1} parent=43 // pred_check_branch
          %678 = sbr.rel (%p676) target = $region88
        $region87: #{roberta_forward.1} parent=43 // pred_region
          %p679 = scmp.lt.s32.totalorder %s33, 1
          %s680 = scalar_select %p679, %s33, 1
          %s681 = scalar_lea.vmem %s15, %s680
        $region88: #{roberta_forward.1} parent=43 // pred_fallthru
          _
        // Predicated region
        $region89: #{roberta_forward.1} parent=43 // pred_check
          %p682 = pneg %p444
        $region90: #{roberta_forward.1} parent=43 // pred_check_branch
          %684 = sbr.rel (%p682) target = $region92
        $region91: #{roberta_forward.1} parent=43 // pred_region
          %p685 = scmp.lt.s32.totalorder %s33, 1
          %s686 = scalar_select %p685, %s33, 1
          %s687 = scalar_lea.vmem %s16, %s686
        $region92: #{roberta_forward.1} parent=43 // pred_fallthru
          _
      $region44: #{roberta_forward.1} parent=5 // pred_fallthru
        _
      %p688 = scmp.le.s32.totalorder 1, %s33
      %p689 = scmp.lt.s32.totalorder %s33, 3
      %p690 = pnand %p688, %p689
      %p691 = pneg %p690
      // Predicated region
      $region93: #{roberta_forward.1} parent=5 // pred_check
        _
      $region94: #{roberta_forward.1} parent=5 // pred_check_branch
        %693 = sbr.rel (%p690) target = $region96
      $region95: #{roberta_forward.1} parent=5 // pred_region
        %s694 = ssub.s32 %s33, 1
        %s695 = sand.u32 %s151, 1
        %s696 = scalar_lea.sflag [#allocation4], %s695
        %s697 = sand.u32 %s151, 1
        %s698 = smul.addr %s697, 192
        %s699 = scalar_lea.vmem [#allocation3], %s698
        // Predicated region
        $region97: #{roberta_forward.1} parent=95 // pred_check
          %p700 = pneg %p164
        $region98: #{roberta_forward.1} parent=95 // pred_check_branch
          %702 = sbr.rel (%p700) target = $region100
        $region99: #{roberta_forward.1} parent=95 // pred_region
          %704 = dma.done %s696, 3072
        $region100: #{roberta_forward.1} parent=95 // pred_fallthru
          _
        %s705 = sand.u32 %s38, 1
        %s706 = scalar_lea.sflag [#allocation7], %s705
        %s707 = sand.u32 %s307, 1
        %s708 = smul.addr %s707, 256
        %s709 = scalar_lea.vmem [#allocation6], %s708
        // Predicated region
        $region101: #{roberta_forward.1} parent=95 // pred_check
          %p710 = pneg %p320
        $region102: #{roberta_forward.1} parent=95 // pred_check_branch
          %712 = sbr.rel (%p710) target = $region104
        $region103: #{roberta_forward.1} parent=95 // pred_region
          %714 = dma.done %s706, 4096
        $region104: #{roberta_forward.1} parent=95 // pred_fallthru
          _
        %s715 = sand.u32 %s38, 1
        %s716 = scalar_lea.sflag [#allocation7], %s715
        %s717 = sand.u32 %s359, 1
        %s718 = smul.addr %s717, 256
        %s719 = scalar_lea.vmem [#allocation8], %s718
        // Predicated region
        $region105: #{roberta_forward.1} parent=95 // pred_check
          %p720 = pneg %p372
        $region106: #{roberta_forward.1} parent=95 // pred_check_branch
          %722 = sbr.rel (%p720) target = $region108
        $region107: #{roberta_forward.1} parent=95 // pred_region
          %724 = dma.done %s716, 4096
        $region108: #{roberta_forward.1} parent=95 // pred_fallthru
          _
        // Predicated region
        $region109: #{roberta_forward.1} parent=95 // pred_check
          %p725 = pneg %p471
        $region110: #{roberta_forward.1} parent=95 // pred_check_branch
          %727 = sbr.rel (%p725) target = $region112
        $region111: #{roberta_forward.1} parent=95 // pred_region
          %729 = dma.done [#allocation10], 1024
        $region112: #{roberta_forward.1} parent=95 // pred_fallthru
          _
        %p730 = pneg %p54
        %p731 = pneg %p51
        %p732 = pneg %p75
        %p733 = pneg %p72
        %p734 = pneg %p96
        %p735 = pneg %p93
        %p736 = pneg %p117
        %p737 = pneg %p114
        %p738 = pneg %p138
        %p739 = pneg %p135
        %s740 = sand.u32 %s151, 1
        %s741 = scalar_lea.sflag [#allocation4], %s740
        %s742 = sand.u32 %s151, 1
        %s743 = smul.addr %s742, 192
        %s744 = scalar_lea.vmem [#allocation3], %s743
        %p745 = pneg %p164
        %p746 = pneg %p161
        %p747 = scmp.lt.s32.totalorder %s38, 1
        %s748 = scalar_select %p747, %s38, 1
        %s749 = smul.addr %s748, 3
        %s750 = scalar_lea.vmem %s6, %s749
        %p751 = pneg %p190
        %p752 = pneg %p187
        %p753 = scmp.lt.s32.totalorder %s38, 1
        %s754 = scalar_select %p753, %s38, 1
        %s755 = smul.addr %s754, 16
        %s756 = smul.addr %s755, 4
        %s757 = scalar_lea.vmem %s7, %s756
        %p758 = pneg %p216
        %p759 = pneg %p213
        %p760 = scmp.lt.s32.totalorder %s38, 1
        %s761 = scalar_select %p760, %s38, 1
        %s762 = scalar_lea.vmem %s8, %s761
        %p763 = pneg %p242
        %p764 = pneg %p239
        %p765 = scmp.lt.s32.totalorder %s38, 1
        %s766 = scalar_select %p765, %s38, 1
        %s767 = scalar_lea.vmem %s9, %s766
        %p768 = pneg %p268
        %p769 = pneg %p265
        %p770 = scmp.lt.s32.totalorder %s38, 1
        %s771 = scalar_select %p770, %s38, 1
        %s772 = scalar_lea.vmem %s10, %s771
        %p773 = pneg %p294
        %p774 = pneg %p291
        %s775 = sand.u32 %s38, 1
        %s776 = scalar_lea.sflag [#allocation7], %s775
        %s777 = sand.u32 %s307, 1
        %s778 = smul.addr %s777, 256
        %s779 = scalar_lea.vmem [#allocation6], %s778
        %p780 = pneg %p320
        %p781 = pneg %p317
        %p782 = scmp.lt.s32.totalorder %s38, 1
        %s783 = scalar_select %p782, %s38, 1
        %s784 = smul.addr %s783, 4
        %s785 = scalar_lea.vmem %s12, %s784
        %p786 = pneg %p346
        %p787 = pneg %p343
        %s788 = sand.u32 %s38, 1
        %s789 = scalar_lea.sflag [#allocation7], %s788
        %s790 = sand.u32 %s359, 1
        %s791 = smul.addr %s790, 256
        %s792 = scalar_lea.vmem [#allocation8], %s791
        %p793 = pneg %p372
        %p794 = pneg %p369
        %p795 = scmp.lt.s32.totalorder %s38, 1
        %s796 = scalar_select %p795, %s38, 1
        %s797 = scalar_lea.vmem %s14, %s796
        %p798 = pneg %p398
        %p799 = pneg %p395
        %p800 = scmp.lt.s32.totalorder %s38, 1
        %s801 = scalar_select %p800, %s38, 1
        %s802 = scalar_lea.vmem %s15, %s801
        %p803 = pneg %p424
        %p804 = pneg %p421
        %p805 = scmp.lt.s32.totalorder %s38, 1
        %s806 = scalar_select %p805, %s38, 1
        %s807 = scalar_lea.vmem %s16, %s806
        %p808 = pneg %p450
        %p809 = pneg %p447
        %p810 = pneg %p471
        %p811 = pneg %p468
        %p812 = pneg %p492
        %p813 = pneg %p489
        %p814 = pneg %p513
        %p815 = pneg %p510
        %p816 = scmp.lt.s32.totalorder %s38, 1
        %s817 = scalar_select %p816, %s38, 1
        %s818 = smul.addr %s817, 3
        %s819 = scalar_lea.vmem %s6, %s818
        %p820 = scmp.lt.s32.totalorder %s38, 1
        %s821 = scalar_select %p820, %s38, 1
        %s822 = smul.addr %s821, 16
        %s823 = smul.addr %s822, 4
        %s824 = scalar_lea.vmem %s7, %s823
        %p825 = scmp.lt.s32.totalorder %s38, 1
        %s826 = scalar_select %p825, %s38, 1
        %s827 = scalar_lea.vmem %s8, %s826
        %p828 = scmp.lt.s32.totalorder %s38, 1
        %s829 = scalar_select %p828, %s38, 1
        %s830 = scalar_lea.vmem %s9, %s829
        %p831 = scmp.lt.s32.totalorder %s38, 1
        %s832 = scalar_select %p831, %s38, 1
        %s833 = scalar_lea.vmem %s10, %s832
        %p834 = scmp.lt.s32.totalorder %s38, 1
        %s835 = scalar_select %p834, %s38, 1
        %s836 = smul.addr %s835, 4
        %s837 = scalar_lea.vmem %s12, %s836
        %p838 = scmp.lt.s32.totalorder %s38, 1
        %s839 = scalar_select %p838, %s38, 1
        %s840 = scalar_lea.vmem %s14, %s839
        %p841 = scmp.lt.s32.totalorder %s38, 1
        %s842 = scalar_select %p841, %s38, 1
        %s843 = scalar_lea.vmem %s15, %s842
        %p844 = scmp.lt.s32.totalorder %s38, 1
        %s845 = scalar_select %p844, %s38, 1
        %s846 = scalar_lea.vmem %s16, %s845
        %p848 = scmp.eq.s32.totalorder %s38, 0
        // Predicated region
        $region113: #{roberta_forward.1} parent=95 // pred_check
          %p849 = pneg %p848
        $region114: #{roberta_forward.1} parent=95 // pred_check_branch
          %851 = sbr.rel (%p849) target = $region116
        $region115: #{roberta_forward.1} parent=95 // pred_region
          %v852 = vld [vmem:[%s0] sm:$0xff]
          %v853 = vld [vmem:[%s0 + $0x8] sm:$0xff]
          %v854 = vld [vmem:[%s1] sm:$0xff]
          %v855 = vadd.f32 %v852, %v854
          %v856 = vadd.f32 %v853, %v854
          %v857 = vld [vmem:[%s2] sm:$0x1]
          %v859 = vperm.slane %v857, 0
          %v861 = vadd.f32 %v855, %v859
          %v862 = vadd.f32 %v856, %v859
          %v863 = vld [vmem:[%s3] sm:$0x1]
          %v864 = vld [vmem:[%s4] sm:$0x1]
          %865 = vadd.xlane.f32.xlu0 %v861
          %v866 = vpop.xlane.xlu0 %865
          %867 = vadd.xlane.f32.xlu0 %v862
          %v868 = vpop.xlane.xlu0 %867
          %v869 = vrcp.pop 128.0
          %v870 = vmul.f32 128.0, %v869
          %v871 = vsub.f32 1.0, %v870
          %v872 = vmul.f32 %v869, %v871
          %v873 = vadd.f32 %v869, %v872
          %vm874 = vweird.f32 %v869
          %v875 = vsel %vm874, %v869, %v873
          %v876 = vmul.f32 %v866, %v875
          %v877 = vmul.f32 %v868, %v875
          %v878 = vmul.f32 %v861, %v861
          %v879 = vmul.f32 %v862, %v862
          %880 = vadd.xlane.f32.xlu0 %v878
          %v881 = vpop.xlane.xlu0 %880
          %882 = vadd.xlane.f32.xlu0 %v879
          %v883 = vpop.xlane.xlu0 %882
          %v884 = vmul.f32 %v881, %v875
          %v885 = vmul.f32 %v883, %v875
          %v886 = vmul.f32 %v876, %v876
          %v887 = vmul.f32 %v877, %v877
          %v888 = vsub.f32 %v884, %v886
          %v889 = vsub.f32 %v885, %v887
          %v890 = vsub.f32 %v861, %v876
          %v891 = vsub.f32 %v862, %v877
          %v892 = vadd.f32 %v888, 1e-05
          %v893 = vadd.f32 %v889, 1e-05
          %v894 = vrsqrt.pop %v892
          %v895 = vmul.f32 %v894, %v892
          %v896 = vmul.f32 %v895, %v894
          %v897 = vmul.f32 0.5, %v896
          %v898 = vsub.f32 1.5, %v897
          %v899 = vmul.f32 %v894, %v898
          %vm900 = vweird.f32 %v892
          %vm901 = vweird.f32 %v894
          %vm902 = vmor %vm900, %vm901
          %v903 = vsel %vm902, %v894, %v899
          %v904 = vrsqrt.pop %v893
          %v905 = vmul.f32 %v904, %v893
          %v906 = vmul.f32 %v905, %v904
          %v907 = vmul.f32 0.5, %v906
          %v908 = vsub.f32 1.5, %v907
          %v909 = vmul.f32 %v904, %v908
          %vm910 = vweird.f32 %v893
          %vm911 = vweird.f32 %v904
          %vm912 = vmor %vm910, %vm911
          %v913 = vsel %vm912, %v904, %v909
          %v914 = vmul.f32 %v890, %v903
          %v915 = vmul.f32 %v891, %v913
          %v917 = vperm.slane %v863, 0
          %v919 = vmul.f32 %v914, %v917
          %v920 = vmul.f32 %v915, %v917
          %v922 = vperm.slane %v864, 0
          %v924 = vadd.f32 %v919, %v922
          %v925 = vadd.f32 %v920, %v922
          %926 = vst [vmem:[#allocation2] sm:$0xff] %v924
          %927 = vst [vmem:[#allocation2 + $0x8] sm:$0xff] %v925
        $region116: #{roberta_forward.1} parent=95 // pred_fallthru
          _
        %v928 = vld [vmem:[#allocation2] sm:$0xff]
        %v929 = vld [vmem:[#allocation2 + $0x8] sm:$0xff]
        %v930 = vpack.c.bf16 %v929, %v928
        %v931 = vld [vmem:[%s699] sm:$0xff]
        %v932 = vld [vmem:[%s699 + $0x8] sm:$0xf]
        %v933 = vld [vmem:[%s699 + $0xc] sm:$0xff]
        %v934 = vld [vmem:[%s699 + $0x14] sm:$0xf]
        %v935 = vld [vmem:[%s699 + $0x18] sm:$0xff]
        %v936 = vld [vmem:[%s699 + $0x20] sm:$0xf]
        %v937 = vld [vmem:[%s699 + $0x24] sm:$0xff]
        %v938 = vld [vmem:[%s699 + $0x2c] sm:$0xf]
        %v939 = vld [vmem:[%s699 + $0x30] sm:$0xff]
        %v940 = vld [vmem:[%s699 + $0x38] sm:$0xf]
        %v941 = vld [vmem:[%s699 + $0x3c] sm:$0xff]
        %v942 = vld [vmem:[%s699 + $0x44] sm:$0xf]
        %v943 = vld [vmem:[%s699 + $0x48] sm:$0xff]
        %v944 = vld [vmem:[%s699 + $0x50] sm:$0xf]
        %v945 = vld [vmem:[%s699 + $0x54] sm:$0xff]
        %v946 = vld [vmem:[%s699 + $0x5c] sm:$0xf]
        %v947 = vld [vmem:[%s699 + $0x60] sm:$0xff]
        %v948 = vld [vmem:[%s699 + $0x68] sm:$0xf]
        %v949 = vld [vmem:[%s699 + $0x6c] sm:$0xff]
        %v950 = vld [vmem:[%s699 + $0x74] sm:$0xf]
        %v951 = vld [vmem:[%s699 + $0x78] sm:$0xff]
        %v952 = vld [vmem:[%s699 + $0x80] sm:$0xf]
        %v953 = vld [vmem:[%s699 + $0x84] sm:$0xff]
        %v954 = vld [vmem:[%s699 + $0x8c] sm:$0xf]
        %v955 = vld [vmem:[%s699 + $0x90] sm:$0xff]
        %v956 = vld [vmem:[%s699 + $0x98] sm:$0xf]
        %v957 = vld [vmem:[%s699 + $0x9c] sm:$0xff]
        %v958 = vld [vmem:[%s699 + $0xa4] sm:$0xf]
        %v959 = vld [vmem:[%s699 + $0xa8] sm:$0xff]
        %v960 = vld [vmem:[%s699 + $0xb0] sm:$0xf]
        %v961 = vld [vmem:[%s699 + $0xb4] sm:$0xff]
        %v962 = vld [vmem:[%s699 + $0xbc] sm:$0xf]
        %v963 = vld [vmem:[%s819] sm:$0x7]
        %v965 = vperm.slane %v963, 0
        %v966 = vperm.slane %v963, 1
        %v967 = vperm.slane %v963, 2
        %v1003 = vunpack.c.l.b16 %v931
        %v1004 = vunpack.c.h.b16 %v931
        %v1005 = vunpack.c.l.b16 %v932
        %v1006 = vunpack.c.l.b16 %v933
        %v1007 = vunpack.c.h.b16 %v933
        %v1008 = vunpack.c.l.b16 %v934
        %v1009 = vunpack.c.l.b16 %v935
        %v1010 = vunpack.c.h.b16 %v935
        %v1011 = vunpack.c.l.b16 %v936
        %v1012 = vunpack.c.l.b16 %v937
        %v1013 = vunpack.c.h.b16 %v937
        %v1014 = vunpack.c.l.b16 %v938
        %v1015 = vunpack.c.l.b16 %v939
        %v1016 = vunpack.c.h.b16 %v939
        %v1017 = vunpack.c.l.b16 %v940
        %v1018 = vunpack.c.l.b16 %v941
        %v1019 = vunpack.c.h.b16 %v941
        %v1020 = vunpack.c.l.b16 %v942
        %v1021 = vunpack.c.l.b16 %v943
        %v1022 = vunpack.c.h.b16 %v943
        %v1023 = vunpack.c.l.b16 %v944
        %v1024 = vunpack.c.l.b16 %v945
        %v1025 = vunpack.c.h.b16 %v945
        %v1026 = vunpack.c.l.b16 %v946
        %v1027 = vunpack.c.l.b16 %v947
        %v1028 = vunpack.c.h.b16 %v947
        %v1029 = vunpack.c.l.b16 %v948
        %v1030 = vunpack.c.l.b16 %v949
        %v1031 = vunpack.c.h.b16 %v949
        %v1032 = vunpack.c.l.b16 %v950
        %v1033 = vunpack.c.l.b16 %v951
        %v1034 = vunpack.c.h.b16 %v951
        %v1035 = vunpack.c.l.b16 %v952
        %v1036 = vunpack.c.l.b16 %v953
        %v1037 = vunpack.c.h.b16 %v953
        %v1038 = vunpack.c.l.b16 %v954
        %v1039 = vunpack.c.l.b16 %v955
        %v1040 = vunpack.c.h.b16 %v955
        %v1041 = vunpack.c.l.b16 %v956
        %v1042 = vunpack.c.l.b16 %v957
        %v1043 = vunpack.c.h.b16 %v957
        %v1044 = vunpack.c.l.b16 %v958
        %v1045 = vunpack.c.l.b16 %v959
        %v1046 = vunpack.c.h.b16 %v959
        %v1047 = vunpack.c.l.b16 %v960
        %v1048 = vunpack.c.l.b16 %v961
        %v1049 = vunpack.c.h.b16 %v961
        %v1050 = vunpack.c.l.b16 %v962
        %v1051 = vpack.c.b16 %v1006, %v1003
        %v1052 = vpack.c.b16 %v1007, %v1004
        %v1053 = vpack.c.b16 %v1008, %v1005
        %v1054 = vpack.c.b16 %v1012, %v1009
        %v1055 = vpack.c.b16 %v1013, %v1010
        %v1056 = vpack.c.b16 %v1014, %v1011
        %v1057 = vpack.c.b16 %v1018, %v1015
        %v1058 = vpack.c.b16 %v1019, %v1016
        %v1059 = vpack.c.b16 %v1020, %v1017
        %v1060 = vpack.c.b16 %v1024, %v1021
        %v1061 = vpack.c.b16 %v1025, %v1022
        %v1062 = vpack.c.b16 %v1026, %v1023
        %v1063 = vpack.c.b16 %v1030, %v1027
        %v1064 = vpack.c.b16 %v1031, %v1028
        %v1065 = vpack.c.b16 %v1032, %v1029
        %v1066 = vpack.c.b16 %v1036, %v1033
        %v1067 = vpack.c.b16 %v1037, %v1034
        %v1068 = vpack.c.b16 %v1038, %v1035
        %v1069 = vpack.c.b16 %v1042, %v1039
        %v1070 = vpack.c.b16 %v1043, %v1040
        %v1071 = vpack.c.b16 %v1044, %v1041
        %v1072 = vpack.c.b16 %v1048, %v1045
        %v1073 = vpack.c.b16 %v1049, %v1046
        %v1074 = vpack.c.b16 %v1050, %v1047
        %1099 = vmatpush.bf16.msra.mxu0 %v1072
        %1100 = vmatpush.bf16.msra.mxu0 %v1069
        %1101 = vmatpush.bf16.msra.mxu0 %v1066
        %1102 = vmatpush.bf16.msra.mxu0 %v1063
        %1103 = vmatpush.bf16.msra.mxu0 %v1060
        %1104 = vmatpush.bf16.msra.mxu0 %v1057
        %1105 = vmatpush.bf16.msra.mxu0 %v1054
        %1106 = vmatpush.bf16.msra.mxu0 %v1051
        %1107 = vmatmul.bf16.gmra.mxu0 %v930
        %v1108 = vpop.f32.mrf.mxu0
        %v1109 = vadd.f32 %v965, %v1108
        %v1110 = vpop.f32.mrf.mxu0
        %v1111 = vadd.f32 %v965, %v1110
        %1112 = vdwg.mxu0
        %1113 = vmatpush.bf16.msra.mxu0 %v1073
        %1114 = vmatpush.bf16.msra.mxu0 %v1070
        %1115 = vmatpush.bf16.msra.mxu0 %v1067
        %1116 = vmatpush.bf16.msra.mxu0 %v1064
        %1117 = vmatpush.bf16.msra.mxu0 %v1061
        %1118 = vmatpush.bf16.msra.mxu0 %v1058
        %1119 = vmatpush.bf16.msra.mxu0 %v1055
        %1120 = vmatpush.bf16.msra.mxu0 %v1052
        %1121 = vmatmul.bf16.gmra.mxu0 %v930
        %v1122 = vpop.f32.mrf.mxu0
        %v1123 = vadd.f32 %v966, %v1122
        %v1124 = vpop.f32.mrf.mxu0
        %v1125 = vadd.f32 %v966, %v1124
        %1126 = vdwg.mxu0
        %1127 = vmatpush.bf16.msra.mxu0 %v1074
        %1128 = vmatpush.bf16.msra.mxu0 %v1071
        %1129 = vmatpush.bf16.msra.mxu0 %v1068
        %1130 = vmatpush.bf16.msra.mxu0 %v1065
        %1131 = vmatpush.bf16.msra.mxu0 %v1062
        %1132 = vmatpush.bf16.msra.mxu0 %v1059
        %1133 = vmatpush.bf16.msra.mxu0 %v1056
        %1134 = vmatpush.bf16.msra.mxu0 %v1053
        %1135 = vmatmul.bf16.gmra.mxu0 %v930
        %v1136 = vpop.f32.mrf.mxu0
        %v1137 = vadd.f32 %v967, %v1136
        %v1138 = vpop.f32.mrf.mxu0
        %v1139 = vadd.f32 %v967, %v1138
        %1140 = vdwg.mxu0
        %v1141 = vpack.c.bf16 %v1109, %v1109
        %v1142 = vpack.c.bf16 %v1111, %v1111
        %v1143 = vpack.c.bf16 %v1123, %v1123
        %v1144 = vpack.c.bf16 %v1125, %v1125
        %v1145 = vpack.c.bf16 %v1137, %v1137
        %v1146 = vpack.c.bf16 %v1139, %v1139
        %vm1147 = vcmask 261120
        %v1149 = vsel %vm1147, %v1141, 0
        %v1152 = vsel %vm1147, %v1143, 0
        %1154 = vmatpush.bf16.xpose.msra.mxu0 0
        %1155 = vmatpush.bf16.xpose.msra.mxu0 0
        %1156 = vmatpush.bf16.xpose.msra.mxu0 0
        %1157 = vmatpush.bf16.xpose.msra.mxu0 0
        %1158 = vmatpush.bf16.xpose.msra.mxu0 0
        %1159 = vmatpush.bf16.xpose.msra.mxu0 0
        %1160 = vmatpush.bf16.xpose.msra.mxu0 0
        %1161 = vmatpush.bf16.xpose.msra.mxu0 %v1152
        %1162 = vmatmul.bf16.gmra.mxu0 %v1149
        %v1163 = vpop.f32.mrf.mxu0
        %v1164 = vadd.f32 0.0, %v1163
        %v1165 = vpop.f32.mrf.mxu0
        %1166 = vdwg.mxu0
        %v1168 = vsel %vm1147, %v1142, 0
        %v1171 = vsel %vm1147, %v1144, 0
        %1173 = vmatpush.bf16.xpose.msra.mxu0 0
        %1174 = vmatpush.bf16.xpose.msra.mxu0 0
        %1175 = vmatpush.bf16.xpose.msra.mxu0 0
        %1176 = vmatpush.bf16.xpose.msra.mxu0 0
        %1177 = vmatpush.bf16.xpose.msra.mxu0 0
        %1178 = vmatpush.bf16.xpose.msra.mxu0 0
        %1179 = vmatpush.bf16.xpose.msra.mxu0 0
        %1180 = vmatpush.bf16.xpose.msra.mxu0 %v1171
        %1181 = vmatmul.bf16.gmra.mxu0 %v1168
        %v1182 = vpop.f32.mrf.mxu0
        %v1183 = vadd.f32 0.0, %v1182
        %v1184 = vpop.f32.mrf.mxu0
        %1185 = vdwg.mxu0
        %vm1186 = vcmask 64512
        %v1187 = vsel %vm1186, %v1164, -inf
        %1188 = vmax.xlane.f32.xlu0 %v1187
        %v1189 = vpop.xlane.xlu0 %1188
        %v1190 = vsel %vm1186, %v1183, -inf
        %1191 = vmax.xlane.f32.xlu0 %v1190
        %v1192 = vpop.xlane.xlu0 %1191
        %v1193 = vsub.f32 %v1164, %v1189
        %v1194 = vsub.f32 %v1183, %v1192
        %v1195 = vmul.f32 %v1193, 1.442695
        %v1196 = vpow.pop %v1195
        %v1197 = vmul.f32 %v1194, 1.442695
        %v1198 = vpow.pop %v1197
        %v1199 = vsel %vm1186, %v1196, 0.0
        %1200 = vadd.xlane.f32.xlu0 %v1199
        %v1201 = vpop.xlane.xlu0 %1200
        %v1202 = vsel %vm1186, %v1198, 0.0
        %1203 = vadd.xlane.f32.xlu0 %v1202
        %v1204 = vpop.xlane.xlu0 %1203
        %v1205 = vrcp.pop %v1201
        %v1206 = vrcp.pop %v1204
        %v1207 = vmul.f32 %v1196, %v1205
        %v1208 = vmul.f32 %v1198, %v1206
        %v1209 = vpack.c.bf16 %v1207, %v1207
        %v1210 = vpack.c.bf16 %v1208, %v1208
        %v1212 = vsel %vm1186, %v1209, 0
        %vm1214 = vcmask 1043456
        %v1216 = vsel %vm1214, %v1145, 0
        %1218 = vmatpush.bf16.msra.mxu0 0
        %1219 = vmatpush.bf16.msra.mxu0 0
        %1220 = vmatpush.bf16.msra.mxu0 0
        %1221 = vmatpush.bf16.msra.mxu0 0
        %1222 = vmatpush.bf16.msra.mxu0 0
        %1223 = vmatpush.bf16.msra.mxu0 0
        %1224 = vmatpush.bf16.msra.mxu0 0
        %1225 = vmatpush.bf16.msra.mxu0 %v1216
        %1226 = vmatmul.bf16.gmra.mxu0 %v1212
        %v1227 = vpop.f32.mrf.mxu0
        %v1228 = vadd.f32 0.0, %v1227
        %v1229 = vpop.f32.mrf.mxu0
        %1230 = vdwg.mxu0
        %v1232 = vsel %vm1186, %v1210, 0
        %v1235 = vsel %vm1214, %v1146, 0
        %1237 = vmatpush.bf16.msra.mxu0 0
        %1238 = vmatpush.bf16.msra.mxu0 0
        %1239 = vmatpush.bf16.msra.mxu0 0
        %1240 = vmatpush.bf16.msra.mxu0 0
        %1241 = vmatpush.bf16.msra.mxu0 0
        %1242 = vmatpush.bf16.msra.mxu0 0
        %1243 = vmatpush.bf16.msra.mxu0 0
        %1244 = vmatpush.bf16.msra.mxu0 %v1235
        %1245 = vmatmul.bf16.gmra.mxu0 %v1232
        %v1246 = vpop.f32.mrf.mxu0
        %v1247 = vadd.f32 0.0, %v1246
        %v1248 = vpop.f32.mrf.mxu0
        %1249 = vdwg.mxu0
        %v1250 = vpack.c.bf16 %v1247, %v1228
        %v1251 = vld [vmem:[%s824] sm:$0xf]
        %v1252 = vld [vmem:[%s824 + $0x4] sm:$0xf]
        %v1253 = vld [vmem:[%s824 + $0x8] sm:$0xf]
        %v1254 = vld [vmem:[%s824 + $0xc] sm:$0xf]
        %v1256 = vunpack.c.l.b16 %v1141
        %v1257 = vpack.c.b16 %v1256, %v1256
        %1258 = vrot.lane.b32.xlu0 %v1257, 96
        %v1259 = vpop.permute.xlu0 %1258
        %v1261 = vunpack.c.l.b16 %v1143
        %v1262 = vpack.c.b16 %v1261, %v1261
        %1263 = vrot.lane.b32.xlu0 %v1262, 96
        %v1264 = vpop.permute.xlu0 %1263
        %v1266 = vsel %vm1147, %v1259, 0
        %v1269 = vsel %vm1147, %v1264, 0
        %1271 = vmatpush.bf16.xpose.msra.mxu0 0
        %1272 = vmatpush.bf16.xpose.msra.mxu0 0
        %1273 = vmatpush.bf16.xpose.msra.mxu0 0
        %1274 = vmatpush.bf16.xpose.msra.mxu0 0
        %1275 = vmatpush.bf16.xpose.msra.mxu0 0
        %1276 = vmatpush.bf16.xpose.msra.mxu0 0
        %1277 = vmatpush.bf16.xpose.msra.mxu0 0
        %1278 = vmatpush.bf16.xpose.msra.mxu0 %v1269
        %1279 = vmatmul.bf16.gmra.mxu0 %v1266
        %v1280 = vpop.f32.mrf.mxu0
        %v1281 = vadd.f32 0.0, %v1280
        %v1282 = vpop.f32.mrf.mxu0
        %1283 = vdwg.mxu0
        %v1285 = vunpack.c.l.b16 %v1142
        %v1286 = vpack.c.b16 %v1285, %v1285
        %1287 = vrot.lane.b32.xlu0 %v1286, 96
        %v1288 = vpop.permute.xlu0 %1287
        %v1290 = vunpack.c.l.b16 %v1144
        %v1291 = vpack.c.b16 %v1290, %v1290
        %1292 = vrot.lane.b32.xlu0 %v1291, 96
        %v1293 = vpop.permute.xlu0 %1292
        %v1295 = vsel %vm1147, %v1288, 0
        %v1298 = vsel %vm1147, %v1293, 0
        %1300 = vmatpush.bf16.xpose.msra.mxu0 0
        %1301 = vmatpush.bf16.xpose.msra.mxu0 0
        %1302 = vmatpush.bf16.xpose.msra.mxu0 0
        %1303 = vmatpush.bf16.xpose.msra.mxu0 0
        %1304 = vmatpush.bf16.xpose.msra.mxu0 0
        %1305 = vmatpush.bf16.xpose.msra.mxu0 0
        %1306 = vmatpush.bf16.xpose.msra.mxu0 0
        %1307 = vmatpush.bf16.xpose.msra.mxu0 %v1298
        %1308 = vmatmul.bf16.gmra.mxu0 %v1295
        %v1309 = vpop.f32.mrf.mxu0
        %v1310 = vadd.f32 0.0, %v1309
        %v1311 = vpop.f32.mrf.mxu0
        %1312 = vdwg.mxu0
        %v1313 = vsel %vm1186, %v1281, -inf
        %1314 = vmax.xlane.f32.xlu0 %v1313
        %v1315 = vpop.xlane.xlu0 %1314
        %v1316 = vsel %vm1186, %v1310, -inf
        %1317 = vmax.xlane.f32.xlu0 %v1316
        %v1318 = vpop.xlane.xlu0 %1317
        %v1319 = vsub.f32 %v1281, %v1315
        %v1320 = vsub.f32 %v1310, %v1318
        %v1321 = vmul.f32 %v1319, 1.442695
        %v1322 = vpow.pop %v1321
        %v1323 = vmul.f32 %v1320, 1.442695
        %v1324 = vpow.pop %v1323
        %v1325 = vsel %vm1186, %v1322, 0.0
        %1326 = vadd.xlane.f32.xlu0 %v1325
        %v1327 = vpop.xlane.xlu0 %1326
        %v1328 = vsel %vm1186, %v1324, 0.0
        %1329 = vadd.xlane.f32.xlu0 %v1328
        %v1330 = vpop.xlane.xlu0 %1329
        %v1331 = vrcp.pop %v1327
        %v1332 = vrcp.pop %v1330
        %v1333 = vmul.f32 %v1322, %v1331
        %v1334 = vmul.f32 %v1324, %v1332
        %v1335 = vpack.c.bf16 %v1333, %v1333
        %v1336 = vpack.c.bf16 %v1334, %v1334
        %v1338 = vunpack.c.l.b16 %v1145
        %v1339 = vpack.c.b16 %v1338, %v1338
        %1340 = vrot.lane.b32.xlu0 %v1339, 96
        %v1341 = vpop.permute.xlu0 %1340
        %v1343 = vsel %vm1186, %v1335, 0
        %v1346 = vsel %vm1214, %v1341, 0
        %1348 = vmatpush.bf16.msra.mxu0 0
        %1349 = vmatpush.bf16.msra.mxu0 0
        %1350 = vmatpush.bf16.msra.mxu0 0
        %1351 = vmatpush.bf16.msra.mxu0 0
        %1352 = vmatpush.bf16.msra.mxu0 0
        %1353 = vmatpush.bf16.msra.mxu0 0
        %1354 = vmatpush.bf16.msra.mxu0 0
        %1355 = vmatpush.bf16.msra.mxu0 %v1346
        %1356 = vmatmul.bf16.gmra.mxu0 %v1343
        %v1357 = vpop.f32.mrf.mxu0
        %v1358 = vadd.f32 0.0, %v1357
        %v1359 = vpop.f32.mrf.mxu0
        %1360 = vdwg.mxu0
        %v1362 = vunpack.c.l.b16 %v1146
        %v1363 = vpack.c.b16 %v1362, %v1362
        %1364 = vrot.lane.b32.xlu0 %v1363, 96
        %v1365 = vpop.permute.xlu0 %1364
        %v1367 = vsel %vm1186, %v1336, 0
        %v1370 = vsel %vm1214, %v1365, 0
        %1372 = vmatpush.bf16.msra.mxu0 0
        %1373 = vmatpush.bf16.msra.mxu0 0
        %1374 = vmatpush.bf16.msra.mxu0 0
        %1375 = vmatpush.bf16.msra.mxu0 0
        %1376 = vmatpush.bf16.msra.mxu0 0
        %1377 = vmatpush.bf16.msra.mxu0 0
        %1378 = vmatpush.bf16.msra.mxu0 0
        %1379 = vmatpush.bf16.msra.mxu0 %v1370
        %1380 = vmatmul.bf16.gmra.mxu0 %v1367
        %v1381 = vpop.f32.mrf.mxu0
        %v1382 = vadd.f32 0.0, %v1381
        %v1383 = vpop.f32.mrf.mxu0
        %1384 = vdwg.mxu0
        %v1385 = vpack.c.bf16 %v1382, %v1358
        %v1386 = vld [vmem:[%s824 + $0x10] sm:$0xf]
        %v1387 = vld [vmem:[%s824 + $0x14] sm:$0xf]
        %v1388 = vld [vmem:[%s824 + $0x18] sm:$0xf]
        %v1389 = vld [vmem:[%s824 + $0x1c] sm:$0xf]
        %v1394 = vunpack.c.l.b16 %v1386
        %v1395 = vunpack.c.l.b16 %v1387
        %v1396 = vunpack.c.l.b16 %v1388
        %v1397 = vunpack.c.l.b16 %v1389
        %v1398 = vpack.c.b16 %v1395, %v1394
        %v1399 = vpack.c.b16 %v1397, %v1396
        %v1403 = vsel %vm1147, %v1385, 0
        %1405 = vmatpush.bf16.msra.mxu0 0
        %1406 = vmatpush.bf16.msra.mxu0 0
        %1407 = vmatpush.bf16.msra.mxu0 0
        %1408 = vmatpush.bf16.msra.mxu0 0
        %1409 = vmatpush.bf16.msra.mxu0 0
        %1410 = vmatpush.bf16.msra.mxu0 0
        %1411 = vmatpush.bf16.msra.mxu0 %v1399
        %1412 = vmatpush.bf16.msra.mxu0 %v1398
        %1413 = vmatmul.bf16.gmra.mxu0 %v1403
        %v1414 = vpop.f32.mrf.mxu0
        %v1415 = vadd.f32 0.0, %v1414
        %v1416 = vpop.f32.mrf.mxu0
        %v1417 = vadd.f32 0.0, %v1416
        %1418 = vdwg.mxu0
        %v1423 = vunpack.c.l.b16 %v1251
        %v1424 = vunpack.c.l.b16 %v1252
        %v1425 = vunpack.c.l.b16 %v1253
        %v1426 = vunpack.c.l.b16 %v1254
        %v1427 = vpack.c.b16 %v1424, %v1423
        %v1428 = vpack.c.b16 %v1426, %v1425
        %v1432 = vsel %vm1147, %v1250, 0
        %1434 = vmatpush.bf16.msra.mxu0 0
        %1435 = vmatpush.bf16.msra.mxu0 0
        %1436 = vmatpush.bf16.msra.mxu0 0
        %1437 = vmatpush.bf16.msra.mxu0 0
        %1438 = vmatpush.bf16.msra.mxu0 0
        %1439 = vmatpush.bf16.msra.mxu0 0
        %1440 = vmatpush.bf16.msra.mxu0 %v1428
        %1441 = vmatpush.bf16.msra.mxu0 %v1427
        %1442 = vmatmul.bf16.gmra.mxu0 %v1432
        %v1443 = vpop.f32.mrf.mxu0
        %v1444 = vadd.f32 %v1415, %v1443
        %v1445 = vpop.f32.mrf.mxu0
        %v1446 = vadd.f32 %v1417, %v1445
        %1447 = vdwg.mxu0
        %1448 = vrot.lane.b32.xlu0 %v1257, 64
        %v1449 = vpop.permute.xlu0 %1448
        %1450 = vrot.lane.b32.xlu0 %v1262, 64
        %v1451 = vpop.permute.xlu0 %1450
        %v1453 = vsel %vm1147, %v1449, 0
        %v1456 = vsel %vm1147, %v1451, 0
        %1458 = vmatpush.bf16.xpose.msra.mxu0 0
        %1459 = vmatpush.bf16.xpose.msra.mxu0 0
        %1460 = vmatpush.bf16.xpose.msra.mxu0 0
        %1461 = vmatpush.bf16.xpose.msra.mxu0 0
        %1462 = vmatpush.bf16.xpose.msra.mxu0 0
        %1463 = vmatpush.bf16.xpose.msra.mxu0 0
        %1464 = vmatpush.bf16.xpose.msra.mxu0 0
        %1465 = vmatpush.bf16.xpose.msra.mxu0 %v1456
        %1466 = vmatmul.bf16.gmra.mxu0 %v1453
        %v1467 = vpop.f32.mrf.mxu0
        %v1468 = vadd.f32 0.0, %v1467
        %v1469 = vpop.f32.mrf.mxu0
        %1470 = vdwg.mxu0
        %1471 = vrot.lane.b32.xlu0 %v1286, 64
        %v1472 = vpop.permute.xlu0 %1471
        %1473 = vrot.lane.b32.xlu0 %v1291, 64
        %v1474 = vpop.permute.xlu0 %1473
        %v1476 = vsel %vm1147, %v1472, 0
        %v1479 = vsel %vm1147, %v1474, 0
        %1481 = vmatpush.bf16.xpose.msra.mxu0 0
        %1482 = vmatpush.bf16.xpose.msra.mxu0 0
        %1483 = vmatpush.bf16.xpose.msra.mxu0 0
        %1484 = vmatpush.bf16.xpose.msra.mxu0 0
        %1485 = vmatpush.bf16.xpose.msra.mxu0 0
        %1486 = vmatpush.bf16.xpose.msra.mxu0 0
        %1487 = vmatpush.bf16.xpose.msra.mxu0 0
        %1488 = vmatpush.bf16.xpose.msra.mxu0 %v1479
        %1489 = vmatmul.bf16.gmra.mxu0 %v1476
        %v1490 = vpop.f32.mrf.mxu0
        %v1491 = vadd.f32 0.0, %v1490
        %v1492 = vpop.f32.mrf.mxu0
        %1493 = vdwg.mxu0
        %v1494 = vsel %vm1186, %v1468, -inf
        %1495 = vmax.xlane.f32.xlu0 %v1494
        %v1496 = vpop.xlane.xlu0 %1495
        %v1497 = vsel %vm1186, %v1491, -inf
        %1498 = vmax.xlane.f32.xlu0 %v1497
        %v1499 = vpop.xlane.xlu0 %1498
        %v1500 = vsub.f32 %v1468, %v1496
        %v1501 = vsub.f32 %v1491, %v1499
        %v1502 = vmul.f32 %v1500, 1.442695
        %v1503 = vpow.pop %v1502
        %v1504 = vmul.f32 %v1501, 1.442695
        %v1505 = vpow.pop %v1504
        %v1506 = vsel %vm1186, %v1503, 0.0
        %1507 = vadd.xlane.f32.xlu0 %v1506
        %v1508 = vpop.xlane.xlu0 %1507
        %v1509 = vsel %vm1186, %v1505, 0.0
        %1510 = vadd.xlane.f32.xlu0 %v1509
        %v1511 = vpop.xlane.xlu0 %1510
        %v1512 = vrcp.pop %v1508
        %v1513 = vrcp.pop %v1511
        %v1514 = vmul.f32 %v1503, %v1512
        %v1515 = vmul.f32 %v1505, %v1513
        %v1516 = vpack.c.bf16 %v1514, %v1514
        %v1517 = vpack.c.bf16 %v1515, %v1515
        %1518 = vrot.lane.b32.xlu0 %v1339, 64
        %v1519 = vpop.permute.xlu0 %1518
        %v1521 = vsel %vm1186, %v1516, 0
        %v1524 = vsel %vm1214, %v1519, 0
        %1526 = vmatpush.bf16.msra.mxu0 0
        %1527 = vmatpush.bf16.msra.mxu0 0
        %1528 = vmatpush.bf16.msra.mxu0 0
        %1529 = vmatpush.bf16.msra.mxu0 0
        %1530 = vmatpush.bf16.msra.mxu0 0
        %1531 = vmatpush.bf16.msra.mxu0 0
        %1532 = vmatpush.bf16.msra.mxu0 0
        %1533 = vmatpush.bf16.msra.mxu0 %v1524
        %1534 = vmatmul.bf16.gmra.mxu0 %v1521
        %v1535 = vpop.f32.mrf.mxu0
        %v1536 = vadd.f32 0.0, %v1535
        %v1537 = vpop.f32.mrf.mxu0
        %1538 = vdwg.mxu0
        %1539 = vrot.lane.b32.xlu0 %v1363, 64
        %v1540 = vpop.permute.xlu0 %1539
        %v1542 = vsel %vm1186, %v1517, 0
        %v1545 = vsel %vm1214, %v1540, 0
        %1547 = vmatpush.bf16.msra.mxu0 0
        %1548 = vmatpush.bf16.msra.mxu0 0
        %1549 = vmatpush.bf16.msra.mxu0 0
        %1550 = vmatpush.bf16.msra.mxu0 0
        %1551 = vmatpush.bf16.msra.mxu0 0
        %1552 = vmatpush.bf16.msra.mxu0 0
        %1553 = vmatpush.bf16.msra.mxu0 0
        %1554 = vmatpush.bf16.msra.mxu0 %v1545
        %1555 = vmatmul.bf16.gmra.mxu0 %v1542
        %v1556 = vpop.f32.mrf.mxu0
        %v1557 = vadd.f32 0.0, %v1556
        %v1558 = vpop.f32.mrf.mxu0
        %1559 = vdwg.mxu0
        %v1560 = vpack.c.bf16 %v1557, %v1536
        %v1561 = vld [vmem:[%s824 + $0x20] sm:$0xf]
        %v1562 = vld [vmem:[%s824 + $0x24] sm:$0xf]
        %v1563 = vld [vmem:[%s824 + $0x28] sm:$0xf]
        %v1564 = vld [vmem:[%s824 + $0x2c] sm:$0xf]
        %v1569 = vunpack.c.l.b16 %v1561
        %v1570 = vunpack.c.l.b16 %v1562
        %v1571 = vunpack.c.l.b16 %v1563
        %v1572 = vunpack.c.l.b16 %v1564
        %v1573 = vpack.c.b16 %v1570, %v1569
        %v1574 = vpack.c.b16 %v1572, %v1571
        %v1578 = vsel %vm1147, %v1560, 0
        %1580 = vmatpush.bf16.msra.mxu0 0
        %1581 = vmatpush.bf16.msra.mxu0 0
        %1582 = vmatpush.bf16.msra.mxu0 0
        %1583 = vmatpush.bf16.msra.mxu0 0
        %1584 = vmatpush.bf16.msra.mxu0 0
        %1585 = vmatpush.bf16.msra.mxu0 0
        %1586 = vmatpush.bf16.msra.mxu0 %v1574
        %1587 = vmatpush.bf16.msra.mxu0 %v1573
        %1588 = vmatmul.bf16.gmra.mxu0 %v1578
        %v1589 = vpop.f32.mrf.mxu0
        %v1590 = vadd.f32 0.0, %v1589
        %v1591 = vpop.f32.mrf.mxu0
        %v1592 = vadd.f32 0.0, %v1591
        %1593 = vdwg.mxu0
        %v1594 = vadd.f32 %v1444, %v1590
        %v1595 = vadd.f32 %v1446, %v1592
        %1596 = vrot.lane.b32.xlu0 %v1257, 32
        %v1597 = vpop.permute.xlu0 %1596
        %1598 = vrot.lane.b32.xlu0 %v1262, 32
        %v1599 = vpop.permute.xlu0 %1598
        %v1601 = vsel %vm1147, %v1597, 0
        %v1604 = vsel %vm1147, %v1599, 0
        %1606 = vmatpush.bf16.xpose.msra.mxu0 0
        %1607 = vmatpush.bf16.xpose.msra.mxu0 0
        %1608 = vmatpush.bf16.xpose.msra.mxu0 0
        %1609 = vmatpush.bf16.xpose.msra.mxu0 0
        %1610 = vmatpush.bf16.xpose.msra.mxu0 0
        %1611 = vmatpush.bf16.xpose.msra.mxu0 0
        %1612 = vmatpush.bf16.xpose.msra.mxu0 0
        %1613 = vmatpush.bf16.xpose.msra.mxu0 %v1604
        %1614 = vmatmul.bf16.gmra.mxu0 %v1601
        %v1615 = vpop.f32.mrf.mxu0
        %v1616 = vadd.f32 0.0, %v1615
        %v1617 = vpop.f32.mrf.mxu0
        %1618 = vdwg.mxu0
        %1619 = vrot.lane.b32.xlu0 %v1286, 32
        %v1620 = vpop.permute.xlu0 %1619
        %1621 = vrot.lane.b32.xlu0 %v1291, 32
        %v1622 = vpop.permute.xlu0 %1621
        %v1624 = vsel %vm1147, %v1620, 0
        %v1627 = vsel %vm1147, %v1622, 0
        %1629 = vmatpush.bf16.xpose.msra.mxu0 0
        %1630 = vmatpush.bf16.xpose.msra.mxu0 0
        %1631 = vmatpush.bf16.xpose.msra.mxu0 0
        %1632 = vmatpush.bf16.xpose.msra.mxu0 0
        %1633 = vmatpush.bf16.xpose.msra.mxu0 0
        %1634 = vmatpush.bf16.xpose.msra.mxu0 0
        %1635 = vmatpush.bf16.xpose.msra.mxu0 0
        %1636 = vmatpush.bf16.xpose.msra.mxu0 %v1627
        %1637 = vmatmul.bf16.gmra.mxu0 %v1624
        %v1638 = vpop.f32.mrf.mxu0
        %v1639 = vadd.f32 0.0, %v1638
        %v1640 = vpop.f32.mrf.mxu0
        %1641 = vdwg.mxu0
        %v1642 = vsel %vm1186, %v1616, -inf
        %1643 = vmax.xlane.f32.xlu0 %v1642
        %v1644 = vpop.xlane.xlu0 %1643
        %v1645 = vsel %vm1186, %v1639, -inf
        %1646 = vmax.xlane.f32.xlu0 %v1645
        %v1647 = vpop.xlane.xlu0 %1646
        %v1648 = vsub.f32 %v1616, %v1644
        %v1649 = vsub.f32 %v1639, %v1647
        %v1650 = vmul.f32 %v1648, 1.442695
        %v1651 = vpow.pop %v1650
        %v1652 = vmul.f32 %v1649, 1.442695
        %v1653 = vpow.pop %v1652
        %v1654 = vsel %vm1186, %v1651, 0.0
        %1655 = vadd.xlane.f32.xlu0 %v1654
        %v1656 = vpop.xlane.xlu0 %1655
        %v1657 = vsel %vm1186, %v1653, 0.0
        %1658 = vadd.xlane.f32.xlu0 %v1657
        %v1659 = vpop.xlane.xlu0 %1658
        %v1660 = vrcp.pop %v1656
        %v1661 = vrcp.pop %v1659
        %v1662 = vmul.f32 %v1651, %v1660
        %v1663 = vmul.f32 %v1653, %v1661
        %v1664 = vpack.c.bf16 %v1662, %v1662
        %v1665 = vpack.c.bf16 %v1663, %v1663
        %1666 = vrot.lane.b32.xlu0 %v1339, 32
        %v1667 = vpop.permute.xlu0 %1666
        %v1669 = vsel %vm1186, %v1664, 0
        %v1672 = vsel %vm1214, %v1667, 0
        %1674 = vmatpush.bf16.msra.mxu0 0
        %1675 = vmatpush.bf16.msra.mxu0 0
        %1676 = vmatpush.bf16.msra.mxu0 0
        %1677 = vmatpush.bf16.msra.mxu0 0
        %1678 = vmatpush.bf16.msra.mxu0 0
        %1679 = vmatpush.bf16.msra.mxu0 0
        %1680 = vmatpush.bf16.msra.mxu0 0
        %1681 = vmatpush.bf16.msra.mxu0 %v1672
        %1682 = vmatmul.bf16.gmra.mxu0 %v1669
        %v1683 = vpop.f32.mrf.mxu0
        %v1684 = vadd.f32 0.0, %v1683
        %v1685 = vpop.f32.mrf.mxu0
        %1686 = vdwg.mxu0
        %1687 = vrot.lane.b32.xlu0 %v1363, 32
        %v1688 = vpop.permute.xlu0 %1687
        %v1690 = vsel %vm1186, %v1665, 0
        %v1693 = vsel %vm1214, %v1688, 0
        %1695 = vmatpush.bf16.msra.mxu0 0
        %1696 = vmatpush.bf16.msra.mxu0 0
        %1697 = vmatpush.bf16.msra.mxu0 0
        %1698 = vmatpush.bf16.msra.mxu0 0
        %1699 = vmatpush.bf16.msra.mxu0 0
        %1700 = vmatpush.bf16.msra.mxu0 0
        %1701 = vmatpush.bf16.msra.mxu0 0
        %1702 = vmatpush.bf16.msra.mxu0 %v1693
        %1703 = vmatmul.bf16.gmra.mxu0 %v1690
        %v1704 = vpop.f32.mrf.mxu0
        %v1705 = vadd.f32 0.0, %v1704
        %v1706 = vpop.f32.mrf.mxu0
        %1707 = vdwg.mxu0
        %v1708 = vpack.c.bf16 %v1705, %v1684
        %v1709 = vld [vmem:[%s824 + $0x30] sm:$0xf]
        %v1710 = vld [vmem:[%s824 + $0x34] sm:$0xf]
        %v1711 = vld [vmem:[%s824 + $0x38] sm:$0xf]
        %v1712 = vld [vmem:[%s824 + $0x3c] sm:$0xf]
        %v1717 = vunpack.c.l.b16 %v1709
        %v1718 = vunpack.c.l.b16 %v1710
        %v1719 = vunpack.c.l.b16 %v1711
        %v1720 = vunpack.c.l.b16 %v1712
        %v1721 = vpack.c.b16 %v1718, %v1717
        %v1722 = vpack.c.b16 %v1720, %v1719
        %v1726 = vsel %vm1147, %v1708, 0
        %1728 = vmatpush.bf16.msra.mxu0 0
        %1729 = vmatpush.bf16.msra.mxu0 0
        %1730 = vmatpush.bf16.msra.mxu0 0
        %1731 = vmatpush.bf16.msra.mxu0 0
        %1732 = vmatpush.bf16.msra.mxu0 0
        %1733 = vmatpush.bf16.msra.mxu0 0
        %1734 = vmatpush.bf16.msra.mxu0 %v1722
        %1735 = vmatpush.bf16.msra.mxu0 %v1721
        %1736 = vmatmul.bf16.gmra.mxu0 %v1726
        %v1737 = vpop.f32.mrf.mxu0
        %v1738 = vadd.f32 0.0, %v1737
        %v1739 = vpop.f32.mrf.mxu0
        %v1740 = vadd.f32 0.0, %v1739
        %1741 = vdwg.mxu0
        %v1742 = vadd.f32 %v1594, %v1738
        %v1743 = vadd.f32 %v1595, %v1740
        %v1744 = vld [vmem:[%s827] sm:$0x1]
        %v1746 = vperm.slane %v1744, 0
        %v1748 = vadd.f32 %v1742, %v1746
        %v1749 = vadd.f32 %v1743, %v1746
        %v1750 = vadd.f32 %v1748, %v928
        %v1751 = vadd.f32 %v1749, %v929
        %v1752 = vld [vmem:[%s830] sm:$0x1]
        %v1753 = vld [vmem:[%s833] sm:$0x1]
        %1754 = vadd.xlane.f32.xlu0 %v1750
        %v1755 = vpop.xlane.xlu0 %1754
        %1756 = vadd.xlane.f32.xlu0 %v1751
        %v1757 = vpop.xlane.xlu0 %1756
        %v1758 = vrcp.pop 128.0
        %v1759 = vmul.f32 128.0, %v1758
        %v1760 = vsub.f32 1.0, %v1759
        %v1761 = vmul.f32 %v1758, %v1760
        %v1762 = vadd.f32 %v1758, %v1761
        %vm1763 = vweird.f32 %v1758
        %v1764 = vsel %vm1763, %v1758, %v1762
        %v1765 = vmul.f32 %v1755, %v1764
        %v1766 = vmul.f32 %v1757, %v1764
        %v1767 = vmul.f32 %v1750, %v1750
        %v1768 = vmul.f32 %v1751, %v1751
        %1769 = vadd.xlane.f32.xlu0 %v1767
        %v1770 = vpop.xlane.xlu0 %1769
        %1771 = vadd.xlane.f32.xlu0 %v1768
        %v1772 = vpop.xlane.xlu0 %1771
        %v1773 = vmul.f32 %v1770, %v1764
        %v1774 = vmul.f32 %v1772, %v1764
        %v1775 = vmul.f32 %v1765, %v1765
        %v1776 = vmul.f32 %v1766, %v1766
        %v1777 = vsub.f32 %v1773, %v1775
        %v1778 = vsub.f32 %v1774, %v1776
        %v1779 = vsub.f32 %v1750, %v1765
        %v1780 = vsub.f32 %v1751, %v1766
        %v1781 = vadd.f32 %v1777, 1e-05
        %v1782 = vadd.f32 %v1778, 1e-05
        %v1783 = vrsqrt.pop %v1781
        %v1784 = vmul.f32 %v1783, %v1781
        %v1785 = vmul.f32 %v1784, %v1783
        %v1786 = vmul.f32 0.5, %v1785
        %v1787 = vsub.f32 1.5, %v1786
        %v1788 = vmul.f32 %v1783, %v1787
        %vm1789 = vweird.f32 %v1781
        %vm1790 = vweird.f32 %v1783
        %vm1791 = vmor %vm1789, %vm1790
        %v1792 = vsel %vm1791, %v1783, %v1788
        %v1793 = vrsqrt.pop %v1782
        %v1794 = vmul.f32 %v1793, %v1782
        %v1795 = vmul.f32 %v1794, %v1793
        %v1796 = vmul.f32 0.5, %v1795
        %v1797 = vsub.f32 1.5, %v1796
        %v1798 = vmul.f32 %v1793, %v1797
        %vm1799 = vweird.f32 %v1782
        %vm1800 = vweird.f32 %v1793
        %vm1801 = vmor %vm1799, %vm1800
        %v1802 = vsel %vm1801, %v1793, %v1798
        %v1803 = vmul.f32 %v1779, %v1792
        %v1804 = vmul.f32 %v1780, %v1802
        %v1806 = vperm.slane %v1752, 0
        %v1808 = vmul.f32 %v1803, %v1806
        %v1809 = vmul.f32 %v1804, %v1806
        %v1811 = vperm.slane %v1753, 0
        %v1813 = vadd.f32 %v1808, %v1811
        %v1814 = vadd.f32 %v1809, %v1811
        %v1815 = vpack.c.bf16 %v1814, %v1813
        %v1816 = vld [vmem:[%s709] sm:$0xff]
        %v1817 = vld [vmem:[%s709 + $0x8] sm:$0xff]
        %v1818 = vld [vmem:[%s709 + $0x10] sm:$0xff]
        %v1819 = vld [vmem:[%s709 + $0x18] sm:$0xff]
        %v1820 = vld [vmem:[%s709 + $0x20] sm:$0xff]
        %v1821 = vld [vmem:[%s709 + $0x28] sm:$0xff]
        %v1822 = vld [vmem:[%s709 + $0x30] sm:$0xff]
        %v1823 = vld [vmem:[%s709 + $0x38] sm:$0xff]
        %v1824 = vld [vmem:[%s709 + $0x40] sm:$0xff]
        %v1825 = vld [vmem:[%s709 + $0x48] sm:$0xff]
        %v1826 = vld [vmem:[%s709 + $0x50] sm:$0xff]
        %v1827 = vld [vmem:[%s709 + $0x58] sm:$0xff]
        %v1828 = vld [vmem:[%s709 + $0x60] sm:$0xff]
        %v1829 = vld [vmem:[%s709 + $0x68] sm:$0xff]
        %v1830 = vld [vmem:[%s709 + $0x70] sm:$0xff]
        %v1831 = vld [vmem:[%s709 + $0x78] sm:$0xff]
        %v1832 = vld [vmem:[%s709 + $0x80] sm:$0xff]
        %v1833 = vld [vmem:[%s709 + $0x88] sm:$0xff]
        %v1834 = vld [vmem:[%s709 + $0x90] sm:$0xff]
        %v1835 = vld [vmem:[%s709 + $0x98] sm:$0xff]
        %v1836 = vld [vmem:[%s709 + $0xa0] sm:$0xff]
        %v1837 = vld [vmem:[%s709 + $0xa8] sm:$0xff]
        %v1838 = vld [vmem:[%s709 + $0xb0] sm:$0xff]
        %v1839 = vld [vmem:[%s709 + $0xb8] sm:$0xff]
        %v1840 = vld [vmem:[%s709 + $0xc0] sm:$0xff]
        %v1841 = vld [vmem:[%s709 + $0xc8] sm:$0xff]
        %v1842 = vld [vmem:[%s709 + $0xd0] sm:$0xff]
        %v1843 = vld [vmem:[%s709 + $0xd8] sm:$0xff]
        %v1844 = vld [vmem:[%s709 + $0xe0] sm:$0xff]
        %v1845 = vld [vmem:[%s709 + $0xe8] sm:$0xff]
        %v1846 = vld [vmem:[%s709 + $0xf0] sm:$0xff]
        %v1847 = vld [vmem:[%s709 + $0xf8] sm:$0xff]
        %v1848 = vld [vmem:[%s837] sm:$0xf]
        %v1850 = vperm.slane %v1848, 0
        %v1851 = vperm.slane %v1848, 1
        %v1852 = vperm.slane %v1848, 2
        %v1853 = vperm.slane %v1848, 3
        %v1890 = vunpack.c.l.b16 %v1816
        %v1891 = vunpack.c.h.b16 %v1816
        %v1892 = vunpack.c.l.b16 %v1817
        %v1893 = vunpack.c.h.b16 %v1817
        %v1894 = vunpack.c.l.b16 %v1818
        %v1895 = vunpack.c.h.b16 %v1818
        %v1896 = vunpack.c.l.b16 %v1819
        %v1897 = vunpack.c.h.b16 %v1819
        %v1898 = vunpack.c.l.b16 %v1820
        %v1899 = vunpack.c.h.b16 %v1820
        %v1900 = vunpack.c.l.b16 %v1821
        %v1901 = vunpack.c.h.b16 %v1821
        %v1902 = vunpack.c.l.b16 %v1822
        %v1903 = vunpack.c.h.b16 %v1822
        %v1904 = vunpack.c.l.b16 %v1823
        %v1905 = vunpack.c.h.b16 %v1823
        %v1906 = vunpack.c.l.b16 %v1824
        %v1907 = vunpack.c.h.b16 %v1824
        %v1908 = vunpack.c.l.b16 %v1825
        %v1909 = vunpack.c.h.b16 %v1825
        %v1910 = vunpack.c.l.b16 %v1826
        %v1911 = vunpack.c.h.b16 %v1826
        %v1912 = vunpack.c.l.b16 %v1827
        %v1913 = vunpack.c.h.b16 %v1827
        %v1914 = vunpack.c.l.b16 %v1828
        %v1915 = vunpack.c.h.b16 %v1828
        %v1916 = vunpack.c.l.b16 %v1829
        %v1917 = vunpack.c.h.b16 %v1829
        %v1918 = vunpack.c.l.b16 %v1830
        %v1919 = vunpack.c.h.b16 %v1830
        %v1920 = vunpack.c.l.b16 %v1831
        %v1921 = vunpack.c.h.b16 %v1831
        %v1922 = vunpack.c.l.b16 %v1832
        %v1923 = vunpack.c.h.b16 %v1832
        %v1924 = vunpack.c.l.b16 %v1833
        %v1925 = vunpack.c.h.b16 %v1833
        %v1926 = vunpack.c.l.b16 %v1834
        %v1927 = vunpack.c.h.b16 %v1834
        %v1928 = vunpack.c.l.b16 %v1835
        %v1929 = vunpack.c.h.b16 %v1835
        %v1930 = vunpack.c.l.b16 %v1836
        %v1931 = vunpack.c.h.b16 %v1836
        %v1932 = vunpack.c.l.b16 %v1837
        %v1933 = vunpack.c.h.b16 %v1837
        %v1934 = vunpack.c.l.b16 %v1838
        %v1935 = vunpack.c.h.b16 %v1838
        %v1936 = vunpack.c.l.b16 %v1839
        %v1937 = vunpack.c.h.b16 %v1839
        %v1938 = vunpack.c.l.b16 %v1840
        %v1939 = vunpack.c.h.b16 %v1840
        %v1940 = vunpack.c.l.b16 %v1841
        %v1941 = vunpack.c.h.b16 %v1841
        %v1942 = vunpack.c.l.b16 %v1842
        %v1943 = vunpack.c.h.b16 %v1842
        %v1944 = vunpack.c.l.b16 %v1843
        %v1945 = vunpack.c.h.b16 %v1843
        %v1946 = vunpack.c.l.b16 %v1844
        %v1947 = vunpack.c.h.b16 %v1844
        %v1948 = vunpack.c.l.b16 %v1845
        %v1949 = vunpack.c.h.b16 %v1845
        %v1950 = vunpack.c.l.b16 %v1846
        %v1951 = vunpack.c.h.b16 %v1846
        %v1952 = vunpack.c.l.b16 %v1847
        %v1953 = vunpack.c.h.b16 %v1847
        %v1954 = vpack.c.b16 %v1894, %v1890
        %v1955 = vpack.c.b16 %v1895, %v1891
        %v1956 = vpack.c.b16 %v1896, %v1892
        %v1957 = vpack.c.b16 %v1897, %v1893
        %v1958 = vpack.c.b16 %v1902, %v1898
        %v1959 = vpack.c.b16 %v1903, %v1899
        %v1960 = vpack.c.b16 %v1904, %v1900
        %v1961 = vpack.c.b16 %v1905, %v1901
        %v1962 = vpack.c.b16 %v1910, %v1906
        %v1963 = vpack.c.b16 %v1911, %v1907
        %v1964 = vpack.c.b16 %v1912, %v1908
        %v1965 = vpack.c.b16 %v1913, %v1909
        %v1966 = vpack.c.b16 %v1918, %v1914
        %v1967 = vpack.c.b16 %v1919, %v1915
        %v1968 = vpack.c.b16 %v1920, %v1916
        %v1969 = vpack.c.b16 %v1921, %v1917
        %v1970 = vpack.c.b16 %v1926, %v1922
        %v1971 = vpack.c.b16 %v1927, %v1923
        %v1972 = vpack.c.b16 %v1928, %v1924
        %v1973 = vpack.c.b16 %v1929, %v1925
        %v1974 = vpack.c.b16 %v1934, %v1930
        %v1975 = vpack.c.b16 %v1935, %v1931
        %v1976 = vpack.c.b16 %v1936, %v1932
        %v1977 = vpack.c.b16 %v1937, %v1933
        %v1978 = vpack.c.b16 %v1942, %v1938
        %v1979 = vpack.c.b16 %v1943, %v1939
        %v1980 = vpack.c.b16 %v1944, %v1940
        %v1981 = vpack.c.b16 %v1945, %v1941
        %v1982 = vpack.c.b16 %v1950, %v1946
        %v1983 = vpack.c.b16 %v1951, %v1947
        %v1984 = vpack.c.b16 %v1952, %v1948
        %v1985 = vpack.c.b16 %v1953, %v1949
        %2018 = vmatpush.bf16.msra.mxu0 %v1982
        %2019 = vmatpush.bf16.msra.mxu0 %v1978
        %2020 = vmatpush.bf16.msra.mxu0 %v1974
        %2021 = vmatpush.bf16.msra.mxu0 %v1970
        %2022 = vmatpush.bf16.msra.mxu0 %v1966
        %2023 = vmatpush.bf16.msra.mxu0 %v1962
        %2024 = vmatpush.bf16.msra.mxu0 %v1958
        %2025 = vmatpush.bf16.msra.mxu0 %v1954
        %2026 = vmatmul.bf16.gmra.mxu0 %v1815
        %v2027 = vpop.f32.mrf.mxu0
        %v2028 = vadd.f32 %v1850, %v2027
        %v2029 = vpop.f32.mrf.mxu0
        %v2030 = vadd.f32 %v1850, %v2029
        %2031 = vdwg.mxu0
        %2032 = vmatpush.bf16.msra.mxu0 %v1983
        %2033 = vmatpush.bf16.msra.mxu0 %v1979
        %2034 = vmatpush.bf16.msra.mxu0 %v1975
        %2035 = vmatpush.bf16.msra.mxu0 %v1971
        %2036 = vmatpush.bf16.msra.mxu0 %v1967
        %2037 = vmatpush.bf16.msra.mxu0 %v1963
        %2038 = vmatpush.bf16.msra.mxu0 %v1959
        %2039 = vmatpush.bf16.msra.mxu0 %v1955
        %2040 = vmatmul.bf16.gmra.mxu0 %v1815
        %v2041 = vpop.f32.mrf.mxu0
        %v2042 = vadd.f32 %v1851, %v2041
        %v2043 = vpop.f32.mrf.mxu0
        %v2044 = vadd.f32 %v1851, %v2043
        %2045 = vdwg.mxu0
        %2046 = vmatpush.bf16.msra.mxu0 %v1984
        %2047 = vmatpush.bf16.msra.mxu0 %v1980
        %2048 = vmatpush.bf16.msra.mxu0 %v1976
        %2049 = vmatpush.bf16.msra.mxu0 %v1972
        %2050 = vmatpush.bf16.msra.mxu0 %v1968
        %2051 = vmatpush.bf16.msra.mxu0 %v1964
        %2052 = vmatpush.bf16.msra.mxu0 %v1960
        %2053 = vmatpush.bf16.msra.mxu0 %v1956
        %2054 = vmatmul.bf16.gmra.mxu0 %v1815
        %v2055 = vpop.f32.mrf.mxu0
        %v2056 = vadd.f32 %v1852, %v2055
        %v2057 = vpop.f32.mrf.mxu0
        %v2058 = vadd.f32 %v1852, %v2057
        %2059 = vdwg.mxu0
        %2060 = vmatpush.bf16.msra.mxu0 %v1985
        %2061 = vmatpush.bf16.msra.mxu0 %v1981
        %2062 = vmatpush.bf16.msra.mxu0 %v1977
        %2063 = vmatpush.bf16.msra.mxu0 %v1973
        %2064 = vmatpush.bf16.msra.mxu0 %v1969
        %2065 = vmatpush.bf16.msra.mxu0 %v1965
        %2066 = vmatpush.bf16.msra.mxu0 %v1961
        %2067 = vmatpush.bf16.msra.mxu0 %v1957
        %2068 = vmatmul.bf16.gmra.mxu0 %v1815
        %v2069 = vpop.f32.mrf.mxu0
        %v2070 = vadd.f32 %v1853, %v2069
        %v2071 = vpop.f32.mrf.mxu0
        %v2072 = vadd.f32 %v1853, %v2071
        %2073 = vdwg.mxu0
        %v2074 = vmul.f32 %v2028, %v2028
        %v2075 = vmul.f32 %v2042, %v2042
        %v2076 = vmul.f32 %v2056, %v2056
        %v2077 = vmul.f32 %v2070, %v2070
        %v2078 = vmul.f32 %v2030, %v2030
        %v2079 = vmul.f32 %v2044, %v2044
        %v2080 = vmul.f32 %v2058, %v2058
        %v2081 = vmul.f32 %v2072, %v2072
        %v2082 = vmul.f32 %v2028, %v2074
        %v2083 = vmul.f32 %v2042, %v2075
        %v2084 = vmul.f32 %v2056, %v2076
        %v2085 = vmul.f32 %v2070, %v2077
        %v2086 = vmul.f32 %v2030, %v2078
        %v2087 = vmul.f32 %v2044, %v2079
        %v2088 = vmul.f32 %v2058, %v2080
        %v2089 = vmul.f32 %v2072, %v2081
        %v2090 = vmul.f32 %v2082, 0.044715
        %v2091 = vmul.f32 %v2083, 0.044715
        %v2092 = vmul.f32 %v2084, 0.044715
        %v2093 = vmul.f32 %v2085, 0.044715
        %v2094 = vmul.f32 %v2086, 0.044715
        %v2095 = vmul.f32 %v2087, 0.044715
        %v2096 = vmul.f32 %v2088, 0.044715
        %v2097 = vmul.f32 %v2089, 0.044715
        %v2098 = vadd.f32 %v2028, %v2090
        %v2099 = vadd.f32 %v2042, %v2091
        %v2100 = vadd.f32 %v2056, %v2092
        %v2101 = vadd.f32 %v2070, %v2093
        %v2102 = vadd.f32 %v2030, %v2094
        %v2103 = vadd.f32 %v2044, %v2095
        %v2104 = vadd.f32 %v2058, %v2096
        %v2105 = vadd.f32 %v2072, %v2097
        %v2106 = vmul.f32 %v2098, 0.7978846
        %v2107 = vmul.f32 %v2099, 0.7978846
        %v2108 = vmul.f32 %v2100, 0.7978846
        %v2109 = vmul.f32 %v2101, 0.7978846
        %v2110 = vmul.f32 %v2102, 0.7978846
        %v2111 = vmul.f32 %v2103, 0.7978846
        %v2112 = vmul.f32 %v2104, 0.7978846
        %v2113 = vmul.f32 %v2105, 0.7978846
        %v2114 = vtanh.pop %v2106
        %v2115 = vtanh.pop %v2107
        %v2116 = vtanh.pop %v2108
        %v2117 = vtanh.pop %v2109
        %v2118 = vtanh.pop %v2110
        %v2119 = vtanh.pop %v2111
        %v2120 = vtanh.pop %v2112
        %v2121 = vtanh.pop %v2113
        %v2122 = vadd.f32 %v2114, 1.0
        %v2123 = vadd.f32 %v2115, 1.0
        %v2124 = vadd.f32 %v2116, 1.0
        %v2125 = vadd.f32 %v2117, 1.0
        %v2126 = vadd.f32 %v2118, 1.0
        %v2127 = vadd.f32 %v2119, 1.0
        %v2128 = vadd.f32 %v2120, 1.0
        %v2129 = vadd.f32 %v2121, 1.0
        %v2130 = vmul.f32 %v2122, 0.5
        %v2131 = vmul.f32 %v2123, 0.5
        %v2132 = vmul.f32 %v2124, 0.5
        %v2133 = vmul.f32 %v2125, 0.5
        %v2134 = vmul.f32 %v2126, 0.5
        %v2135 = vmul.f32 %v2127, 0.5
        %v2136 = vmul.f32 %v2128, 0.5
        %v2137 = vmul.f32 %v2129, 0.5
        %v2138 = vmul.f32 %v2028, %v2130
        %v2139 = vmul.f32 %v2042, %v2131
        %v2140 = vmul.f32 %v2056, %v2132
        %v2141 = vmul.f32 %v2070, %v2133
        %v2142 = vmul.f32 %v2030, %v2134
        %v2143 = vmul.f32 %v2044, %v2135
        %v2144 = vmul.f32 %v2058, %v2136
        %v2145 = vmul.f32 %v2072, %v2137
        %v2146 = vpack.c.bf16 %v2142, %v2138
        %v2147 = vpack.c.bf16 %v2143, %v2139
        %v2148 = vpack.c.bf16 %v2144, %v2140
        %v2149 = vpack.c.bf16 %v2145, %v2141
        %v2150 = vld [vmem:[%s719] sm:$0xf]
        %v2151 = vld [vmem:[%s719 + $0x4] sm:$0xf]
        %v2152 = vld [vmem:[%s719 + $0x8] sm:$0xf]
        %v2153 = vld [vmem:[%s719 + $0xc] sm:$0xf]
        %v2154 = vld [vmem:[%s719 + $0x10] sm:$0xf]
        %v2155 = vld [vmem:[%s719 + $0x14] sm:$0xf]
        %v2156 = vld [vmem:[%s719 + $0x18] sm:$0xf]
        %v2157 = vld [vmem:[%s719 + $0x1c] sm:$0xf]
        %v2158 = vld [vmem:[%s719 + $0x20] sm:$0xf]
        %v2159 = vld [vmem:[%s719 + $0x24] sm:$0xf]
        %v2160 = vld [vmem:[%s719 + $0x28] sm:$0xf]
        %v2161 = vld [vmem:[%s719 + $0x2c] sm:$0xf]
        %v2162 = vld [vmem:[%s719 + $0x30] sm:$0xf]
        %v2163 = vld [vmem:[%s719 + $0x34] sm:$0xf]
        %v2164 = vld [vmem:[%s719 + $0x38] sm:$0xf]
        %v2165 = vld [vmem:[%s719 + $0x3c] sm:$0xf]
        %v2166 = vld [vmem:[%s719 + $0x40] sm:$0xf]
        %v2167 = vld [vmem:[%s719 + $0x44] sm:$0xf]
        %v2168 = vld [vmem:[%s719 + $0x48] sm:$0xf]
        %v2169 = vld [vmem:[%s719 + $0x4c] sm:$0xf]
        %v2170 = vld [vmem:[%s719 + $0x50] sm:$0xf]
        %v2171 = vld [vmem:[%s719 + $0x54] sm:$0xf]
        %v2172 = vld [vmem:[%s719 + $0x58] sm:$0xf]
        %v2173 = vld [vmem:[%s719 + $0x5c] sm:$0xf]
        %v2174 = vld [vmem:[%s719 + $0x60] sm:$0xf]
        %v2175 = vld [vmem:[%s719 + $0x64] sm:$0xf]
        %v2176 = vld [vmem:[%s719 + $0x68] sm:$0xf]
        %v2177 = vld [vmem:[%s719 + $0x6c] sm:$0xf]
        %v2178 = vld [vmem:[%s719 + $0x70] sm:$0xf]
        %v2179 = vld [vmem:[%s719 + $0x74] sm:$0xf]
        %v2180 = vld [vmem:[%s719 + $0x78] sm:$0xf]
        %v2181 = vld [vmem:[%s719 + $0x7c] sm:$0xf]
        %v2182 = vld [vmem:[%s719 + $0x80] sm:$0xf]
        %v2183 = vld [vmem:[%s719 + $0x84] sm:$0xf]
        %v2184 = vld [vmem:[%s719 + $0x88] sm:$0xf]
        %v2185 = vld [vmem:[%s719 + $0x8c] sm:$0xf]
        %v2186 = vld [vmem:[%s719 + $0x90] sm:$0xf]
        %v2187 = vld [vmem:[%s719 + $0x94] sm:$0xf]
        %v2188 = vld [vmem:[%s719 + $0x98] sm:$0xf]
        %v2189 = vld [vmem:[%s719 + $0x9c] sm:$0xf]
        %v2190 = vld [vmem:[%s719 + $0xa0] sm:$0xf]
        %v2191 = vld [vmem:[%s719 + $0xa4] sm:$0xf]
        %v2192 = vld [vmem:[%s719 + $0xa8] sm:$0xf]
        %v2193 = vld [vmem:[%s719 + $0xac] sm:$0xf]
        %v2194 = vld [vmem:[%s719 + $0xb0] sm:$0xf]
        %v2195 = vld [vmem:[%s719 + $0xb4] sm:$0xf]
        %v2196 = vld [vmem:[%s719 + $0xb8] sm:$0xf]
        %v2197 = vld [vmem:[%s719 + $0xbc] sm:$0xf]
        %v2198 = vld [vmem:[%s719 + $0xc0] sm:$0xf]
        %v2199 = vld [vmem:[%s719 + $0xc4] sm:$0xf]
        %v2200 = vld [vmem:[%s719 + $0xc8] sm:$0xf]
        %v2201 = vld [vmem:[%s719 + $0xcc] sm:$0xf]
        %v2202 = vld [vmem:[%s719 + $0xd0] sm:$0xf]
        %v2203 = vld [vmem:[%s719 + $0xd4] sm:$0xf]
        %v2204 = vld [vmem:[%s719 + $0xd8] sm:$0xf]
        %v2205 = vld [vmem:[%s719 + $0xdc] sm:$0xf]
        %v2206 = vld [vmem:[%s719 + $0xe0] sm:$0xf]
        %v2207 = vld [vmem:[%s719 + $0xe4] sm:$0xf]
        %v2208 = vld [vmem:[%s719 + $0xe8] sm:$0xf]
        %v2209 = vld [vmem:[%s719 + $0xec] sm:$0xf]
        %v2210 = vld [vmem:[%s719 + $0xf0] sm:$0xf]
        %v2211 = vld [vmem:[%s719 + $0xf4] sm:$0xf]
        %v2212 = vld [vmem:[%s719 + $0xf8] sm:$0xf]
        %v2213 = vld [vmem:[%s719 + $0xfc] sm:$0xf]
        %v2214 = vld [vmem:[%s840] sm:$0x1]
        %v2216 = vperm.slane %v2214, 0
        %v2282 = vunpack.c.l.b16 %v2150
        %v2283 = vunpack.c.l.b16 %v2151
        %v2284 = vunpack.c.l.b16 %v2152
        %v2285 = vunpack.c.l.b16 %v2153
        %v2286 = vunpack.c.l.b16 %v2154
        %v2287 = vunpack.c.l.b16 %v2155
        %v2288 = vunpack.c.l.b16 %v2156
        %v2289 = vunpack.c.l.b16 %v2157
        %v2290 = vunpack.c.l.b16 %v2158
        %v2291 = vunpack.c.l.b16 %v2159
        %v2292 = vunpack.c.l.b16 %v2160
        %v2293 = vunpack.c.l.b16 %v2161
        %v2294 = vunpack.c.l.b16 %v2162
        %v2295 = vunpack.c.l.b16 %v2163
        %v2296 = vunpack.c.l.b16 %v2164
        %v2297 = vunpack.c.l.b16 %v2165
        %v2298 = vunpack.c.l.b16 %v2166
        %v2299 = vunpack.c.l.b16 %v2167
        %v2300 = vunpack.c.l.b16 %v2168
        %v2301 = vunpack.c.l.b16 %v2169
        %v2302 = vunpack.c.l.b16 %v2170
        %v2303 = vunpack.c.l.b16 %v2171
        %v2304 = vunpack.c.l.b16 %v2172
        %v2305 = vunpack.c.l.b16 %v2173
        %v2306 = vunpack.c.l.b16 %v2174
        %v2307 = vunpack.c.l.b16 %v2175
        %v2308 = vunpack.c.l.b16 %v2176
        %v2309 = vunpack.c.l.b16 %v2177
        %v2310 = vunpack.c.l.b16 %v2178
        %v2311 = vunpack.c.l.b16 %v2179
        %v2312 = vunpack.c.l.b16 %v2180
        %v2313 = vunpack.c.l.b16 %v2181
        %v2314 = vunpack.c.l.b16 %v2182
        %v2315 = vunpack.c.l.b16 %v2183
        %v2316 = vunpack.c.l.b16 %v2184
        %v2317 = vunpack.c.l.b16 %v2185
        %v2318 = vunpack.c.l.b16 %v2186
        %v2319 = vunpack.c.l.b16 %v2187
        %v2320 = vunpack.c.l.b16 %v2188
        %v2321 = vunpack.c.l.b16 %v2189
        %v2322 = vunpack.c.l.b16 %v2190
        %v2323 = vunpack.c.l.b16 %v2191
        %v2324 = vunpack.c.l.b16 %v2192
        %v2325 = vunpack.c.l.b16 %v2193
        %v2326 = vunpack.c.l.b16 %v2194
        %v2327 = vunpack.c.l.b16 %v2195
        %v2328 = vunpack.c.l.b16 %v2196
        %v2329 = vunpack.c.l.b16 %v2197
        %v2330 = vunpack.c.l.b16 %v2198
        %v2331 = vunpack.c.l.b16 %v2199
        %v2332 = vunpack.c.l.b16 %v2200
        %v2333 = vunpack.c.l.b16 %v2201
        %v2334 = vunpack.c.l.b16 %v2202
        %v2335 = vunpack.c.l.b16 %v2203
        %v2336 = vunpack.c.l.b16 %v2204
        %v2337 = vunpack.c.l.b16 %v2205
        %v2338 = vunpack.c.l.b16 %v2206
        %v2339 = vunpack.c.l.b16 %v2207
        %v2340 = vunpack.c.l.b16 %v2208
        %v2341 = vunpack.c.l.b16 %v2209
        %v2342 = vunpack.c.l.b16 %v2210
        %v2343 = vunpack.c.l.b16 %v2211
        %v2344 = vunpack.c.l.b16 %v2212
        %v2345 = vunpack.c.l.b16 %v2213
        %v2346 = vpack.c.b16 %v2283, %v2282
        %v2347 = vpack.c.b16 %v2285, %v2284
        %v2348 = vpack.c.b16 %v2287, %v2286
        %v2349 = vpack.c.b16 %v2289, %v2288
        %v2350 = vpack.c.b16 %v2291, %v2290
        %v2351 = vpack.c.b16 %v2293, %v2292
        %v2352 = vpack.c.b16 %v2295, %v2294
        %v2353 = vpack.c.b16 %v2297, %v2296
        %v2354 = vpack.c.b16 %v2299, %v2298
        %v2355 = vpack.c.b16 %v2301, %v2300
        %v2356 = vpack.c.b16 %v2303, %v2302
        %v2357 = vpack.c.b16 %v2305, %v2304
        %v2358 = vpack.c.b16 %v2307, %v2306
        %v2359 = vpack.c.b16 %v2309, %v2308
        %v2360 = vpack.c.b16 %v2311, %v2310
        %v2361 = vpack.c.b16 %v2313, %v2312
        %v2362 = vpack.c.b16 %v2315, %v2314
        %v2363 = vpack.c.b16 %v2317, %v2316
        %v2364 = vpack.c.b16 %v2319, %v2318
        %v2365 = vpack.c.b16 %v2321, %v2320
        %v2366 = vpack.c.b16 %v2323, %v2322
        %v2367 = vpack.c.b16 %v2325, %v2324
        %v2368 = vpack.c.b16 %v2327, %v2326
        %v2369 = vpack.c.b16 %v2329, %v2328
        %v2370 = vpack.c.b16 %v2331, %v2330
        %v2371 = vpack.c.b16 %v2333, %v2332
        %v2372 = vpack.c.b16 %v2335, %v2334
        %v2373 = vpack.c.b16 %v2337, %v2336
        %v2374 = vpack.c.b16 %v2339, %v2338
        %v2375 = vpack.c.b16 %v2341, %v2340
        %v2376 = vpack.c.b16 %v2343, %v2342
        %v2377 = vpack.c.b16 %v2345, %v2344
        %2410 = vmatpush.bf16.msra.mxu0 %v2353
        %2411 = vmatpush.bf16.msra.mxu0 %v2352
        %2412 = vmatpush.bf16.msra.mxu0 %v2351
        %2413 = vmatpush.bf16.msra.mxu0 %v2350
        %2414 = vmatpush.bf16.msra.mxu0 %v2349
        %2415 = vmatpush.bf16.msra.mxu0 %v2348
        %2416 = vmatpush.bf16.msra.mxu0 %v2347
        %2417 = vmatpush.bf16.msra.mxu0 %v2346
        %2418 = vmatmul.bf16.gmra.mxu0 %v2146
        %v2419 = vpop.f32.mrf.mxu0
        %v2420 = vadd.f32 %v2216, %v2419
        %v2421 = vpop.f32.mrf.mxu0
        %v2422 = vadd.f32 %v2216, %v2421
        %2423 = vdwg.mxu0
        %2424 = vmatpush.bf16.msra.mxu0 %v2361
        %2425 = vmatpush.bf16.msra.mxu0 %v2360
        %2426 = vmatpush.bf16.msra.mxu0 %v2359
        %2427 = vmatpush.bf16.msra.mxu0 %v2358
        %2428 = vmatpush.bf16.msra.mxu0 %v2357
        %2429 = vmatpush.bf16.msra.mxu0 %v2356
        %2430 = vmatpush.bf16.msra.mxu0 %v2355
        %2431 = vmatpush.bf16.msra.mxu0 %v2354
        %2432 = vmatmul.bf16.gmra.mxu0 %v2147
        %v2433 = vpop.f32.mrf.mxu0
        %v2434 = vadd.f32 %v2420, %v2433
        %v2435 = vpop.f32.mrf.mxu0
        %v2436 = vadd.f32 %v2422, %v2435
        %2437 = vdwg.mxu0
        %2438 = vmatpush.bf16.msra.mxu0 %v2369
        %2439 = vmatpush.bf16.msra.mxu0 %v2368
        %2440 = vmatpush.bf16.msra.mxu0 %v2367
        %2441 = vmatpush.bf16.msra.mxu0 %v2366
        %2442 = vmatpush.bf16.msra.mxu0 %v2365
        %2443 = vmatpush.bf16.msra.mxu0 %v2364
        %2444 = vmatpush.bf16.msra.mxu0 %v2363
        %2445 = vmatpush.bf16.msra.mxu0 %v2362
        %2446 = vmatmul.bf16.gmra.mxu0 %v2148
        %v2447 = vpop.f32.mrf.mxu0
        %v2448 = vadd.f32 %v2434, %v2447
        %v2449 = vpop.f32.mrf.mxu0
        %v2450 = vadd.f32 %v2436, %v2449
        %2451 = vdwg.mxu0
        %2452 = vmatpush.bf16.msra.mxu0 %v2377
        %2453 = vmatpush.bf16.msra.mxu0 %v2376
        %2454 = vmatpush.bf16.msra.mxu0 %v2375
        %2455 = vmatpush.bf16.msra.mxu0 %v2374
        %2456 = vmatpush.bf16.msra.mxu0 %v2373
        %2457 = vmatpush.bf16.msra.mxu0 %v2372
        %2458 = vmatpush.bf16.msra.mxu0 %v2371
        %2459 = vmatpush.bf16.msra.mxu0 %v2370
        %2460 = vmatmul.bf16.gmra.mxu0 %v2149
        %v2461 = vpop.f32.mrf.mxu0
        %v2462 = vadd.f32 %v2448, %v2461
        %v2463 = vpop.f32.mrf.mxu0
        %v2464 = vadd.f32 %v2450, %v2463
        %2465 = vdwg.mxu0
        %v2466 = vadd.f32 %v2462, %v1813
        %v2467 = vadd.f32 %v2464, %v1814
        %v2468 = vld [vmem:[%s843] sm:$0x1]
        %v2469 = vld [vmem:[%s846] sm:$0x1]
        %2470 = vadd.xlane.f32.xlu0 %v2466
        %v2471 = vpop.xlane.xlu0 %2470
        %2472 = vadd.xlane.f32.xlu0 %v2467
        %v2473 = vpop.xlane.xlu0 %2472
        %v2474 = vmul.f32 %v2471, %v1764
        %v2475 = vmul.f32 %v2473, %v1764
        %v2476 = vmul.f32 %v2466, %v2466
        %v2477 = vmul.f32 %v2467, %v2467
        %2478 = vadd.xlane.f32.xlu0 %v2476
        %v2479 = vpop.xlane.xlu0 %2478
        %2480 = vadd.xlane.f32.xlu0 %v2477
        %v2481 = vpop.xlane.xlu0 %2480
        %v2482 = vmul.f32 %v2479, %v1764
        %v2483 = vmul.f32 %v2481, %v1764
        %v2484 = vmul.f32 %v2474, %v2474
        %v2485 = vmul.f32 %v2475, %v2475
        %v2486 = vsub.f32 %v2482, %v2484
        %v2487 = vsub.f32 %v2483, %v2485
        %v2488 = vsub.f32 %v2466, %v2474
        %v2489 = vsub.f32 %v2467, %v2475
        %v2490 = vadd.f32 %v2486, 1e-05
        %v2491 = vadd.f32 %v2487, 1e-05
        %v2492 = vrsqrt.pop %v2490
        %v2493 = vmul.f32 %v2492, %v2490
        %v2494 = vmul.f32 %v2493, %v2492
        %v2495 = vmul.f32 0.5, %v2494
        %v2496 = vsub.f32 1.5, %v2495
        %v2497 = vmul.f32 %v2492, %v2496
        %vm2498 = vweird.f32 %v2490
        %vm2499 = vweird.f32 %v2492
        %vm2500 = vmor %vm2498, %vm2499
        %v2501 = vsel %vm2500, %v2492, %v2497
        %v2502 = vrsqrt.pop %v2491
        %v2503 = vmul.f32 %v2502, %v2491
        %v2504 = vmul.f32 %v2503, %v2502
        %v2505 = vmul.f32 0.5, %v2504
        %v2506 = vsub.f32 1.5, %v2505
        %v2507 = vmul.f32 %v2502, %v2506
        %vm2508 = vweird.f32 %v2491
        %vm2509 = vweird.f32 %v2502
        %vm2510 = vmor %vm2508, %vm2509
        %v2511 = vsel %vm2510, %v2502, %v2507
        %v2512 = vmul.f32 %v2488, %v2501
        %v2513 = vmul.f32 %v2489, %v2511
        %v2515 = vperm.slane %v2468, 0
        %v2517 = vmul.f32 %v2512, %v2515
        %v2518 = vmul.f32 %v2513, %v2515
        %v2520 = vperm.slane %v2469, 0
        %v2522 = vadd.f32 %v2517, %v2520
        %v2523 = vadd.f32 %v2518, %v2520
        %2524 = vst [vmem:[#allocation2] sm:$0xff] %v2522
        %2525 = vst [vmem:[#allocation2 + $0x8] sm:$0xff] %v2523
        %p2526 = scmp.eq.s32.totalorder %s38, 1
        // Predicated region
        $region117: #{roberta_forward.1} parent=95 // pred_check
          %p2527 = pneg %p2526
        $region118: #{roberta_forward.1} parent=95 // pred_check_branch
          %2529 = sbr.rel (%p2527) target = $region120
        $region119: #{roberta_forward.1} parent=95 // pred_region
          %v2530 = vld [vmem:[#allocation2] ss:$8 sm:$0x3]
          %v2531 = vpack.c.bf16 %v2530, %v2530
          %v2532 = vld [vmem:[#allocation9] sm:$0xf]
          %v2533 = vld [vmem:[#allocation9 + $0x4] sm:$0xf]
          %v2534 = vld [vmem:[#allocation9 + $0x8] sm:$0xf]
          %v2535 = vld [vmem:[#allocation9 + $0xc] sm:$0xf]
          %v2536 = vld [vmem:[#allocation9 + $0x10] sm:$0xf]
          %v2537 = vld [vmem:[#allocation9 + $0x14] sm:$0xf]
          %v2538 = vld [vmem:[#allocation9 + $0x18] sm:$0xf]
          %v2539 = vld [vmem:[#allocation9 + $0x1c] sm:$0xf]
          %v2540 = vld [vmem:[#allocation9 + $0x20] sm:$0xf]
          %v2541 = vld [vmem:[#allocation9 + $0x24] sm:$0xf]
          %v2542 = vld [vmem:[#allocation9 + $0x28] sm:$0xf]
          %v2543 = vld [vmem:[#allocation9 + $0x2c] sm:$0xf]
          %v2544 = vld [vmem:[#allocation9 + $0x30] sm:$0xf]
          %v2545 = vld [vmem:[#allocation9 + $0x34] sm:$0xf]
          %v2546 = vld [vmem:[#allocation9 + $0x38] sm:$0xf]
          %v2547 = vld [vmem:[#allocation9 + $0x3c] sm:$0xf]
          %v2548 = vld [vmem:[%s18] sm:$0x1]
          %v2550 = vperm.slane %v2548, 0
          %v2568 = vunpack.c.l.b16 %v2532
          %v2569 = vunpack.c.l.b16 %v2533
          %v2570 = vunpack.c.l.b16 %v2534
          %v2571 = vunpack.c.l.b16 %v2535
          %v2572 = vunpack.c.l.b16 %v2536
          %v2573 = vunpack.c.l.b16 %v2537
          %v2574 = vunpack.c.l.b16 %v2538
          %v2575 = vunpack.c.l.b16 %v2539
          %v2576 = vunpack.c.l.b16 %v2540
          %v2577 = vunpack.c.l.b16 %v2541
          %v2578 = vunpack.c.l.b16 %v2542
          %v2579 = vunpack.c.l.b16 %v2543
          %v2580 = vunpack.c.l.b16 %v2544
          %v2581 = vunpack.c.l.b16 %v2545
          %v2582 = vunpack.c.l.b16 %v2546
          %v2583 = vunpack.c.l.b16 %v2547
          %v2584 = vpack.c.b16 %v2569, %v2568
          %v2585 = vpack.c.b16 %v2571, %v2570
          %v2586 = vpack.c.b16 %v2573, %v2572
          %v2587 = vpack.c.b16 %v2575, %v2574
          %v2588 = vpack.c.b16 %v2577, %v2576
          %v2589 = vpack.c.b16 %v2579, %v2578
          %v2590 = vpack.c.b16 %v2581, %v2580
          %v2591 = vpack.c.b16 %v2583, %v2582
          %2600 = vmatpush.bf16.msra.mxu0 %v2591
          %2601 = vmatpush.bf16.msra.mxu0 %v2590
          %2602 = vmatpush.bf16.msra.mxu0 %v2589
          %2603 = vmatpush.bf16.msra.mxu0 %v2588
          %2604 = vmatpush.bf16.msra.mxu0 %v2587
          %2605 = vmatpush.bf16.msra.mxu0 %v2586
          %2606 = vmatpush.bf16.msra.mxu0 %v2585
          %2607 = vmatpush.bf16.msra.mxu0 %v2584
          %2608 = vmatmul.bf16.gmra.mxu0 %v2531
          %v2609 = vpop.f32.mrf.mxu0
          %v2610 = vadd.f32 %v2550, %v2609
          %v2611 = vpop.f32.mrf.mxu0
          %2612 = vdwg.mxu0
          %v2613 = vtanh.pop %v2610
          %2614 = vst [vmem:[#allocation11] sm:$0x3] %v2613
        $region120: #{roberta_forward.1} parent=95 // pred_fallthru
          _
        // Predicated region
        $region121: #{roberta_forward.1} parent=95 // pred_check
          %p2615 = pneg %p510
        $region122: #{roberta_forward.1} parent=95 // pred_check_branch
          %2617 = sbr.rel (%p2615) target = $region124
        $region123: #{roberta_forward.1} parent=95 // pred_region
          %2619 = vsyncadd [#allocation5], 0
          %s2621 = sshll.u32 [#allocation11], 4
          %s2622 = int_to_ptr.vmem [resolvable:$true] %s2621
          %s2623 = sshll.u32 %s19, 4
          %s2624 = int_to_ptr.hbm [resolvable:$true] %s2623
          %2626 = dma.vmem_to_hbm [thread:$0]  %s2622, 32, %s2624, [#allocation5]
        $region124: #{roberta_forward.1} parent=95 // pred_fallthru
          _
        // Predicated region
        $region125: #{roberta_forward.1} parent=95 // pred_check
          %p2627 = pneg %p510
        $region126: #{roberta_forward.1} parent=95 // pred_check_branch
          %2629 = sbr.rel (%p2627) target = $region128
        $region127: #{roberta_forward.1} parent=95 // pred_region
          %2631 = dma.done [#allocation5], 32
        $region128: #{roberta_forward.1} parent=95 // pred_fallthru
          _
      $region96: #{roberta_forward.1} parent=5 // pred_fallthru
        _
      %p2632 = scmp.le.s32.totalorder 2, %s33
      // Predicated region
      $region129: #{roberta_forward.1} parent=5 // pred_check
        %p2633 = pneg %p2632
      $region130: #{roberta_forward.1} parent=5 // pred_check_branch
        %2635 = sbr.rel (%p2633) target = $region132
      $region131: #{roberta_forward.1} parent=5 // pred_region
        %s2636 = ssub.s32 %s33, 2
      $region132: #{roberta_forward.1} parent=5 // pred_fallthru
        _
    $region6: #{roberta_forward.1} parent=1 // loop_footer
      %s37 = sadd.s32 1, %s33
    $region7: #{roberta_forward.1} parent=1 // loop_footer_branch
      %32 = sbr.rel target = $region3
    $region8: #{roberta_forward.1} parent=1 // loop_exit
      _
    %2637 = vsyncpa [#allocation4], 1
    %s2638 = scalar_lea.sflag [#allocation4], 1
    %2639 = vsyncpa %s2638, 1
    %2640 = vsyncpa [#allocation7], 1
    %s2641 = scalar_lea.sflag [#allocation7], 1
    %2642 = vsyncpa %s2641, 1
    %2643 = vsyncpa [#allocation10], 1
    %2644 = vsyncpa [#allocation5], 1
    %s2645 = scalar_lea.sflag [#allocation5], 1
    %2646 = vsyncpa %s2645, 1

</llo_original>
